<compile_context>
chip_gen: v5e
topology: v5e:2x2
jax: 0.10.0
libtpu: 0.0.40
codegen_flags: <defaults>
</compile_context>

<pallas_src>
import math

import jax
import jax.numpy as jnp
import numpy as np
from jax import lax
from jax.experimental import pallas as pl
from jax.experimental.pallas import tpu as pltpu


def _round_up(n, m):
    return ((n + m - 1) // m) * m


def _reorder_gates_ifgo_to_ifog(w):
    """Permute the leading 4H gate axis from PyTorch's (i,f,g,o) to (i,f,o,g)."""
    H = w.shape[0] // 4
    return jnp.concatenate([w[0:2 * H], w[3 * H:4 * H], w[2 * H:3 * H]], axis=0)


# ---------------------------------------------------------------------------
# Kernel body: one grid step == one LSTM layer; fc head runs on the last layer.
# ---------------------------------------------------------------------------
def _make_kernel(T, Bp, H):
    def kernel(x_ref, wih_ref, whh_ref, bias_ref,
               w1_ref, b1_ref, w2_ref, b2_ref,
               out_ref, seq_ref, gin_ref):
        layer = pl.program_id(0)
        last_layer = pl.num_programs(0) - 1

        # Layer 0 reads the (padded, bf16) input sequence; later layers read the
        # hidden sequence the previous layer left behind in seq_ref.
        @pl.when(layer == 0)
        def _():
            seq_ref[...] = x_ref[...]

        # Hoisted input projection + bias for ALL timesteps (off the serial
        # critical path): (T*Bp, 128) @ (128, 4H) in bf16, accumulate f32.
        gin_ref[...] = (
            jnp.dot(seq_ref[...], wih_ref[...],
                    preferred_element_type=jnp.float32)
            + bias_ref[...]
        )

        h = jnp.zeros((Bp, H), jnp.float32)
        c = jnp.zeros((Bp, H), jnp.float32)

        # Serial recurrence, fully unrolled (T is small & static).
        for t in range(T):
            # W_hh^T is referenced inside the step (no long-lived vreg hoist).
            gates = gin_ref[pl.ds(t * Bp, Bp), :] + jnp.dot(
                h.astype(jnp.bfloat16), whh_ref[...],
                preferred_element_type=jnp.float32)
            # Gate layout permuted to (i, f, o, g): one contiguous sigmoid over
            # 3H lanes (EUP tanh form, no divide), one tanh over the last H.
            sig = 0.5 * jnp.tanh(0.5 * gates[:, 0:3 * H]) + 0.5
            i = sig[:, 0:H]
            f = sig[:, H:2 * H]
            o = sig[:, 2 * H:3 * H]
            g = jnp.tanh(gates[:, 3 * H:4 * H])
            c = f * c + i * g
            h = o * jnp.tanh(c)
            # Hand h_t to the next layer (seq_ref was fully consumed by the
            # hoisted projection above, so overwriting it is safe).
            seq_ref[pl.ds(t * Bp, Bp), :] = h.astype(seq_ref.dtype)

        # Classifier head on hn[-1]: fc1 -> relu -> dropout(eval id) -> fc2.
        @pl.when(layer == last_layer)
        def _():
            z1 = jnp.maximum(
                jnp.dot(h.astype(jnp.bfloat16), w1_ref[...],
                        preferred_element_type=jnp.float32) + b1_ref[...],
                0.0)
            logits = jnp.dot(z1.astype(jnp.bfloat16), w2_ref[...],
                             preferred_element_type=jnp.float32) + b2_ref[...]
            out_ref[...] = logits.astype(out_ref.dtype)

    return kernel


# ---------------------------------------------------------------------------
# One-time parameter packing (gate reorder, transpose, pad, stack, bf16 cast).
# ---------------------------------------------------------------------------
def prepare_params(params):
    lstm = params["lstm"]
    L = len(lstm)
    H = lstm[0][1].shape[1]                     # w_hh: (4H, H)
    D_in = lstm[0][0].shape[1]                  # layer-0 w_ih: (4H, D_in)
    Dp = _round_up(D_in, 128)
    assert Dp == H, "layer-grid weight stacking assumes padded input dim == H"

    wih_all, whh_all, bias_all = [], [], []
    for (w_ih, w_hh, b_ih, b_hh) in lstm:
        din = w_ih.shape[1]
        w_ih_r = _reorder_gates_ifgo_to_ifog(w_ih.astype(jnp.float32))
        w_hh_r = _reorder_gates_ifgo_to_ifog(w_hh.astype(jnp.float32))
        bias_r = _reorder_gates_ifgo_to_ifog(
            (b_ih + b_hh).astype(jnp.float32).reshape(4 * H, 1)).reshape(1, 4 * H)
        wih_t = jnp.zeros((Dp, 4 * H), jnp.float32).at[:din, :].set(w_ih_r.T)
        wih_all.append(wih_t)
        whh_all.append(w_hh_r.T)                # (H, 4H)
        bias_all.append(bias_r)                 # (1, 4H)

    packed = {
        "L": L, "H": H, "Dp": Dp, "D_in": D_in,
        "wih_all": jnp.stack(wih_all).astype(jnp.bfloat16),    # (L, 128, 4H)
        "whh_all": jnp.stack(whh_all).astype(jnp.bfloat16),    # (L, 128, 4H)
        "bias_all": jnp.stack(bias_all),                       # (L, 1, 4H) f32
    }

    F1 = params["w1"].shape[0]                  # 64
    C = params["w2"].shape[0]                   # num_classes
    F1p = _round_up(F1, 128)
    Cp = _round_up(C, 128)
    packed["w1_t"] = jnp.zeros((H, F1p), jnp.float32).at[:, :F1].set(
        params["w1"].T.astype(jnp.float32)).astype(jnp.bfloat16)
    packed["b1"] = jnp.zeros((1, F1p), jnp.float32).at[:, :F1].set(
        params["b1"].astype(jnp.float32))
    packed["w2_t"] = jnp.zeros((F1p, Cp), jnp.float32).at[:F1, :C].set(
        params["w2"].T.astype(jnp.float32)).astype(jnp.bfloat16)
    packed["b2"] = jnp.zeros((1, Cp), jnp.float32).at[:, :C].set(
        params["b2"].astype(jnp.float32))
    packed["C"] = C
    packed["Cp"] = Cp
    packed["F1p"] = F1p
    return packed


# ---------------------------------------------------------------------------
# Forward: one pallas_call with grid=(num_layers,).
# ---------------------------------------------------------------------------
def lstm_model_2_forward(x, packed):
    """x: (B, T, input_dim) batch-first, like the PyTorch module."""
    B, T, D = x.shape
    H, Dp, L = packed["H"], packed["Dp"], packed["L"]
    C, Cp, F1p = packed["C"], packed["Cp"], packed["F1p"]
    Bp = _round_up(B, 8)                         # f32 sublane multiple

    # batch-first -> time-major, pad batch + feature dims, flatten, cast bf16.
    xs = jnp.transpose(x.astype(jnp.float32), (1, 0, 2))          # (T, B, D)
    xs = jnp.pad(xs, ((0, 0), (0, Bp - B), (0, Dp - D)))          # (T, Bp, Dp)
    xs = xs.reshape(T * Bp, Dp).astype(jnp.bfloat16)

    out = pl.pallas_call(
        _make_kernel(T, Bp, H),
        out_shape=jax.ShapeDtypeStruct((Bp, Cp), jnp.float32),
        grid_spec=pltpu.PrefetchScalarGridSpec(
            num_scalar_prefetch=0,
            grid=(L,),
            in_specs=[
                pl.BlockSpec((T * Bp, Dp), lambda l: (0, 0)),          # x (resident)
                pl.BlockSpec((None, Dp, 4 * H), lambda l: (l, 0, 0)),  # W_ih^T (layer l)
                pl.BlockSpec((None, H, 4 * H), lambda l: (l, 0, 0)),   # W_hh^T (layer l)
                pl.BlockSpec((None, 1, 4 * H), lambda l: (l, 0, 0)),   # bias   (layer l)
                pl.BlockSpec((H, F1p), lambda l: (0, 0)),              # fc1 W^T
                pl.BlockSpec((1, F1p), lambda l: (0, 0)),              # fc1 b
                pl.BlockSpec((F1p, Cp), lambda l: (0, 0)),             # fc2 W^T
                pl.BlockSpec((1, Cp), lambda l: (0, 0)),               # fc2 b
            ],
            out_specs=pl.BlockSpec((Bp, Cp), lambda l: (0, 0)),
            scratch_shapes=[
                pltpu.VMEM((T * Bp, H), jnp.bfloat16),      # inter-layer hidden seq
                pltpu.VMEM((T * Bp, 4 * H), jnp.float32),   # hoisted input projection
            ],
        ),
        compiler_params=pltpu.CompilerParams(
            dimension_semantics=("arbitrary",)),
    )(xs, packed["wih_all"], packed["whh_all"], packed["bias_all"],
      packed["w1_t"], packed["b1"], packed["w2_t"], packed["b2"])
    # TODO(synk): if batch ever exceeds 8, add a leading "parallel" batch grid
    # axis (multiples of 8) so v7x megacore shards it; at B=2 single-core is right.
    return out[:B, :C]


# ---------------------------------------------------------------------------
# Parameter init (mimics PyTorch U(-1/sqrt(H), 1/sqrt(H)))
# ---------------------------------------------------------------------------
def init_params(key, input_dim=51, hidden_dim=128, num_layers=3, num_classes=2):
    params = {"lstm": []}
    k = 1.0 / math.sqrt(hidden_dim)
    for layer in range(num_layers):
        din = input_dim if layer == 0 else hidden_dim
        key, k1, k2, k3, k4 = jax.random.split(key, 5)
        w_ih = jax.random.uniform(k1, (4 * hidden_dim, din), jnp.float32, -k, k)
        w_hh = jax.random.uniform(k2, (4 * hidden_dim, hidden_dim), jnp.float32, -k, k)
        b_ih = jax.random.uniform(k3, (4 * hidden_dim,), jnp.float32, -k, k)
        b_hh = jax.random.uniform(k4, (4 * hidden_dim,), jnp.float32, -k, k)
        params["lstm"].append((w_ih, w_hh, b_ih, b_hh))
    key, k1, k2, k3, k4 = jax.random.split(key, 5)
    k_fc1 = 1.0 / math.sqrt(hidden_dim)
    params["w1"] = jax.random.uniform(k1, (64, hidden_dim), jnp.float32, -k_fc1, k_fc1)
    params["b1"] = jax.random.uniform(k2, (64,), jnp.float32, -k_fc1, k_fc1)
    k_fc2 = 1.0 / math.sqrt(64)
    params["w2"] = jax.random.uniform(k3, (num_classes, 64), jnp.float32, -k_fc2, k_fc2)
    params["b2"] = jax.random.uniform(k4, (num_classes,), jnp.float32, -k_fc2, k_fc2)
    return params


# ---------------------------------------------------------------------------
# Pure-JAX f32 reference (PyTorch semantics) for correctness check
# ---------------------------------------------------------------------------
def lstm_model_2_ref(x, params):
    B = x.shape[0]
    seq = x.astype(jnp.float32)
    for (w_ih, w_hh, b_ih, b_hh) in params["lstm"]:
        H = w_hh.shape[1]

        def cell(carry, x_t):
            h, c = carry
            gates = x_t @ w_ih.T + h @ w_hh.T + b_ih + b_hh
            i, f, g, o = jnp.split(gates, 4, axis=-1)
            c = jax.nn.sigmoid(f) * c + jax.nn.sigmoid(i) * jnp.tanh(g)
            h = jax.nn.sigmoid(o) * jnp.tanh(c)
            return (h, c), h

        h0 = jnp.zeros((B, H), jnp.float32)
        c0 = jnp.zeros((B, H), jnp.float32)
        (_, _), hs = lax.scan(cell, (h0, c0), jnp.transpose(seq, (1, 0, 2)))
        seq = jnp.transpose(hs, (1, 0, 2))
    out = seq[:, -1, :]                                   # hn[-1]
    out = jnp.maximum(out @ params["w1"].T + params["b1"], 0.0)
    out = out @ params["w2"].T + params["b2"]             # dropout eval = identity
    return out


if __name__ == "__main__":
    B, T, D_IN, H, C = 2, 8, 51, 128, 2

    key = jax.random.PRNGKey(0)
    k_param, k_x = jax.random.split(key)
    params = init_params(k_param, input_dim=D_IN, hidden_dim=H,
                         num_layers=3, num_classes=C)
    packed = prepare_params(params)                       # one-time weight prep
    x = jax.random.normal(k_x, (B, T, D_IN), jnp.float32)

    out = jax.block_until_ready(lstm_model_2_forward(x, packed))
    ref = jax.block_until_ready(lstm_model_2_ref(x, params))

    assert out.shape == (B, C), out.shape
    # bf16 MXU weights -> tolerance loosened vs. the pure-f32 reference.
    np.testing.assert_allclose(np.asarray(out), np.asarray(ref),
                               rtol=2e-2, atol=2e-2)
    print("KERNEL_OK")
</pallas_src>

<mosaic_0001>
module attributes {stable_mosaic.version = 11 : i64} {
  func.func @kernel(%arg0: i32, %arg1: memref<64x128xbf16, #tpu.memory_space<vmem>>, %arg2: memref<1x128x512xbf16, #tpu.memory_space<vmem>>, %arg3: memref<1x128x512xbf16, #tpu.memory_space<vmem>>, %arg4: memref<1x1x512xf32, #tpu.memory_space<vmem>>, %arg5: memref<128x128xbf16, #tpu.memory_space<vmem>>, %arg6: memref<1x128xf32, #tpu.memory_space<vmem>>, %arg7: memref<128x128xbf16, #tpu.memory_space<vmem>>, %arg8: memref<1x128xf32, #tpu.memory_space<vmem>>, %arg9: memref<8x128xf32, #tpu.memory_space<vmem>>, %arg10: memref<64x128xbf16, #tpu.memory_space<vmem>>, %arg11: memref<64x512xf32, #tpu.memory_space<vmem>>) attributes {dimension_semantics = [#tpu.dimension_semantics<arbitrary>], iteration_bounds = array<i64: 3>, scalar_prefetch = 0 : i64, scratch_operands = 2 : i64, tpu.core_type = #tpu.core_type<tc>, window_params = [{pipeline_mode = #tpu.pipeline_mode<synchronous>, transform_indices = @transform_0, window_bounds = array<i64: 64, 128>}, {transform_indices = @transform_1, window_bounds = array<i64: 1, 128, 512>}, {transform_indices = @transform_2, window_bounds = array<i64: 1, 128, 512>}, {transform_indices = @transform_3, window_bounds = array<i64: 1, 1, 512>}, {pipeline_mode = #tpu.pipeline_mode<synchronous>, transform_indices = @transform_4, window_bounds = array<i64: 128, 128>}, {pipeline_mode = #tpu.pipeline_mode<synchronous>, transform_indices = @transform_5, window_bounds = array<i64: 1, 128>}, {pipeline_mode = #tpu.pipeline_mode<synchronous>, transform_indices = @transform_6, window_bounds = array<i64: 128, 128>}, {pipeline_mode = #tpu.pipeline_mode<synchronous>, transform_indices = @transform_7, window_bounds = array<i64: 1, 128>}, {pipeline_mode = #tpu.pipeline_mode<synchronous>, transform_indices = @transform_8, window_bounds = array<i64: 8, 128>}]} {
    %c0_i32 = arith.constant 0 : i32
    %0 = arith.cmpi eq, %arg0, %c0_i32 : i32
    %1 = arith.extui %0 : i1 to i32
    %c0_i32_0 = arith.constant 0 : i32
    %2 = arith.cmpi ne, %1, %c0_i32_0 : i32
    scf.if %2 {
      %c0_94 = arith.constant 0 : index
      %c0_95 = arith.constant 0 : index
      %225 = vector.load %arg1[%c0_94, %c0_95] : memref<64x128xbf16, #tpu.memory_space<vmem>>, vector<64x128xbf16>
      %c0_96 = arith.constant 0 : index
      %c0_97 = arith.constant 0 : index
      %226 = vector.load %arg10[%c0_96, %c0_97] : memref<64x128xbf16, #tpu.memory_space<vmem>>, vector<64x128xbf16>
      tpu.vector_store %arg10[%c0_96, %c0_97], %225 {strides = array<i32>} : memref<64x128xbf16, #tpu.memory_space<vmem>>, vector<64x128xbf16>,
    } else {
    }
    %c0 = arith.constant 0 : index
    %c0_1 = arith.constant 0 : index
    %3 = vector.load %arg10[%c0, %c0_1] : memref<64x128xbf16, #tpu.memory_space<vmem>>, vector<64x128xbf16>
    %c0_2 = arith.constant 0 : index
    %c0_3 = arith.constant 0 : index
    %c0_4 = arith.constant 0 : index
    %4 = vector.load %arg2[%c0_2, %c0_3, %c0_4] : memref<1x128x512xbf16, #tpu.memory_space<vmem>>, vector<1x128x512xbf16>
    %5 = vector.shape_cast %4 : vector<1x128x512xbf16> to vector<128x512xbf16>
    %cst = arith.constant dense<0.000000e+00> : vector<64x512xf32>
    %6 = tpu.matmul %3, %5, %cst {dimension_numbers = #tpu.dot_dimension_numbers<[1], [0], [0], [1], [0, 0, 1, 1], [], []>} : vector<64x128xbf16>, vector<128x512xbf16>, vector<64x512xf32> -> vector<64x512xf32>
    %c0_5 = arith.constant 0 : index
    %c0_6 = arith.constant 0 : index
    %c0_7 = arith.constant 0 : index
    %7 = vector.load %arg4[%c0_5, %c0_6, %c0_7] : memref<1x1x512xf32, #tpu.memory_space<vmem>>, vector<1x1x512xf32>
    %8 = vector.shape_cast %7 : vector<1x1x512xf32> to vector<1x512xf32>
    %9 = vector.broadcast %8 : vector<1x512xf32> to vector<64x512xf32>
    %10 = arith.addf %6, %9 : vector<64x512xf32>
    %c0_8 = arith.constant 0 : index
    %c0_9 = arith.constant 0 : index
    %11 = vector.load %arg11[%c0_8, %c0_9] : memref<64x512xf32, #tpu.memory_space<vmem>>, vector<64x512xf32>
    tpu.vector_store %arg11[%c0_8, %c0_9], %10 {strides = array<i32>} : memref<64x512xf32, #tpu.memory_space<vmem>>, vector<64x512xf32>,
    %cst_10 = arith.constant 0.000000e+00 : f32
    %12 = vector.broadcast %cst_10 : f32 to vector<8x128xf32>
    %cst_11 = arith.constant 0.000000e+00 : f32
    %13 = vector.broadcast %cst_11 : f32 to vector<8x128xf32>
    %c0_12 = arith.constant 0 : index
    %c0_13 = arith.constant 0 : index
    %14 = vector.load %arg11[%c0_12, %c0_13] : memref<64x512xf32, #tpu.memory_space<vmem>>, vector<8x512xf32>
    %15 = arith.truncf %12 : vector<8x128xf32> to vector<8x128xbf16>
    %c0_14 = arith.constant 0 : index
    %c0_15 = arith.constant 0 : index
    %c0_16 = arith.constant 0 : index
    %16 = vector.load %arg3[%c0_14, %c0_15, %c0_16] : memref<1x128x512xbf16, #tpu.memory_space<vmem>>, vector<1x128x512xbf16>
    %17 = vector.shape_cast %16 : vector<1x128x512xbf16> to vector<128x512xbf16>
    %cst_17 = arith.constant dense<0.000000e+00> : vector<8x512xf32>
    %18 = tpu.matmul %15, %17, %cst_17 {dimension_numbers = #tpu.dot_dimension_numbers<[1], [0], [0], [1], [0, 0, 1, 1], [], []>} : vector<8x128xbf16>, vector<128x512xbf16>, vector<8x512xf32> -> vector<8x512xf32>
    %19 = arith.addf %14, %18 : vector<8x512xf32>
    %20 = vector.extract_strided_slice %19 {offsets = [0, 0], sizes = [8, 384], strides = [1, 1]} : vector<8x512xf32> to vector<8x384xf32>
    %cst_18 = arith.constant 5.000000e-01 : f32
    %21 = vector.broadcast %cst_18 : f32 to vector<8x384xf32>
    %22 = arith.mulf %21, %20 : vector<8x384xf32>
    %23 = math.tanh %22 : vector<8x384xf32>
    %cst_19 = arith.constant 5.000000e-01 : f32
    %24 = vector.broadcast %cst_19 : f32 to vector<8x384xf32>
    %25 = arith.mulf %24, %23 : vector<8x384xf32>
    %cst_20 = arith.constant 5.000000e-01 : f32
    %26 = vector.broadcast %cst_20 : f32 to vector<8x384xf32>
    %27 = arith.addf %25, %26 : vector<8x384xf32>
    %28 = vector.extract_strided_slice %27 {offsets = [0, 0], sizes = [8, 128], strides = [1, 1]} : vector<8x384xf32> to vector<8x128xf32>
    %29 = vector.extract_strided_slice %27 {offsets = [0, 128], sizes = [8, 128], strides = [1, 1]} : vector<8x384xf32> to vector<8x128xf32>
    %30 = vector.extract_strided_slice %27 {offsets = [0, 256], sizes = [8, 128], strides = [1, 1]} : vector<8x384xf32> to vector<8x128xf32>
    %31 = vector.extract_strided_slice %19 {offsets = [0, 384], sizes = [8, 128], strides = [1, 1]} : vector<8x512xf32> to vector<8x128xf32>
    %32 = math.tanh %31 : vector<8x128xf32>
    %33 = arith.mulf %29, %13 : vector<8x128xf32>
    %34 = arith.mulf %28, %32 : vector<8x128xf32>
    %35 = arith.addf %33, %34 : vector<8x128xf32>
    %36 = math.tanh %35 : vector<8x128xf32>
    %37 = arith.mulf %30, %36 : vector<8x128xf32>
    %38 = arith.truncf %37 : vector<8x128xf32> to vector<8x128xbf16>
    %c0_21 = arith.constant 0 : index
    %c0_22 = arith.constant 0 : index
    %39 = vector.load %arg10[%c0_21, %c0_22] : memref<64x128xbf16, #tpu.memory_space<vmem>>, vector<8x128xbf16>
    tpu.vector_store %arg10[%c0_21, %c0_22], %38 {strides = array<i32>} : memref<64x128xbf16, #tpu.memory_space<vmem>>, vector<8x128xbf16>,
    %c8 = arith.constant 8 : index
    %c0_23 = arith.constant 0 : index
    %40 = vector.load %arg11[%c8, %c0_23] : memref<64x512xf32, #tpu.memory_space<vmem>>, vector<8x512xf32>
    %41 = arith.truncf %37 : vector<8x128xf32> to vector<8x128xbf16>
    %c0_24 = arith.constant 0 : index
    %c0_25 = arith.constant 0 : index
    %c0_26 = arith.constant 0 : index
    %42 = vector.load %arg3[%c0_24, %c0_25, %c0_26] : memref<1x128x512xbf16, #tpu.memory_space<vmem>>, vector<1x128x512xbf16>
    %43 = vector.shape_cast %42 : vector<1x128x512xbf16> to vector<128x512xbf16>
    %cst_27 = arith.constant dense<0.000000e+00> : vector<8x512xf32>
    %44 = tpu.matmul %41, %43, %cst_27 {dimension_numbers = #tpu.dot_dimension_numbers<[1], [0], [0], [1], [0, 0, 1, 1], [], []>} : vector<8x128xbf16>, vector<128x512xbf16>, vector<8x512xf32> -> vector<8x512xf32>
    %45 = arith.addf %40, %44 : vector<8x512xf32>
    %46 = vector.extract_strided_slice %45 {offsets = [0, 0], sizes = [8, 384], strides = [1, 1]} : vector<8x512xf32> to vector<8x384xf32>
    %cst_28 = arith.constant 5.000000e-01 : f32
    %47 = vector.broadcast %cst_28 : f32 to vector<8x384xf32>
    %48 = arith.mulf %47, %46 : vector<8x384xf32>
    %49 = math.tanh %48 : vector<8x384xf32>
    %cst_29 = arith.constant 5.000000e-01 : f32
    %50 = vector.broadcast %cst_29 : f32 to vector<8x384xf32>
    %51 = arith.mulf %50, %49 : vector<8x384xf32>
    %cst_30 = arith.constant 5.000000e-01 : f32
    %52 = vector.broadcast %cst_30 : f32 to vector<8x384xf32>
    %53 = arith.addf %51, %52 : vector<8x384xf32>
    %54 = vector.extract_strided_slice %53 {offsets = [0, 0], sizes = [8, 128], strides = [1, 1]} : vector<8x384xf32> to vector<8x128xf32>
    %55 = vector.extract_strided_slice %53 {offsets = [0, 128], sizes = [8, 128], strides = [1, 1]} : vector<8x384xf32> to vector<8x128xf32>
    %56 = vector.extract_strided_slice %53 {offsets = [0, 256], sizes = [8, 128], strides = [1, 1]} : vector<8x384xf32> to vector<8x128xf32>
    %57 = vector.extract_strided_slice %45 {offsets = [0, 384], sizes = [8, 128], strides = [1, 1]} : vector<8x512xf32> to vector<8x128xf32>
    %58 = math.tanh %57 : vector<8x128xf32>
    %59 = arith.mulf %55, %35 : vector<8x128xf32>
    %60 = arith.mulf %54, %58 : vector<8x128xf32>
    %61 = arith.addf %59, %60 : vector<8x128xf32>
    %62 = math.tanh %61 : vector<8x128xf32>
    %63 = arith.mulf %56, %62 : vector<8x128xf32>
    %64 = arith.truncf %63 : vector<8x128xf32> to vector<8x128xbf16>
    %c8_31 = arith.constant 8 : index
    %c0_32 = arith.constant 0 : index
    %65 = vector.load %arg10[%c8_31, %c0_32] : memref<64x128xbf16, #tpu.memory_space<vmem>>, vector<8x128xbf16>
    tpu.vector_store %arg10[%c8_31, %c0_32], %64 {strides = array<i32>} : memref<64x128xbf16, #tpu.memory_space<vmem>>, vector<8x128xbf16>,
    %c16 = arith.constant 16 : index
    %c0_33 = arith.constant 0 : index
    %66 = vector.load %arg11[%c16, %c0_33] : memref<64x512xf32, #tpu.memory_space<vmem>>, vector<8x512xf32>
    %67 = arith.truncf %63 : vector<8x128xf32> to vector<8x128xbf16>
    %c0_34 = arith.constant 0 : index
    %c0_35 = arith.constant 0 : index
    %c0_36 = arith.constant 0 : index
    %68 = vector.load %arg3[%c0_34, %c0_35, %c0_36] : memref<1x128x512xbf16, #tpu.memory_space<vmem>>, vector<1x128x512xbf16>
    %69 = vector.shape_cast %68 : vector<1x128x512xbf16> to vector<128x512xbf16>
    %cst_37 = arith.constant dense<0.000000e+00> : vector<8x512xf32>
    %70 = tpu.matmul %67, %69, %cst_37 {dimension_numbers = #tpu.dot_dimension_numbers<[1], [0], [0], [1], [0, 0, 1, 1], [], []>} : vector<8x128xbf16>, vector<128x512xbf16>, vector<8x512xf32> -> vector<8x512xf32>
    %71 = arith.addf %66, %70 : vector<8x512xf32>
    %72 = vector.extract_strided_slice %71 {offsets = [0, 0], sizes = [8, 384], strides = [1, 1]} : vector<8x512xf32> to vector<8x384xf32>
    %cst_38 = arith.constant 5.000000e-01 : f32
    %73 = vector.broadcast %cst_38 : f32 to vector<8x384xf32>
    %74 = arith.mulf %73, %72 : vector<8x384xf32>
    %75 = math.tanh %74 : vector<8x384xf32>
    %cst_39 = arith.constant 5.000000e-01 : f32
    %76 = vector.broadcast %cst_39 : f32 to vector<8x384xf32>
    %77 = arith.mulf %76, %75 : vector<8x384xf32>
    %cst_40 = arith.constant 5.000000e-01 : f32
    %78 = vector.broadcast %cst_40 : f32 to vector<8x384xf32>
    %79 = arith.addf %77, %78 : vector<8x384xf32>
    %80 = vector.extract_strided_slice %79 {offsets = [0, 0], sizes = [8, 128], strides = [1, 1]} : vector<8x384xf32> to vector<8x128xf32>
    %81 = vector.extract_strided_slice %79 {offsets = [0, 128], sizes = [8, 128], strides = [1, 1]} : vector<8x384xf32> to vector<8x128xf32>
    %82 = vector.extract_strided_slice %79 {offsets = [0, 256], sizes = [8, 128], strides = [1, 1]} : vector<8x384xf32> to vector<8x128xf32>
    %83 = vector.extract_strided_slice %71 {offsets = [0, 384], sizes = [8, 128], strides = [1, 1]} : vector<8x512xf32> to vector<8x128xf32>
    %84 = math.tanh %83 : vector<8x128xf32>
    %85 = arith.mulf %81, %61 : vector<8x128xf32>
    %86 = arith.mulf %80, %84 : vector<8x128xf32>
    %87 = arith.addf %85, %86 : vector<8x128xf32>
    %88 = math.tanh %87 : vector<8x128xf32>
    %89 = arith.mulf %82, %88 : vector<8x128xf32>
    %90 = arith.truncf %89 : vector<8x128xf32> to vector<8x128xbf16>
    %c16_41 = arith.constant 16 : index
    %c0_42 = arith.constant 0 : index
    %91 = vector.load %arg10[%c16_41, %c0_42] : memref<64x128xbf16, #tpu.memory_space<vmem>>, vector<8x128xbf16>
    tpu.vector_store %arg10[%c16_41, %c0_42], %90 {strides = array<i32>} : memref<64x128xbf16, #tpu.memory_space<vmem>>, vector<8x128xbf16>,
    %c24 = arith.constant 24 : index
    %c0_43 = arith.constant 0 : index
    %92 = vector.load %arg11[%c24, %c0_43] : memref<64x512xf32, #tpu.memory_space<vmem>>, vector<8x512xf32>
    %93 = arith.truncf %89 : vector<8x128xf32> to vector<8x128xbf16>
    %c0_44 = arith.constant 0 : index
    %c0_45 = arith.constant 0 : index
    %c0_46 = arith.constant 0 : index
    %94 = vector.load %arg3[%c0_44, %c0_45, %c0_46] : memref<1x128x512xbf16, #tpu.memory_space<vmem>>, vector<1x128x512xbf16>
    %95 = vector.shape_cast %94 : vector<1x128x512xbf16> to vector<128x512xbf16>
    %cst_47 = arith.constant dense<0.000000e+00> : vector<8x512xf32>
    %96 = tpu.matmul %93, %95, %cst_47 {dimension_numbers = #tpu.dot_dimension_numbers<[1], [0], [0], [1], [0, 0, 1, 1], [], []>} : vector<8x128xbf16>, vector<128x512xbf16>, vector<8x512xf32> -> vector<8x512xf32>
    %97 = arith.addf %92, %96 : vector<8x512xf32>
    %98 = vector.extract_strided_slice %97 {offsets = [0, 0], sizes = [8, 384], strides = [1, 1]} : vector<8x512xf32> to vector<8x384xf32>
    %cst_48 = arith.constant 5.000000e-01 : f32
    %99 = vector.broadcast %cst_48 : f32 to vector<8x384xf32>
    %100 = arith.mulf %99, %98 : vector<8x384xf32>
    %101 = math.tanh %100 : vector<8x384xf32>
    %cst_49 = arith.constant 5.000000e-01 : f32
    %102 = vector.broadcast %cst_49 : f32 to vector<8x384xf32>
    %103 = arith.mulf %102, %101 : vector<8x384xf32>
    %cst_50 = arith.constant 5.000000e-01 : f32
    %104 = vector.broadcast %cst_50 : f32 to vector<8x384xf32>
    %105 = arith.addf %103, %104 : vector<8x384xf32>
    %106 = vector.extract_strided_slice %105 {offsets = [0, 0], sizes = [8, 128], strides = [1, 1]} : vector<8x384xf32> to vector<8x128xf32>
    %107 = vector.extract_strided_slice %105 {offsets = [0, 128], sizes = [8, 128], strides = [1, 1]} : vector<8x384xf32> to vector<8x128xf32>
    %108 = vector.extract_strided_slice %105 {offsets = [0, 256], sizes = [8, 128], strides = [1, 1]} : vector<8x384xf32> to vector<8x128xf32>
    %109 = vector.extract_strided_slice %97 {offsets = [0, 384], sizes = [8, 128], strides = [1, 1]} : vector<8x512xf32> to vector<8x128xf32>
    %110 = math.tanh %109 : vector<8x128xf32>
    %111 = arith.mulf %107, %87 : vector<8x128xf32>
    %112 = arith.mulf %106, %110 : vector<8x128xf32>
    %113 = arith.addf %111, %112 : vector<8x128xf32>
    %114 = math.tanh %113 : vector<8x128xf32>
    %115 = arith.mulf %108, %114 : vector<8x128xf32>
    %116 = arith.truncf %115 : vector<8x128xf32> to vector<8x128xbf16>
    %c24_51 = arith.constant 24 : index
    %c0_52 = arith.constant 0 : index
    %117 = vector.load %arg10[%c24_51, %c0_52] : memref<64x128xbf16, #tpu.memory_space<vmem>>, vector<8x128xbf16>
    tpu.vector_store %arg10[%c24_51, %c0_52], %116 {strides = array<i32>} : memref<64x128xbf16, #tpu.memory_space<vmem>>, vector<8x128xbf16>,
    %c32 = arith.constant 32 : index
    %c0_53 = arith.constant 0 : index
    %118 = vector.load %arg11[%c32, %c0_53] : memref<64x512xf32, #tpu.memory_space<vmem>>, vector<8x512xf32>
    %119 = arith.truncf %115 : vector<8x128xf32> to vector<8x128xbf16>
    %c0_54 = arith.constant 0 : index
    %c0_55 = arith.constant 0 : index
    %c0_56 = arith.constant 0 : index
    %120 = vector.load %arg3[%c0_54, %c0_55, %c0_56] : memref<1x128x512xbf16, #tpu.memory_space<vmem>>, vector<1x128x512xbf16>
    %121 = vector.shape_cast %120 : vector<1x128x512xbf16> to vector<128x512xbf16>
    %cst_57 = arith.constant dense<0.000000e+00> : vector<8x512xf32>
    %122 = tpu.matmul %119, %121, %cst_57 {dimension_numbers = #tpu.dot_dimension_numbers<[1], [0], [0], [1], [0, 0, 1, 1], [], []>} : vector<8x128xbf16>, vector<128x512xbf16>, vector<8x512xf32> -> vector<8x512xf32>
    %123 = arith.addf %118, %122 : vector<8x512xf32>
    %124 = vector.extract_strided_slice %123 {offsets = [0, 0], sizes = [8, 384], strides = [1, 1]} : vector<8x512xf32> to vector<8x384xf32>
    %cst_58 = arith.constant 5.000000e-01 : f32
    %125 = vector.broadcast %cst_58 : f32 to vector<8x384xf32>
    %126 = arith.mulf %125, %124 : vector<8x384xf32>
    %127 = math.tanh %126 : vector<8x384xf32>
    %cst_59 = arith.constant 5.000000e-01 : f32
    %128 = vector.broadcast %cst_59 : f32 to vector<8x384xf32>
    %129 = arith.mulf %128, %127 : vector<8x384xf32>
    %cst_60 = arith.constant 5.000000e-01 : f32
    %130 = vector.broadcast %cst_60 : f32 to vector<8x384xf32>
    %131 = arith.addf %129, %130 : vector<8x384xf32>
    %132 = vector.extract_strided_slice %131 {offsets = [0, 0], sizes = [8, 128], strides = [1, 1]} : vector<8x384xf32> to vector<8x128xf32>
    %133 = vector.extract_strided_slice %131 {offsets = [0, 128], sizes = [8, 128], strides = [1, 1]} : vector<8x384xf32> to vector<8x128xf32>
    %134 = vector.extract_strided_slice %131 {offsets = [0, 256], sizes = [8, 128], strides = [1, 1]} : vector<8x384xf32> to vector<8x128xf32>
    %135 = vector.extract_strided_slice %123 {offsets = [0, 384], sizes = [8, 128], strides = [1, 1]} : vector<8x512xf32> to vector<8x128xf32>
    %136 = math.tanh %135 : vector<8x128xf32>
    %137 = arith.mulf %133, %113 : vector<8x128xf32>
    %138 = arith.mulf %132, %136 : vector<8x128xf32>
    %139 = arith.addf %137, %138 : vector<8x128xf32>
    %140 = math.tanh %139 : vector<8x128xf32>
    %141 = arith.mulf %134, %140 : vector<8x128xf32>
    %142 = arith.truncf %141 : vector<8x128xf32> to vector<8x128xbf16>
    %c32_61 = arith.constant 32 : index
    %c0_62 = arith.constant 0 : index
    %143 = vector.load %arg10[%c32_61, %c0_62] : memref<64x128xbf16, #tpu.memory_space<vmem>>, vector<8x128xbf16>
    tpu.vector_store %arg10[%c32_61, %c0_62], %142 {strides = array<i32>} : memref<64x128xbf16, #tpu.memory_space<vmem>>, vector<8x128xbf16>,
    %c40 = arith.constant 40 : index
    %c0_63 = arith.constant 0 : index
    %144 = vector.load %arg11[%c40, %c0_63] : memref<64x512xf32, #tpu.memory_space<vmem>>, vector<8x512xf32>
    %145 = arith.truncf %141 : vector<8x128xf32> to vector<8x128xbf16>
    %c0_64 = arith.constant 0 : index
    %c0_65 = arith.constant 0 : index
    %c0_66 = arith.constant 0 : index
    %146 = vector.load %arg3[%c0_64, %c0_65, %c0_66] : memref<1x128x512xbf16, #tpu.memory_space<vmem>>, vector<1x128x512xbf16>
    %147 = vector.shape_cast %146 : vector<1x128x512xbf16> to vector<128x512xbf16>
    %cst_67 = arith.constant dense<0.000000e+00> : vector<8x512xf32>
    %148 = tpu.matmul %145, %147, %cst_67 {dimension_numbers = #tpu.dot_dimension_numbers<[1], [0], [0], [1], [0, 0, 1, 1], [], []>} : vector<8x128xbf16>, vector<128x512xbf16>, vector<8x512xf32> -> vector<8x512xf32>
    %149 = arith.addf %144, %148 : vector<8x512xf32>
    %150 = vector.extract_strided_slice %149 {offsets = [0, 0], sizes = [8, 384], strides = [1, 1]} : vector<8x512xf32> to vector<8x384xf32>
    %cst_68 = arith.constant 5.000000e-01 : f32
    %151 = vector.broadcast %cst_68 : f32 to vector<8x384xf32>
    %152 = arith.mulf %151, %150 : vector<8x384xf32>
    %153 = math.tanh %152 : vector<8x384xf32>
    %cst_69 = arith.constant 5.000000e-01 : f32
    %154 = vector.broadcast %cst_69 : f32 to vector<8x384xf32>
    %155 = arith.mulf %154, %153 : vector<8x384xf32>
    %cst_70 = arith.constant 5.000000e-01 : f32
    %156 = vector.broadcast %cst_70 : f32 to vector<8x384xf32>
    %157 = arith.addf %155, %156 : vector<8x384xf32>
    %158 = vector.extract_strided_slice %157 {offsets = [0, 0], sizes = [8, 128], strides = [1, 1]} : vector<8x384xf32> to vector<8x128xf32>
    %159 = vector.extract_strided_slice %157 {offsets = [0, 128], sizes = [8, 128], strides = [1, 1]} : vector<8x384xf32> to vector<8x128xf32>
    %160 = vector.extract_strided_slice %157 {offsets = [0, 256], sizes = [8, 128], strides = [1, 1]} : vector<8x384xf32> to vector<8x128xf32>
    %161 = vector.extract_strided_slice %149 {offsets = [0, 384], sizes = [8, 128], strides = [1, 1]} : vector<8x512xf32> to vector<8x128xf32>
    %162 = math.tanh %161 : vector<8x128xf32>
    %163 = arith.mulf %159, %139 : vector<8x128xf32>
    %164 = arith.mulf %158, %162 : vector<8x128xf32>
    %165 = arith.addf %163, %164 : vector<8x128xf32>
    %166 = math.tanh %165 : vector<8x128xf32>
    %167 = arith.mulf %160, %166 : vector<8x128xf32>
    %168 = arith.truncf %167 : vector<8x128xf32> to vector<8x128xbf16>
    %c40_71 = arith.constant 40 : index
    %c0_72 = arith.constant 0 : index
    %169 = vector.load %arg10[%c40_71, %c0_72] : memref<64x128xbf16, #tpu.memory_space<vmem>>, vector<8x128xbf16>
    tpu.vector_store %arg10[%c40_71, %c0_72], %168 {strides = array<i32>} : memref<64x128xbf16, #tpu.memory_space<vmem>>, vector<8x128xbf16>,
    %c48 = arith.constant 48 : index
    %c0_73 = arith.constant 0 : index
    %170 = vector.load %arg11[%c48, %c0_73] : memref<64x512xf32, #tpu.memory_space<vmem>>, vector<8x512xf32>
    %171 = arith.truncf %167 : vector<8x128xf32> to vector<8x128xbf16>
    %c0_74 = arith.constant 0 : index
    %c0_75 = arith.constant 0 : index
    %c0_76 = arith.constant 0 : index
    %172 = vector.load %arg3[%c0_74, %c0_75, %c0_76] : memref<1x128x512xbf16, #tpu.memory_space<vmem>>, vector<1x128x512xbf16>
    %173 = vector.shape_cast %172 : vector<1x128x512xbf16> to vector<128x512xbf16>
    %cst_77 = arith.constant dense<0.000000e+00> : vector<8x512xf32>
    %174 = tpu.matmul %171, %173, %cst_77 {dimension_numbers = #tpu.dot_dimension_numbers<[1], [0], [0], [1], [0, 0, 1, 1], [], []>} : vector<8x128xbf16>, vector<128x512xbf16>, vector<8x512xf32> -> vector<8x512xf32>
    %175 = arith.addf %170, %174 : vector<8x512xf32>
    %176 = vector.extract_strided_slice %175 {offsets = [0, 0], sizes = [8, 384], strides = [1, 1]} : vector<8x512xf32> to vector<8x384xf32>
    %cst_78 = arith.constant 5.000000e-01 : f32
    %177 = vector.broadcast %cst_78 : f32 to vector<8x384xf32>
    %178 = arith.mulf %177, %176 : vector<8x384xf32>
    %179 = math.tanh %178 : vector<8x384xf32>
    %cst_79 = arith.constant 5.000000e-01 : f32
    %180 = vector.broadcast %cst_79 : f32 to vector<8x384xf32>
    %181 = arith.mulf %180, %179 : vector<8x384xf32>
    %cst_80 = arith.constant 5.000000e-01 : f32
    %182 = vector.broadcast %cst_80 : f32 to vector<8x384xf32>
    %183 = arith.addf %181, %182 : vector<8x384xf32>
    %184 = vector.extract_strided_slice %183 {offsets = [0, 0], sizes = [8, 128], strides = [1, 1]} : vector<8x384xf32> to vector<8x128xf32>
    %185 = vector.extract_strided_slice %183 {offsets = [0, 128], sizes = [8, 128], strides = [1, 1]} : vector<8x384xf32> to vector<8x128xf32>
    %186 = vector.extract_strided_slice %183 {offsets = [0, 256], sizes = [8, 128], strides = [1, 1]} : vector<8x384xf32> to vector<8x128xf32>
    %187 = vector.extract_strided_slice %175 {offsets = [0, 384], sizes = [8, 128], strides = [1, 1]} : vector<8x512xf32> to vector<8x128xf32>
    %188 = math.tanh %187 : vector<8x128xf32>
    %189 = arith.mulf %185, %165 : vector<8x128xf32>
    %190 = arith.mulf %184, %188 : vector<8x128xf32>
    %191 = arith.addf %189, %190 : vector<8x128xf32>
    %192 = math.tanh %191 : vector<8x128xf32>
    %193 = arith.mulf %186, %192 : vector<8x128xf32>
    %194 = arith.truncf %193 : vector<8x128xf32> to vector<8x128xbf16>
    %c48_81 = arith.constant 48 : index
    %c0_82 = arith.constant 0 : index
    %195 = vector.load %arg10[%c48_81, %c0_82] : memref<64x128xbf16, #tpu.memory_space<vmem>>, vector<8x128xbf16>
    tpu.vector_store %arg10[%c48_81, %c0_82], %194 {strides = array<i32>} : memref<64x128xbf16, #tpu.memory_space<vmem>>, vector<8x128xbf16>,
    %c56 = arith.constant 56 : index
    %c0_83 = arith.constant 0 : index
    %196 = vector.load %arg11[%c56, %c0_83] : memref<64x512xf32, #tpu.memory_space<vmem>>, vector<8x512xf32>
    %197 = arith.truncf %193 : vector<8x128xf32> to vector<8x128xbf16>
    %c0_84 = arith.constant 0 : index
    %c0_85 = arith.constant 0 : index
    %c0_86 = arith.constant 0 : index
    %198 = vector.load %arg3[%c0_84, %c0_85, %c0_86] : memref<1x128x512xbf16, #tpu.memory_space<vmem>>, vector<1x128x512xbf16>
    %199 = vector.shape_cast %198 : vector<1x128x512xbf16> to vector<128x512xbf16>
    %cst_87 = arith.constant dense<0.000000e+00> : vector<8x512xf32>
    %200 = tpu.matmul %197, %199, %cst_87 {dimension_numbers = #tpu.dot_dimension_numbers<[1], [0], [0], [1], [0, 0, 1, 1], [], []>} : vector<8x128xbf16>, vector<128x512xbf16>, vector<8x512xf32> -> vector<8x512xf32>
    %201 = arith.addf %196, %200 : vector<8x512xf32>
    %202 = vector.extract_strided_slice %201 {offsets = [0, 0], sizes = [8, 384], strides = [1, 1]} : vector<8x512xf32> to vector<8x384xf32>
    %cst_88 = arith.constant 5.000000e-01 : f32
    %203 = vector.broadcast %cst_88 : f32 to vector<8x384xf32>
    %204 = arith.mulf %203, %202 : vector<8x384xf32>
    %205 = math.tanh %204 : vector<8x384xf32>
    %cst_89 = arith.constant 5.000000e-01 : f32
    %206 = vector.broadcast %cst_89 : f32 to vector<8x384xf32>
    %207 = arith.mulf %206, %205 : vector<8x384xf32>
    %cst_90 = arith.constant 5.000000e-01 : f32
    %208 = vector.broadcast %cst_90 : f32 to vector<8x384xf32>
    %209 = arith.addf %207, %208 : vector<8x384xf32>
    %210 = vector.extract_strided_slice %209 {offsets = [0, 0], sizes = [8, 128], strides = [1, 1]} : vector<8x384xf32> to vector<8x128xf32>
    %211 = vector.extract_strided_slice %209 {offsets = [0, 128], sizes = [8, 128], strides = [1, 1]} : vector<8x384xf32> to vector<8x128xf32>
    %212 = vector.extract_strided_slice %209 {offsets = [0, 256], sizes = [8, 128], strides = [1, 1]} : vector<8x384xf32> to vector<8x128xf32>
    %213 = vector.extract_strided_slice %201 {offsets = [0, 384], sizes = [8, 128], strides = [1, 1]} : vector<8x512xf32> to vector<8x128xf32>
    %214 = math.tanh %213 : vector<8x128xf32>
    %215 = arith.mulf %211, %191 : vector<8x128xf32>
    %216 = arith.mulf %210, %214 : vector<8x128xf32>
    %217 = arith.addf %215, %216 : vector<8x128xf32>
    %218 = math.tanh %217 : vector<8x128xf32>
    %219 = arith.mulf %212, %218 : vector<8x128xf32>
    %220 = arith.truncf %219 : vector<8x128xf32> to vector<8x128xbf16>
    %c56_91 = arith.constant 56 : index
    %c0_92 = arith.constant 0 : index
    %221 = vector.load %arg10[%c56_91, %c0_92] : memref<64x128xbf16, #tpu.memory_space<vmem>>, vector<8x128xbf16>
    tpu.vector_store %arg10[%c56_91, %c0_92], %220 {strides = array<i32>} : memref<64x128xbf16, #tpu.memory_space<vmem>>, vector<8x128xbf16>,
    %c2_i32 = arith.constant 2 : i32
    %222 = arith.cmpi eq, %arg0, %c2_i32 : i32
    %223 = arith.extui %222 : i1 to i32
    %c0_i32_93 = arith.constant 0 : i32
    %224 = arith.cmpi ne, %223, %c0_i32_93 : i32
    scf.if %224 {
      %225 = arith.truncf %219 : vector<8x128xf32> to vector<8x128xbf16>
      %c0_94 = arith.constant 0 : index
      %c0_95 = arith.constant 0 : index
      %226 = vector.load %arg5[%c0_94, %c0_95] : memref<128x128xbf16, #tpu.memory_space<vmem>>, vector<128x128xbf16>
      %cst_96 = arith.constant dense<0.000000e+00> : vector<8x128xf32>
      %227 = tpu.matmul %225, %226, %cst_96 {dimension_numbers = #tpu.dot_dimension_numbers<[1], [0], [0], [1], [0, 0, 1, 1], [], []>} : vector<8x128xbf16>, vector<128x128xbf16>, vector<8x128xf32> -> vector<8x128xf32>
      %c0_97 = arith.constant 0 : index
      %c0_98 = arith.constant 0 : index
      %228 = vector.load %arg6[%c0_97, %c0_98] : memref<1x128xf32, #tpu.memory_space<vmem>>, vector<1x128xf32>
      %229 = vector.broadcast %228 : vector<1x128xf32> to vector<8x128xf32>
      %230 = arith.addf %227, %229 : vector<8x128xf32>
      %cst_99 = arith.constant 0.000000e+00 : f32
      %231 = vector.broadcast %cst_99 : f32 to vector<8x128xf32>
      %232 = arith.maximumf %230, %231 : vector<8x128xf32>
      %233 = arith.truncf %232 : vector<8x128xf32> to vector<8x128xbf16>
      %c0_100 = arith.constant 0 : index
      %c0_101 = arith.constant 0 : index
      %234 = vector.load %arg7[%c0_100, %c0_101] : memref<128x128xbf16, #tpu.memory_space<vmem>>, vector<128x128xbf16>
      %cst_102 = arith.constant dense<0.000000e+00> : vector<8x128xf32>
      %235 = tpu.matmul %233, %234, %cst_102 {dimension_numbers = #tpu.dot_dimension_numbers<[1], [0], [0], [1], [0, 0, 1, 1], [], []>} : vector<8x128xbf16>, vector<128x128xbf16>, vector<8x128xf32> -> vector<8x128xf32>
      %c0_103 = arith.constant 0 : index
      %c0_104 = arith.constant 0 : index
      %236 = vector.load %arg8[%c0_103, %c0_104] : memref<1x128xf32, #tpu.memory_space<vmem>>, vector<1x128xf32>
      %237 = vector.broadcast %236 : vector<1x128xf32> to vector<8x128xf32>
      %238 = arith.addf %235, %237 : vector<8x128xf32>
      %c0_105 = arith.constant 0 : index
      %c0_106 = arith.constant 0 : index
      %239 = vector.load %arg9[%c0_105, %c0_106] : memref<8x128xf32, #tpu.memory_space<vmem>>, vector<8x128xf32>
      tpu.vector_store %arg9[%c0_105, %c0_106], %238 {strides = array<i32>} : memref<8x128xf32, #tpu.memory_space<vmem>>, vector<8x128xf32>,
    } else {
    }
    return
  }
  func.func @transform_0(%arg0: i32) -> (i32, i32) {
    %c0_i32 = arith.constant 0 : i32
    %c0_i32_0 = arith.constant 0 : i32
    %c0_i32_1 = arith.constant 0 : i32
    return %c0_i32, %c0_i32_0 : i32, i32
  }
  func.func @transform_1(%arg0: i32) -> (i32, i32, i32) {
    %c0_i32 = arith.constant 0 : i32
    %c0_i32_0 = arith.constant 0 : i32
    %c0_i32_1 = arith.constant 0 : i32
    return %arg0, %c0_i32, %c0_i32_0 : i32, i32, i32
  }
  func.func @transform_2(%arg0: i32) -> (i32, i32, i32) {
    %c0_i32 = arith.constant 0 : i32
    %c0_i32_0 = arith.constant 0 : i32
    %c0_i32_1 = arith.constant 0 : i32
    return %arg0, %c0_i32, %c0_i32_0 : i32, i32, i32
  }
  func.func @transform_3(%arg0: i32) -> (i32, i32, i32) {
    %c0_i32 = arith.constant 0 : i32
    %c0_i32_0 = arith.constant 0 : i32
    %c0_i32_1 = arith.constant 0 : i32
    return %arg0, %c0_i32, %c0_i32_0 : i32, i32, i32
  }
  func.func @transform_4(%arg0: i32) -> (i32, i32) {
    %c0_i32 = arith.constant 0 : i32
    %c0_i32_0 = arith.constant 0 : i32
    %c0_i32_1 = arith.constant 0 : i32
    return %c0_i32, %c0_i32_0 : i32, i32
  }
  func.func @transform_5(%arg0: i32) -> (i32, i32) {
    %c0_i32 = arith.constant 0 : i32
    %c0_i32_0 = arith.constant 0 : i32
    %c0_i32_1 = arith.constant 0 : i32
    return %c0_i32, %c0_i32_0 : i32, i32
  }
  func.func @transform_6(%arg0: i32) -> (i32, i32) {
    %c0_i32 = arith.constant 0 : i32
    %c0_i32_0 = arith.constant 0 : i32
    %c0_i32_1 = arith.constant 0 : i32
    return %c0_i32, %c0_i32_0 : i32, i32
  }
  func.func @transform_7(%arg0: i32) -> (i32, i32) {
    %c0_i32 = arith.constant 0 : i32
    %c0_i32_0 = arith.constant 0 : i32
    %c0_i32_1 = arith.constant 0 : i32
    return %c0_i32, %c0_i32_0 : i32, i32
  }
  func.func @transform_8(%arg0: i32) -> (i32, i32) {
    %c0_i32 = arith.constant 0 : i32
    %c0_i32_0 = arith.constant 0 : i32
    %c0_i32_1 = arith.constant 0 : i32
    return %c0_i32, %c0_i32_0 : i32, i32
  }
}

</mosaic_0001>

<llo_original>
// kernel: tpu_custom_call.1
$region0: #{tpu_custom_call.1}
  #allocation0 [shape = 'u32[]', space=smem, size = 0x4, offset = 0x4, fixed_abs, tag = 'smem constant byte address 0x4 - core index']
  #allocation1 [shape = 'u32[72,128]{1,0:T(1,128)}', space=vmem, size = 0x9000, scoped, tag = 'internal scratch']
  #allocation2 [shape = 'bf16[64,128]{1,0:T(8,128)(2,1)}', space=vmem, size = 0x4000, scoped, tag = 'scratch operand']
  #allocation3 [shape = 'f32[64,512]{1,0:T(8,128)}', space=vmem, size = 0x20000, scoped, tag = 'scratch operand']
  %s0 = inlined_call_operand.hbm [shape: bf16[64,128], index: 0, kind: input, shape index: {}]
  %s1 = inlined_call_operand.hbm [shape: bf16[3,128,512], index: 1, kind: input, shape index: {}]
  %s2 = inlined_call_operand.hbm [shape: bf16[3,128,512], index: 2, kind: input, shape index: {}]
  %s3 = inlined_call_operand.hbm [shape: f32[3,1,512], index: 3, kind: input, shape index: {}]
  %s4 = inlined_call_operand.hbm [shape: bf16[128,128], index: 4, kind: input, shape index: {}]
  %s5 = inlined_call_operand.vmem [shape: f32[1,128], index: 5, kind: input, shape index: {}]
  %s6 = inlined_call_operand.hbm [shape: bf16[128,128], index: 6, kind: input, shape index: {}]
  %s7 = inlined_call_operand.vmem [shape: f32[1,128], index: 7, kind: input, shape index: {}]
  %s8 = inlined_call_operand.hbm [shape: f32[8,128], index: 8, kind: output, shape index: {}]
  %s9 = sld [smem:[#allocation0]]
  $region97: #{tpu_custom_call.1} parent=0
    _
  %s11 = ssub.s32 1, %s9
  %s12 = scalar_select 0, %s11, %s9
  $region1: #{tpu_custom_call.1} parent=0
    #allocation4 [shape = 'u8[16384]{0}', space=vmem, size = 0x4000, scoped, tag = 'input window, operand 0, single buffered']
    #allocation5 [shape = 's32[2]{0}', space=sflag, size = 0x8, scoped, tag = 'scoped memory for tpu_custom_call.1']
    #allocation6 [shape = 's32[2]{0}', space=sflag, size = 0x8, scoped, tag = 'scoped memory for tpu_custom_call.1']
    #allocation7 [shape = 'u8[262144]{0}', space=vmem, size = 0x40000, scoped, tag = 'input window, operand 1']
    #allocation8 [shape = 's32[2]{0}', space=sflag, size = 0x8, scoped, tag = 'scoped memory for tpu_custom_call.1']
    #allocation9 [shape = 'u8[262144]{0}', space=vmem, size = 0x40000, scoped, tag = 'input window, operand 2']
    #allocation10 [shape = 'u8[4096]{0}', space=vmem, size = 0x1000, scoped, tag = 'input window, operand 3']
    #allocation11 [shape = 's32[2]{0}', space=sflag, size = 0x8, scoped, tag = 'scoped memory for tpu_custom_call.1']
    #allocation12 [shape = 'u8[32768]{0}', space=vmem, size = 0x8000, scoped, tag = 'input window, operand 4, single buffered']
    #allocation13 [shape = 'u8[32768]{0}', space=vmem, size = 0x8000, scoped, tag = 'input window, operand 6, single buffered']
    #allocation14 [shape = 's32[1]{0}', space=sflag, size = 0x4, scoped, tag = 'scoped memory for tpu_custom_call.1']
    #allocation15 [shape = 'u8[4096]{0}', space=vmem, size = 0x1000, scoped, tag = 'output window, operand 0, single buffered']
    %13 = vsyncpa [#allocation5], 0
    %14 = vsyncpa [#allocation8], 0
    %s15 = scalar_lea.sflag [#allocation8], 1
    %16 = vsyncpa %s15, 0
    %17 = vsyncpa [#allocation11], 0
    %s18 = scalar_lea.sflag [#allocation11], 1
    %19 = vsyncpa %s18, 0
    %20 = vsyncpa [#allocation14], 0
    %21 = vsyncpa [#allocation6], 0
    loop: start=0, step=1, limit=5
    $region2: #{tpu_custom_call.1} parent=1 // loop_pre_header
      _
    $region3: #{tpu_custom_call.1} parent=1 // loop_header
      %s23 = sphi 0, %s27
      %p24 = scmp.ge.s32.totalorder %s23, 5
      %s31 = sphi 0, %s31
      %s33 = sphi 0, %s31
      %s34 = sphi 0, %s33
      %s48 = sphi 0, %s34
      %s54 = sphi 0, %s56
      %s57 = sphi 0, %s54
      %s58 = sphi 0, %s57
      %s74 = sphi 0, %s58
      %s80 = sphi 0, %s82
      %s83 = sphi 0, %s80
      %s84 = sphi 0, %s83
      %s100 = sphi 0, %s84
      %s106 = sphi 0, %s108
      %s109 = sphi 0, %s106
      %s110 = sphi 0, %s109
      %s126 = sphi 0, %s110
      %s130 = sphi 0, %s130
      %s132 = sphi 0, %s130
      %s133 = sphi 0, %s132
      %s147 = sphi 0, %s133
      %s151 = sphi 0, %s151
      %s153 = sphi 0, %s151
      %s154 = sphi 0, %s153
      %s168 = sphi 0, %s154
      %s172 = sphi 0, %s172
      %s174 = sphi 0, %s172
      %s175 = sphi 0, %s174
      %s189 = sphi 0, %s175
      %s193 = sphi 0, %s193
      %s195 = sphi 0, %s193
      %s196 = sphi 0, %s195
      %s210 = sphi 0, %s196
      %s214 = sphi 0, %s214
      %s216 = sphi 0, %s214
      %s217 = sphi 0, %s216
      %s231 = sphi 0, %s217
    $region4: #{tpu_custom_call.1} parent=1 // loop_header_branch
      %26 = sbr.rel (%p24) target = $region8
    $region5: #{tpu_custom_call.1} parent=1 // loop_body
      %s28 = ssub.s32 %s23, 1
      %s29 = ssub.s32 %s23, 2
      %s30 = sadd.s32 %s23, 1
      %s32 = sadd.s32 %s31, 1
      %p35 = scmp.eq.s32.totalorder %s23, 2
      %p36 = scmp.ne.s32.totalorder %s31, %s33
      %p37 = scmp.eq.s32.totalorder %s23, 0
      %p38 = por %p36, %p37
      %p39 = scmp.ne.s32.totalorder %s31, %s33
      %p40 = scmp.eq.s32.totalorder %s28, 2
      %p41 = por %p39, %p40
      %p42 = scmp.ne.s32.totalorder %s33, %s34
      %p43 = scmp.eq.s32.totalorder %s28, 0
      %p44 = por %p42, %p43
      %p45 = scmp.ne.s32.totalorder %s33, %s34
      %p46 = scmp.eq.s32.totalorder %s29, 2
      %p47 = por %p45, %p46
      %p49 = scmp.ne.s32.totalorder %s34, %s48
      %p50 = scmp.eq.s32.totalorder %s29, 0
      %p51 = por %p49, %p50
      %s52 = ssub.s32 %s23, %s30
      %p53 = scmp.eq.s32.totalorder %s52, 0
      %s55 = sadd.s32 %s54, 1
      %s56 = scalar_select %p53, %s54, %s55
      %p59 = pneg %p53
      %p60 = scmp.eq.s32.totalorder %s23, 2
      %p61 = por %p59, %p60
      %p62 = scmp.ne.s32.totalorder %s54, %s57
      %p63 = scmp.eq.s32.totalorder %s23, 0
      %p64 = por %p62, %p63
      %p65 = scmp.ne.s32.totalorder %s54, %s57
      %p66 = scmp.eq.s32.totalorder %s28, 2
      %p67 = por %p65, %p66
      %p68 = scmp.ne.s32.totalorder %s57, %s58
      %p69 = scmp.eq.s32.totalorder %s28, 0
      %p70 = por %p68, %p69
      %p71 = scmp.ne.s32.totalorder %s57, %s58
      %p72 = scmp.eq.s32.totalorder %s29, 2
      %p73 = por %p71, %p72
      %p75 = scmp.ne.s32.totalorder %s58, %s74
      %p76 = scmp.eq.s32.totalorder %s29, 0
      %p77 = por %p75, %p76
      %s78 = ssub.s32 %s23, %s30
      %p79 = scmp.eq.s32.totalorder %s78, 0
      %s81 = sadd.s32 %s80, 1
      %s82 = scalar_select %p79, %s80, %s81
      %p85 = pneg %p79
      %p86 = scmp.eq.s32.totalorder %s23, 2
      %p87 = por %p85, %p86
      %p88 = scmp.ne.s32.totalorder %s80, %s83
      %p89 = scmp.eq.s32.totalorder %s23, 0
      %p90 = por %p88, %p89
      %p91 = scmp.ne.s32.totalorder %s80, %s83
      %p92 = scmp.eq.s32.totalorder %s28, 2
      %p93 = por %p91, %p92
      %p94 = scmp.ne.s32.totalorder %s83, %s84
      %p95 = scmp.eq.s32.totalorder %s28, 0
      %p96 = por %p94, %p95
      %p97 = scmp.ne.s32.totalorder %s83, %s84
      %p98 = scmp.eq.s32.totalorder %s29, 2
      %p99 = por %p97, %p98
      %p101 = scmp.ne.s32.totalorder %s84, %s100
      %p102 = scmp.eq.s32.totalorder %s29, 0
      %p103 = por %p101, %p102
      %s104 = ssub.s32 %s23, %s30
      %p105 = scmp.eq.s32.totalorder %s104, 0
      %s107 = sadd.s32 %s106, 1
      %s108 = scalar_select %p105, %s106, %s107
      %p111 = pneg %p105
      %p112 = scmp.eq.s32.totalorder %s23, 2
      %p113 = por %p111, %p112
      %p114 = scmp.ne.s32.totalorder %s106, %s109
      %p115 = scmp.eq.s32.totalorder %s23, 0
      %p116 = por %p114, %p115
      %p117 = scmp.ne.s32.totalorder %s106, %s109
      %p118 = scmp.eq.s32.totalorder %s28, 2
      %p119 = por %p117, %p118
      %p120 = scmp.ne.s32.totalorder %s109, %s110
      %p121 = scmp.eq.s32.totalorder %s28, 0
      %p122 = por %p120, %p121
      %p123 = scmp.ne.s32.totalorder %s109, %s110
      %p124 = scmp.eq.s32.totalorder %s29, 2
      %p125 = por %p123, %p124
      %p127 = scmp.ne.s32.totalorder %s110, %s126
      %p128 = scmp.eq.s32.totalorder %s29, 0
      %p129 = por %p127, %p128
      %s131 = sadd.s32 %s130, 1
      %p134 = scmp.eq.s32.totalorder %s23, 2
      %p135 = scmp.ne.s32.totalorder %s130, %s132
      %p136 = scmp.eq.s32.totalorder %s23, 0
      %p137 = por %p135, %p136
      %p138 = scmp.ne.s32.totalorder %s130, %s132
      %p139 = scmp.eq.s32.totalorder %s28, 2
      %p140 = por %p138, %p139
      %p141 = scmp.ne.s32.totalorder %s132, %s133
      %p142 = scmp.eq.s32.totalorder %s28, 0
      %p143 = por %p141, %p142
      %p144 = scmp.ne.s32.totalorder %s132, %s133
      %p145 = scmp.eq.s32.totalorder %s29, 2
      %p146 = por %p144, %p145
      %p148 = scmp.ne.s32.totalorder %s133, %s147
      %p149 = scmp.eq.s32.totalorder %s29, 0
      %p150 = por %p148, %p149
      %s152 = sadd.s32 %s151, 1
      %p155 = scmp.eq.s32.totalorder %s23, 2
      %p156 = scmp.ne.s32.totalorder %s151, %s153
      %p157 = scmp.eq.s32.totalorder %s23, 0
      %p158 = por %p156, %p157
      %p159 = scmp.ne.s32.totalorder %s151, %s153
      %p160 = scmp.eq.s32.totalorder %s28, 2
      %p161 = por %p159, %p160
      %p162 = scmp.ne.s32.totalorder %s153, %s154
      %p163 = scmp.eq.s32.totalorder %s28, 0
      %p164 = por %p162, %p163
      %p165 = scmp.ne.s32.totalorder %s153, %s154
      %p166 = scmp.eq.s32.totalorder %s29, 2
      %p167 = por %p165, %p166
      %p169 = scmp.ne.s32.totalorder %s154, %s168
      %p170 = scmp.eq.s32.totalorder %s29, 0
      %p171 = por %p169, %p170
      %s173 = sadd.s32 %s172, 1
      %p176 = scmp.eq.s32.totalorder %s23, 2
      %p177 = scmp.ne.s32.totalorder %s172, %s174
      %p178 = scmp.eq.s32.totalorder %s23, 0
      %p179 = por %p177, %p178
      %p180 = scmp.ne.s32.totalorder %s172, %s174
      %p181 = scmp.eq.s32.totalorder %s28, 2
      %p182 = por %p180, %p181
      %p183 = scmp.ne.s32.totalorder %s174, %s175
      %p184 = scmp.eq.s32.totalorder %s28, 0
      %p185 = por %p183, %p184
      %p186 = scmp.ne.s32.totalorder %s174, %s175
      %p187 = scmp.eq.s32.totalorder %s29, 2
      %p188 = por %p186, %p187
      %p190 = scmp.ne.s32.totalorder %s175, %s189
      %p191 = scmp.eq.s32.totalorder %s29, 0
      %p192 = por %p190, %p191
      %s194 = sadd.s32 %s193, 1
      %p197 = scmp.eq.s32.totalorder %s23, 2
      %p198 = scmp.ne.s32.totalorder %s193, %s195
      %p199 = scmp.eq.s32.totalorder %s23, 0
      %p200 = por %p198, %p199
      %p201 = scmp.ne.s32.totalorder %s193, %s195
      %p202 = scmp.eq.s32.totalorder %s28, 2
      %p203 = por %p201, %p202
      %p204 = scmp.ne.s32.totalorder %s195, %s196
      %p205 = scmp.eq.s32.totalorder %s28, 0
      %p206 = por %p204, %p205
      %p207 = scmp.ne.s32.totalorder %s195, %s196
      %p208 = scmp.eq.s32.totalorder %s29, 2
      %p209 = por %p207, %p208
      %p211 = scmp.ne.s32.totalorder %s196, %s210
      %p212 = scmp.eq.s32.totalorder %s29, 0
      %p213 = por %p211, %p212
      %s215 = sadd.s32 %s214, 1
      %p218 = scmp.eq.s32.totalorder %s23, 2
      %p219 = scmp.ne.s32.totalorder %s214, %s216
      %p220 = scmp.eq.s32.totalorder %s23, 0
      %p221 = por %p219, %p220
      %p222 = scmp.ne.s32.totalorder %s214, %s216
      %p223 = scmp.eq.s32.totalorder %s28, 2
      %p224 = por %p222, %p223
      %p225 = scmp.ne.s32.totalorder %s216, %s217
      %p226 = scmp.eq.s32.totalorder %s28, 0
      %p227 = por %p225, %p226
      %p228 = scmp.ne.s32.totalorder %s216, %s217
      %p229 = scmp.eq.s32.totalorder %s29, 2
      %p230 = por %p228, %p229
      %p232 = scmp.ne.s32.totalorder %s217, %s231
      %p233 = scmp.eq.s32.totalorder %s29, 0
      %p234 = por %p232, %p233
      %p235 = scmp.le.s32.totalorder 1, %s23
      %p236 = scmp.lt.s32.totalorder %s23, 4
      %p237 = pnand %p235, %p236
      %p238 = pneg %p237
      // Predicated region
      $region9: #{tpu_custom_call.1} parent=5 // pred_check
        _
      $region10: #{tpu_custom_call.1} parent=5 // pred_check_branch
        %240 = sbr.rel (%p237) target = $region12
      $region11: #{tpu_custom_call.1} parent=5 // pred_region
        %s241 = ssub.s32 %s23, 1
        // Predicated region
        $region13: #{tpu_custom_call.1} parent=11 // pred_check
          %p242 = pneg %p44
        $region14: #{tpu_custom_call.1} parent=11 // pred_check_branch
          %244 = sbr.rel (%p242) target = $region16
        $region15: #{tpu_custom_call.1} parent=11 // pred_region
          %246 = vsyncadd [#allocation5], 0
          %s247 = sshll.u32 %s0, 4
          %s248 = int_to_ptr.hbm [resolvable:$true] %s247
          %s249 = sshll.u32 [#allocation4], 4
          %s250 = int_to_ptr.vmem [resolvable:$true] %s249
          %255 = dma.hbm_to_vmem [thread:$0]  %s248, 512, %s250, [#allocation5], 64, 64, 4
        $region16: #{tpu_custom_call.1} parent=11 // pred_fallthru
          _
        // Predicated region
        $region17: #{tpu_custom_call.1} parent=11 // pred_check
          %p256 = pneg %p143
        $region18: #{tpu_custom_call.1} parent=11 // pred_check_branch
          %258 = sbr.rel (%p256) target = $region20
        $region19: #{tpu_custom_call.1} parent=11 // pred_region
          %260 = vsyncadd [#allocation11], 0
          %s261 = sshll.u32 %s4, 4
          %s262 = int_to_ptr.hbm [resolvable:$true] %s261
          %s263 = sshll.u32 [#allocation12], 4
          %s264 = int_to_ptr.vmem [resolvable:$true] %s263
          %269 = dma.hbm_to_vmem [thread:$0]  %s262, 1024, %s264, [#allocation11], 64, 64, 4
        $region20: #{tpu_custom_call.1} parent=11 // pred_fallthru
          _
        // Predicated region
        $region21: #{tpu_custom_call.1} parent=11 // pred_check
          %p270 = pneg %p164
        $region22: #{tpu_custom_call.1} parent=11 // pred_check_branch
          %272 = sbr.rel (%p270) target = $region24
        $region23: #{tpu_custom_call.1} parent=11 // pred_region
          _
        $region24: #{tpu_custom_call.1} parent=11 // pred_fallthru
          _
        // Predicated region
        $region25: #{tpu_custom_call.1} parent=11 // pred_check
          %p273 = pneg %p185
        $region26: #{tpu_custom_call.1} parent=11 // pred_check_branch
          %275 = sbr.rel (%p273) target = $region28
        $region27: #{tpu_custom_call.1} parent=11 // pred_region
          %277 = vsyncadd [#allocation14], 0
          %s278 = sshll.u32 %s6, 4
          %s279 = int_to_ptr.hbm [resolvable:$true] %s278
          %s280 = sshll.u32 [#allocation13], 4
          %s281 = int_to_ptr.vmem [resolvable:$true] %s280
          %286 = dma.hbm_to_vmem [thread:$0]  %s279, 1024, %s281, [#allocation14], 64, 64, 4
        $region28: #{tpu_custom_call.1} parent=11 // pred_fallthru
          _
        // Predicated region
        $region29: #{tpu_custom_call.1} parent=11 // pred_check
          %p287 = pneg %p206
        $region30: #{tpu_custom_call.1} parent=11 // pred_check_branch
          %289 = sbr.rel (%p287) target = $region32
        $region31: #{tpu_custom_call.1} parent=11 // pred_region
          _
        $region32: #{tpu_custom_call.1} parent=11 // pred_fallthru
          _
      $region12: #{tpu_custom_call.1} parent=5 // pred_fallthru
        _
      %p290 = scmp.lt.s32.totalorder %s23, 3
      // Predicated region
      $region33: #{tpu_custom_call.1} parent=5 // pred_check
        %p291 = pneg %p290
      $region34: #{tpu_custom_call.1} parent=5 // pred_check_branch
        %293 = sbr.rel (%p291) target = $region36
      $region35: #{tpu_custom_call.1} parent=5 // pred_region
        // Predicated region
        $region37: #{tpu_custom_call.1} parent=35 // pred_check
          %p294 = pneg %p64
        $region38: #{tpu_custom_call.1} parent=35 // pred_check_branch
          %296 = sbr.rel (%p294) target = $region40
        $region39: #{tpu_custom_call.1} parent=35 // pred_region
          %s297 = sand.u32 %s23, 1
          %s298 = scalar_lea.sflag [#allocation8], %s297
          %s299 = sand.u32 %s54, 1
          %s300 = smul.addr %s299, 256
          %s301 = scalar_lea.vmem [#allocation7], %s300
          %303 = vsyncadd %s298, 0
          %s304 = smul.addr %s23, 64
          %s305 = smul.addr %s304, 4
          %s306 = scalar_lea.hbm %s1, %s305
          %s307 = sshll.u32 %s306, 4
          %s308 = int_to_ptr.hbm [resolvable:$true] %s307
          %s309 = sshll.u32 %s301, 4
          %s310 = int_to_ptr.vmem [resolvable:$true] %s309
          %315 = dma.hbm_to_vmem [thread:$0]  %s308, 4096, %s310, %s298, 256, 256, 16
        $region40: #{tpu_custom_call.1} parent=35 // pred_fallthru
          _
        // Predicated region
        $region41: #{tpu_custom_call.1} parent=35 // pred_check
          %p316 = pneg %p90
        $region42: #{tpu_custom_call.1} parent=35 // pred_check_branch
          %318 = sbr.rel (%p316) target = $region44
        $region43: #{tpu_custom_call.1} parent=35 // pred_region
          %s319 = sand.u32 %s23, 1
          %s320 = scalar_lea.sflag [#allocation8], %s319
          %s321 = sand.u32 %s80, 1
          %s322 = smul.addr %s321, 256
          %s323 = scalar_lea.vmem [#allocation9], %s322
          %325 = vsyncadd %s320, 0
          %s326 = smul.addr %s23, 64
          %s327 = smul.addr %s326, 4
          %s328 = scalar_lea.hbm %s2, %s327
          %s329 = sshll.u32 %s328, 4
          %s330 = int_to_ptr.hbm [resolvable:$true] %s329
          %s331 = sshll.u32 %s323, 4
          %s332 = int_to_ptr.vmem [resolvable:$true] %s331
          %337 = dma.hbm_to_vmem [thread:$0]  %s330, 4096, %s332, %s320, 256, 256, 16
        $region44: #{tpu_custom_call.1} parent=35 // pred_fallthru
          _
        // Predicated region
        $region45: #{tpu_custom_call.1} parent=35 // pred_check
          %p338 = pneg %p116
        $region46: #{tpu_custom_call.1} parent=35 // pred_check_branch
          %340 = sbr.rel (%p338) target = $region48
        $region47: #{tpu_custom_call.1} parent=35 // pred_region
          %s341 = sand.u32 %s23, 1
          %s342 = scalar_lea.sflag [#allocation11], %s341
          %s343 = sand.u32 %s106, 1
          %s344 = smul.addr %s343, 4
          %s345 = scalar_lea.vmem [#allocation10], %s344
          %347 = vsyncadd %s342, 0
          %s348 = smul.addr %s23, 4
          %s349 = scalar_lea.hbm %s3, %s348
          %s351 = sshll.u32 %s349, 4
          %s352 = int_to_ptr.hbm [resolvable:$true] %s351
          %s353 = sshll.u32 %s345, 4
          %s354 = int_to_ptr.vmem [resolvable:$true] %s353
          %356 = dma.hbm_to_vmem [thread:$0]  %s352, 64, %s354, %s342
        $region48: #{tpu_custom_call.1} parent=35 // pred_fallthru
          _
      $region36: #{tpu_custom_call.1} parent=5 // pred_fallthru
        _
      %p357 = scmp.le.s32.totalorder 1, %s23
      %p358 = scmp.lt.s32.totalorder %s23, 4
      %p359 = pnand %p357, %p358
      %p360 = pneg %p359
      // Predicated region
      $region49: #{tpu_custom_call.1} parent=5 // pred_check
        _
      $region50: #{tpu_custom_call.1} parent=5 // pred_check_branch
        %362 = sbr.rel (%p359) target = $region52
      $region51: #{tpu_custom_call.1} parent=5 // pred_region
        %s363 = ssub.s32 %s23, 1
        // Predicated region
        $region53: #{tpu_custom_call.1} parent=51 // pred_check
          %p364 = pneg %p44
        $region54: #{tpu_custom_call.1} parent=51 // pred_check_branch
          %366 = sbr.rel (%p364) target = $region56
        $region55: #{tpu_custom_call.1} parent=51 // pred_region
          %368 = dma.done [#allocation5], 512
        $region56: #{tpu_custom_call.1} parent=51 // pred_fallthru
          _
        %s369 = sand.u32 %s28, 1
        %s370 = scalar_lea.sflag [#allocation8], %s369
        %s371 = sand.u32 %s57, 1
        %s372 = smul.addr %s371, 256
        %s373 = scalar_lea.vmem [#allocation7], %s372
        // Predicated region
        $region57: #{tpu_custom_call.1} parent=51 // pred_check
          %p374 = pneg %p70
        $region58: #{tpu_custom_call.1} parent=51 // pred_check_branch
          %376 = sbr.rel (%p374) target = $region60
        $region59: #{tpu_custom_call.1} parent=51 // pred_region
          %378 = dma.done %s370, 4096
        $region60: #{tpu_custom_call.1} parent=51 // pred_fallthru
          _
        %s379 = sand.u32 %s28, 1
        %s380 = scalar_lea.sflag [#allocation8], %s379
        %s381 = sand.u32 %s83, 1
        %s382 = smul.addr %s381, 256
        %s383 = scalar_lea.vmem [#allocation9], %s382
        // Predicated region
        $region61: #{tpu_custom_call.1} parent=51 // pred_check
          %p384 = pneg %p96
        $region62: #{tpu_custom_call.1} parent=51 // pred_check_branch
          %386 = sbr.rel (%p384) target = $region64
        $region63: #{tpu_custom_call.1} parent=51 // pred_region
          %388 = dma.done %s380, 4096
        $region64: #{tpu_custom_call.1} parent=51 // pred_fallthru
          _
        %s389 = sand.u32 %s28, 1
        %s390 = scalar_lea.sflag [#allocation11], %s389
        %s391 = sand.u32 %s109, 1
        %s392 = smul.addr %s391, 4
        %s393 = scalar_lea.vmem [#allocation10], %s392
        // Predicated region
        $region65: #{tpu_custom_call.1} parent=51 // pred_check
          %p394 = pneg %p122
        $region66: #{tpu_custom_call.1} parent=51 // pred_check_branch
          %396 = sbr.rel (%p394) target = $region68
        $region67: #{tpu_custom_call.1} parent=51 // pred_region
          %398 = dma.done %s390, 64
        $region68: #{tpu_custom_call.1} parent=51 // pred_fallthru
          _
        // Predicated region
        $region69: #{tpu_custom_call.1} parent=51 // pred_check
          %p399 = pneg %p143
        $region70: #{tpu_custom_call.1} parent=51 // pred_check_branch
          %401 = sbr.rel (%p399) target = $region72
        $region71: #{tpu_custom_call.1} parent=51 // pred_region
          %403 = dma.done [#allocation11], 1024
        $region72: #{tpu_custom_call.1} parent=51 // pred_fallthru
          _
        // Predicated region
        $region73: #{tpu_custom_call.1} parent=51 // pred_check
          %p404 = pneg %p185
        $region74: #{tpu_custom_call.1} parent=51 // pred_check_branch
          %406 = sbr.rel (%p404) target = $region76
        $region75: #{tpu_custom_call.1} parent=51 // pred_region
          %408 = dma.done [#allocation14], 1024
        $region76: #{tpu_custom_call.1} parent=51 // pred_fallthru
          _
        %p409 = pneg %p44
        %p410 = pneg %p41
        %s411 = sand.u32 %s28, 1
        %s412 = scalar_lea.sflag [#allocation8], %s411
        %s413 = sand.u32 %s57, 1
        %s414 = smul.addr %s413, 256
        %s415 = scalar_lea.vmem [#allocation7], %s414
        %p416 = pneg %p70
        %p417 = pneg %p67
        %s418 = sand.u32 %s28, 1
        %s419 = scalar_lea.sflag [#allocation8], %s418
        %s420 = sand.u32 %s83, 1
        %s421 = smul.addr %s420, 256
        %s422 = scalar_lea.vmem [#allocation9], %s421
        %p423 = pneg %p96
        %p424 = pneg %p93
        %s425 = sand.u32 %s28, 1
        %s426 = scalar_lea.sflag [#allocation11], %s425
        %s427 = sand.u32 %s109, 1
        %s428 = smul.addr %s427, 4
        %s429 = scalar_lea.vmem [#allocation10], %s428
        %p430 = pneg %p122
        %p431 = pneg %p119
        %p432 = pneg %p143
        %p433 = pneg %p140
        %p434 = pneg %p164
        %p435 = pneg %p161
        %p436 = pneg %p185
        %p437 = pneg %p182
        %p438 = pneg %p206
        %p439 = pneg %p203
        %p440 = pneg %p227
        %p441 = pneg %p224
        %p443 = scmp.eq.s32.totalorder %s28, 0
        // Predicated region
        $region77: #{tpu_custom_call.1} parent=51 // pred_check
          %p444 = pneg %p443
        $region78: #{tpu_custom_call.1} parent=51 // pred_check_branch
          %446 = sbr.rel (%p444) target = $region80
        $region79: #{tpu_custom_call.1} parent=51 // pred_region
          %v447 = vld [vmem:[#allocation4] sm:$0xf]
          %v448 = vld [vmem:[#allocation4 + $0x4] sm:$0xf]
          %v449 = vld [vmem:[#allocation4 + $0x8] sm:$0xf]
          %v450 = vld [vmem:[#allocation4 + $0xc] sm:$0xf]
          %v451 = vld [vmem:[#allocation4 + $0x10] sm:$0xf]
          %v452 = vld [vmem:[#allocation4 + $0x14] sm:$0xf]
          %v453 = vld [vmem:[#allocation4 + $0x18] sm:$0xf]
          %v454 = vld [vmem:[#allocation4 + $0x1c] sm:$0xf]
          %455 = vst [vmem:[#allocation2] sm:$0xf] %v447
          %456 = vst [vmem:[#allocation2 + $0x4] sm:$0xf] %v448
          %457 = vst [vmem:[#allocation2 + $0x8] sm:$0xf] %v449
          %458 = vst [vmem:[#allocation2 + $0xc] sm:$0xf] %v450
          %459 = vst [vmem:[#allocation2 + $0x10] sm:$0xf] %v451
          %460 = vst [vmem:[#allocation2 + $0x14] sm:$0xf] %v452
          %461 = vst [vmem:[#allocation2 + $0x18] sm:$0xf] %v453
          %462 = vst [vmem:[#allocation2 + $0x1c] sm:$0xf] %v454
        $region80: #{tpu_custom_call.1} parent=51 // pred_fallthru
          _
        %v463 = vld [vmem:[#allocation2] sm:$0xf]
        %v464 = vld [vmem:[#allocation2 + $0x4] sm:$0xf]
        %v465 = vld [vmem:[#allocation2 + $0x8] sm:$0xf]
        %v466 = vld [vmem:[#allocation2 + $0xc] sm:$0xf]
        %v467 = vld [vmem:[#allocation2 + $0x10] sm:$0xf]
        %v468 = vld [vmem:[#allocation2 + $0x14] sm:$0xf]
        %v469 = vld [vmem:[#allocation2 + $0x18] sm:$0xf]
        %v470 = vld [vmem:[#allocation2 + $0x1c] sm:$0xf]
        %v471 = vld [vmem:[%s373] sm:$0xff]
        %v472 = vld [vmem:[%s373 + $0x8] sm:$0xff]
        %v473 = vld [vmem:[%s373 + $0x10] sm:$0xff]
        %v474 = vld [vmem:[%s373 + $0x18] sm:$0xff]
        %v475 = vld [vmem:[%s373 + $0x20] sm:$0xff]
        %v476 = vld [vmem:[%s373 + $0x28] sm:$0xff]
        %v477 = vld [vmem:[%s373 + $0x30] sm:$0xff]
        %v478 = vld [vmem:[%s373 + $0x38] sm:$0xff]
        %v479 = vld [vmem:[%s373 + $0x40] sm:$0xff]
        %v480 = vld [vmem:[%s373 + $0x48] sm:$0xff]
        %v481 = vld [vmem:[%s373 + $0x50] sm:$0xff]
        %v482 = vld [vmem:[%s373 + $0x58] sm:$0xff]
        %v483 = vld [vmem:[%s373 + $0x60] sm:$0xff]
        %v484 = vld [vmem:[%s373 + $0x68] sm:$0xff]
        %v485 = vld [vmem:[%s373 + $0x70] sm:$0xff]
        %v486 = vld [vmem:[%s373 + $0x78] sm:$0xff]
        %v487 = vld [vmem:[%s373 + $0x80] sm:$0xff]
        %v488 = vld [vmem:[%s373 + $0x88] sm:$0xff]
        %v489 = vld [vmem:[%s373 + $0x90] sm:$0xff]
        %v490 = vld [vmem:[%s373 + $0x98] sm:$0xff]
        %v491 = vld [vmem:[%s373 + $0xa0] sm:$0xff]
        %v492 = vld [vmem:[%s373 + $0xa8] sm:$0xff]
        %v493 = vld [vmem:[%s373 + $0xb0] sm:$0xff]
        %v494 = vld [vmem:[%s373 + $0xb8] sm:$0xff]
        %v495 = vld [vmem:[%s373 + $0xc0] sm:$0xff]
        %v496 = vld [vmem:[%s373 + $0xc8] sm:$0xff]
        %v497 = vld [vmem:[%s373 + $0xd0] sm:$0xff]
        %v498 = vld [vmem:[%s373 + $0xd8] sm:$0xff]
        %v499 = vld [vmem:[%s373 + $0xe0] sm:$0xff]
        %v500 = vld [vmem:[%s373 + $0xe8] sm:$0xff]
        %v501 = vld [vmem:[%s373 + $0xf0] sm:$0xff]
        %v502 = vld [vmem:[%s373 + $0xf8] sm:$0xff]
        %v503 = vld [vmem:[%s393] sm:$0xf]
        %v505 = vperm.slane %v503, 0
        %v506 = vperm.slane %v503, 1
        %v507 = vperm.slane %v503, 2
        %v508 = vperm.slane %v503, 3
        %v521 = vunpack.c.l.b16 %v463
        %v522 = vunpack.c.l.b16 %v464
        %v523 = vunpack.c.l.b16 %v465
        %v524 = vunpack.c.l.b16 %v466
        %v525 = vunpack.c.l.b16 %v467
        %v526 = vunpack.c.l.b16 %v468
        %v527 = vunpack.c.l.b16 %v469
        %v528 = vunpack.c.l.b16 %v470
        %v529 = vpack.c.b16 %v522, %v521
        %v530 = vpack.c.b16 %v524, %v523
        %v531 = vpack.c.b16 %v526, %v525
        %v532 = vpack.c.b16 %v528, %v527
        %v569 = vunpack.c.l.b16 %v471
        %v570 = vunpack.c.h.b16 %v471
        %v571 = vunpack.c.l.b16 %v472
        %v572 = vunpack.c.h.b16 %v472
        %v573 = vunpack.c.l.b16 %v473
        %v574 = vunpack.c.h.b16 %v473
        %v575 = vunpack.c.l.b16 %v474
        %v576 = vunpack.c.h.b16 %v474
        %v577 = vunpack.c.l.b16 %v475
        %v578 = vunpack.c.h.b16 %v475
        %v579 = vunpack.c.l.b16 %v476
        %v580 = vunpack.c.h.b16 %v476
        %v581 = vunpack.c.l.b16 %v477
        %v582 = vunpack.c.h.b16 %v477
        %v583 = vunpack.c.l.b16 %v478
        %v584 = vunpack.c.h.b16 %v478
        %v585 = vunpack.c.l.b16 %v479
        %v586 = vunpack.c.h.b16 %v479
        %v587 = vunpack.c.l.b16 %v480
        %v588 = vunpack.c.h.b16 %v480
        %v589 = vunpack.c.l.b16 %v481
        %v590 = vunpack.c.h.b16 %v481
        %v591 = vunpack.c.l.b16 %v482
        %v592 = vunpack.c.h.b16 %v482
        %v593 = vunpack.c.l.b16 %v483
        %v594 = vunpack.c.h.b16 %v483
        %v595 = vunpack.c.l.b16 %v484
        %v596 = vunpack.c.h.b16 %v484
        %v597 = vunpack.c.l.b16 %v485
        %v598 = vunpack.c.h.b16 %v485
        %v599 = vunpack.c.l.b16 %v486
        %v600 = vunpack.c.h.b16 %v486
        %v601 = vunpack.c.l.b16 %v487
        %v602 = vunpack.c.h.b16 %v487
        %v603 = vunpack.c.l.b16 %v488
        %v604 = vunpack.c.h.b16 %v488
        %v605 = vunpack.c.l.b16 %v489
        %v606 = vunpack.c.h.b16 %v489
        %v607 = vunpack.c.l.b16 %v490
        %v608 = vunpack.c.h.b16 %v490
        %v609 = vunpack.c.l.b16 %v491
        %v610 = vunpack.c.h.b16 %v491
        %v611 = vunpack.c.l.b16 %v492
        %v612 = vunpack.c.h.b16 %v492
        %v613 = vunpack.c.l.b16 %v493
        %v614 = vunpack.c.h.b16 %v493
        %v615 = vunpack.c.l.b16 %v494
        %v616 = vunpack.c.h.b16 %v494
        %v617 = vunpack.c.l.b16 %v495
        %v618 = vunpack.c.h.b16 %v495
        %v619 = vunpack.c.l.b16 %v496
        %v620 = vunpack.c.h.b16 %v496
        %v621 = vunpack.c.l.b16 %v497
        %v622 = vunpack.c.h.b16 %v497
        %v623 = vunpack.c.l.b16 %v498
        %v624 = vunpack.c.h.b16 %v498
        %v625 = vunpack.c.l.b16 %v499
        %v626 = vunpack.c.h.b16 %v499
        %v627 = vunpack.c.l.b16 %v500
        %v628 = vunpack.c.h.b16 %v500
        %v629 = vunpack.c.l.b16 %v501
        %v630 = vunpack.c.h.b16 %v501
        %v631 = vunpack.c.l.b16 %v502
        %v632 = vunpack.c.h.b16 %v502
        %v633 = vpack.c.b16 %v573, %v569
        %v634 = vpack.c.b16 %v574, %v570
        %v635 = vpack.c.b16 %v575, %v571
        %v636 = vpack.c.b16 %v576, %v572
        %v637 = vpack.c.b16 %v581, %v577
        %v638 = vpack.c.b16 %v582, %v578
        %v639 = vpack.c.b16 %v583, %v579
        %v640 = vpack.c.b16 %v584, %v580
        %v641 = vpack.c.b16 %v589, %v585
        %v642 = vpack.c.b16 %v590, %v586
        %v643 = vpack.c.b16 %v591, %v587
        %v644 = vpack.c.b16 %v592, %v588
        %v645 = vpack.c.b16 %v597, %v593
        %v646 = vpack.c.b16 %v598, %v594
        %v647 = vpack.c.b16 %v599, %v595
        %v648 = vpack.c.b16 %v600, %v596
        %v649 = vpack.c.b16 %v605, %v601
        %v650 = vpack.c.b16 %v606, %v602
        %v651 = vpack.c.b16 %v607, %v603
        %v652 = vpack.c.b16 %v608, %v604
        %v653 = vpack.c.b16 %v613, %v609
        %v654 = vpack.c.b16 %v614, %v610
        %v655 = vpack.c.b16 %v615, %v611
        %v656 = vpack.c.b16 %v616, %v612
        %v657 = vpack.c.b16 %v621, %v617
        %v658 = vpack.c.b16 %v622, %v618
        %v659 = vpack.c.b16 %v623, %v619
        %v660 = vpack.c.b16 %v624, %v620
        %v661 = vpack.c.b16 %v629, %v625
        %v662 = vpack.c.b16 %v630, %v626
        %v663 = vpack.c.b16 %v631, %v627
        %v664 = vpack.c.b16 %v632, %v628
        %697 = vmatpush.bf16.msra.mxu0 %v661
        %698 = vmatpush.bf16.msra.mxu0 %v657
        %699 = vmatpush.bf16.msra.mxu0 %v653
        %700 = vmatpush.bf16.msra.mxu0 %v649
        %701 = vmatpush.bf16.msra.mxu0 %v645
        %702 = vmatpush.bf16.msra.mxu0 %v641
        %703 = vmatpush.bf16.msra.mxu0 %v637
        %704 = vmatpush.bf16.msra.mxu0 %v633
        %705 = vmatmul.bf16.gmra.mxu0 %v529
        %v706 = vpop.f32.mrf.mxu0
        %v707 = vadd.f32 %v505, %v706
        %v708 = vpop.f32.mrf.mxu0
        %v709 = vadd.f32 %v505, %v708
        %710 = vmatmul.bf16.gmra.mxu0 %v530
        %v711 = vpop.f32.mrf.mxu0
        %v712 = vadd.f32 %v505, %v711
        %v713 = vpop.f32.mrf.mxu0
        %v714 = vadd.f32 %v505, %v713
        %715 = vmatmul.bf16.gmra.mxu0 %v531
        %v716 = vpop.f32.mrf.mxu0
        %v717 = vadd.f32 %v505, %v716
        %v718 = vpop.f32.mrf.mxu0
        %v719 = vadd.f32 %v505, %v718
        %720 = vmatmul.bf16.gmra.mxu0 %v532
        %v721 = vpop.f32.mrf.mxu0
        %v722 = vadd.f32 %v505, %v721
        %v723 = vpop.f32.mrf.mxu0
        %v724 = vadd.f32 %v505, %v723
        %725 = vdwg.mxu0
        %726 = vmatpush.bf16.msra.mxu0 %v662
        %727 = vmatpush.bf16.msra.mxu0 %v658
        %728 = vmatpush.bf16.msra.mxu0 %v654
        %729 = vmatpush.bf16.msra.mxu0 %v650
        %730 = vmatpush.bf16.msra.mxu0 %v646
        %731 = vmatpush.bf16.msra.mxu0 %v642
        %732 = vmatpush.bf16.msra.mxu0 %v638
        %733 = vmatpush.bf16.msra.mxu0 %v634
        %734 = vmatmul.bf16.gmra.mxu0 %v529
        %v735 = vpop.f32.mrf.mxu0
        %v736 = vadd.f32 %v506, %v735
        %v737 = vpop.f32.mrf.mxu0
        %v738 = vadd.f32 %v506, %v737
        %739 = vmatmul.bf16.gmra.mxu0 %v530
        %v740 = vpop.f32.mrf.mxu0
        %v741 = vadd.f32 %v506, %v740
        %v742 = vpop.f32.mrf.mxu0
        %v743 = vadd.f32 %v506, %v742
        %744 = vmatmul.bf16.gmra.mxu0 %v531
        %v745 = vpop.f32.mrf.mxu0
        %v746 = vadd.f32 %v506, %v745
        %v747 = vpop.f32.mrf.mxu0
        %v748 = vadd.f32 %v506, %v747
        %749 = vmatmul.bf16.gmra.mxu0 %v532
        %v750 = vpop.f32.mrf.mxu0
        %v751 = vadd.f32 %v506, %v750
        %v752 = vpop.f32.mrf.mxu0
        %v753 = vadd.f32 %v506, %v752
        %754 = vdwg.mxu0
        %755 = vmatpush.bf16.msra.mxu0 %v663
        %756 = vmatpush.bf16.msra.mxu0 %v659
        %757 = vmatpush.bf16.msra.mxu0 %v655
        %758 = vmatpush.bf16.msra.mxu0 %v651
        %759 = vmatpush.bf16.msra.mxu0 %v647
        %760 = vmatpush.bf16.msra.mxu0 %v643
        %761 = vmatpush.bf16.msra.mxu0 %v639
        %762 = vmatpush.bf16.msra.mxu0 %v635
        %763 = vmatmul.bf16.gmra.mxu0 %v529
        %v764 = vpop.f32.mrf.mxu0
        %v765 = vadd.f32 %v507, %v764
        %v766 = vpop.f32.mrf.mxu0
        %v767 = vadd.f32 %v507, %v766
        %768 = vmatmul.bf16.gmra.mxu0 %v530
        %v769 = vpop.f32.mrf.mxu0
        %v770 = vadd.f32 %v507, %v769
        %v771 = vpop.f32.mrf.mxu0
        %v772 = vadd.f32 %v507, %v771
        %773 = vmatmul.bf16.gmra.mxu0 %v531
        %v774 = vpop.f32.mrf.mxu0
        %v775 = vadd.f32 %v507, %v774
        %v776 = vpop.f32.mrf.mxu0
        %v777 = vadd.f32 %v507, %v776
        %778 = vmatmul.bf16.gmra.mxu0 %v532
        %v779 = vpop.f32.mrf.mxu0
        %v780 = vadd.f32 %v507, %v779
        %v781 = vpop.f32.mrf.mxu0
        %v782 = vadd.f32 %v507, %v781
        %783 = vdwg.mxu0
        %784 = vmatpush.bf16.msra.mxu0 %v664
        %785 = vmatpush.bf16.msra.mxu0 %v660
        %786 = vmatpush.bf16.msra.mxu0 %v656
        %787 = vmatpush.bf16.msra.mxu0 %v652
        %788 = vmatpush.bf16.msra.mxu0 %v648
        %789 = vmatpush.bf16.msra.mxu0 %v644
        %790 = vmatpush.bf16.msra.mxu0 %v640
        %791 = vmatpush.bf16.msra.mxu0 %v636
        %792 = vmatmul.bf16.gmra.mxu0 %v529
        %v793 = vpop.f32.mrf.mxu0
        %v794 = vadd.f32 %v508, %v793
        %v795 = vpop.f32.mrf.mxu0
        %v796 = vadd.f32 %v508, %v795
        %797 = vmatmul.bf16.gmra.mxu0 %v530
        %v798 = vpop.f32.mrf.mxu0
        %v799 = vadd.f32 %v508, %v798
        %v800 = vpop.f32.mrf.mxu0
        %v801 = vadd.f32 %v508, %v800
        %802 = vmatmul.bf16.gmra.mxu0 %v531
        %v803 = vpop.f32.mrf.mxu0
        %v804 = vadd.f32 %v508, %v803
        %v805 = vpop.f32.mrf.mxu0
        %v806 = vadd.f32 %v508, %v805
        %807 = vmatmul.bf16.gmra.mxu0 %v532
        %v808 = vpop.f32.mrf.mxu0
        %v809 = vadd.f32 %v508, %v808
        %v810 = vpop.f32.mrf.mxu0
        %v811 = vadd.f32 %v508, %v810
        %812 = vdwg.mxu0
        %813 = vst [vmem:[#allocation3] sm:$0xff] %v707
        %814 = vst [vmem:[#allocation3 + $0x8] sm:$0xff] %v736
        %815 = vst [vmem:[#allocation3 + $0x10] sm:$0xff] %v765
        %816 = vst [vmem:[#allocation3 + $0x18] sm:$0xff] %v794
        %817 = vst [vmem:[#allocation3 + $0x20] sm:$0xff] %v709
        %818 = vst [vmem:[#allocation3 + $0x28] sm:$0xff] %v738
        %819 = vst [vmem:[#allocation3 + $0x30] sm:$0xff] %v767
        %820 = vst [vmem:[#allocation3 + $0x38] sm:$0xff] %v796
        %821 = vst [vmem:[#allocation3 + $0x40] sm:$0xff] %v712
        %822 = vst [vmem:[#allocation3 + $0x48] sm:$0xff] %v741
        %823 = vst [vmem:[#allocation3 + $0x50] sm:$0xff] %v770
        %824 = vst [vmem:[#allocation3 + $0x58] sm:$0xff] %v799
        %825 = vst [vmem:[#allocation3 + $0x60] sm:$0xff] %v714
        %826 = vst [vmem:[#allocation3 + $0x68] sm:$0xff] %v743
        %827 = vst [vmem:[#allocation3 + $0x70] sm:$0xff] %v772
        %828 = vst [vmem:[#allocation3 + $0x78] sm:$0xff] %v801
        %829 = vst [vmem:[#allocation3 + $0x80] sm:$0xff] %v717
        %830 = vst [vmem:[#allocation3 + $0x88] sm:$0xff] %v746
        %831 = vst [vmem:[#allocation3 + $0x90] sm:$0xff] %v775
        %832 = vst [vmem:[#allocation3 + $0x98] sm:$0xff] %v804
        %833 = vst [vmem:[#allocation3 + $0xa0] sm:$0xff] %v719
        %834 = vst [vmem:[#allocation3 + $0xa8] sm:$0xff] %v748
        %835 = vst [vmem:[#allocation3 + $0xb0] sm:$0xff] %v777
        %836 = vst [vmem:[#allocation3 + $0xb8] sm:$0xff] %v806
        %837 = vst [vmem:[#allocation3 + $0xc0] sm:$0xff] %v722
        %838 = vst [vmem:[#allocation3 + $0xc8] sm:$0xff] %v751
        %839 = vst [vmem:[#allocation3 + $0xd0] sm:$0xff] %v780
        %840 = vst [vmem:[#allocation3 + $0xd8] sm:$0xff] %v809
        %841 = vst [vmem:[#allocation3 + $0xe0] sm:$0xff] %v724
        %842 = vst [vmem:[#allocation3 + $0xe8] sm:$0xff] %v753
        %843 = vst [vmem:[#allocation3 + $0xf0] sm:$0xff] %v782
        %844 = vst [vmem:[#allocation3 + $0xf8] sm:$0xff] %v811
        %v845 = vld [vmem:[#allocation3] sm:$0xff]
        %v846 = vld [vmem:[#allocation3 + $0x8] sm:$0xff]
        %v847 = vld [vmem:[#allocation3 + $0x10] sm:$0xff]
        %v848 = vld [vmem:[#allocation3 + $0x18] sm:$0xff]
        %v849 = vld [vmem:[%s383] sm:$0xff]
        %v850 = vld [vmem:[%s383 + $0x8] sm:$0xff]
        %v851 = vld [vmem:[%s383 + $0x10] sm:$0xff]
        %v852 = vld [vmem:[%s383 + $0x18] sm:$0xff]
        %v853 = vld [vmem:[%s383 + $0x20] sm:$0xff]
        %v854 = vld [vmem:[%s383 + $0x28] sm:$0xff]
        %v855 = vld [vmem:[%s383 + $0x30] sm:$0xff]
        %v856 = vld [vmem:[%s383 + $0x38] sm:$0xff]
        %v857 = vld [vmem:[%s383 + $0x40] sm:$0xff]
        %v858 = vld [vmem:[%s383 + $0x48] sm:$0xff]
        %v859 = vld [vmem:[%s383 + $0x50] sm:$0xff]
        %v860 = vld [vmem:[%s383 + $0x58] sm:$0xff]
        %v861 = vld [vmem:[%s383 + $0x60] sm:$0xff]
        %v862 = vld [vmem:[%s383 + $0x68] sm:$0xff]
        %v863 = vld [vmem:[%s383 + $0x70] sm:$0xff]
        %v864 = vld [vmem:[%s383 + $0x78] sm:$0xff]
        %v865 = vld [vmem:[%s383 + $0x80] sm:$0xff]
        %v866 = vld [vmem:[%s383 + $0x88] sm:$0xff]
        %v867 = vld [vmem:[%s383 + $0x90] sm:$0xff]
        %v868 = vld [vmem:[%s383 + $0x98] sm:$0xff]
        %v869 = vld [vmem:[%s383 + $0xa0] sm:$0xff]
        %v870 = vld [vmem:[%s383 + $0xa8] sm:$0xff]
        %v871 = vld [vmem:[%s383 + $0xb0] sm:$0xff]
        %v872 = vld [vmem:[%s383 + $0xb8] sm:$0xff]
        %v873 = vld [vmem:[%s383 + $0xc0] sm:$0xff]
        %v874 = vld [vmem:[%s383 + $0xc8] sm:$0xff]
        %v875 = vld [vmem:[%s383 + $0xd0] sm:$0xff]
        %v876 = vld [vmem:[%s383 + $0xd8] sm:$0xff]
        %v877 = vld [vmem:[%s383 + $0xe0] sm:$0xff]
        %v878 = vld [vmem:[%s383 + $0xe8] sm:$0xff]
        %v879 = vld [vmem:[%s383 + $0xf0] sm:$0xff]
        %v880 = vld [vmem:[%s383 + $0xf8] sm:$0xff]
        %v913 = vunpack.c.l.b16 %v849
        %v914 = vunpack.c.h.b16 %v849
        %v915 = vunpack.c.l.b16 %v850
        %v916 = vunpack.c.h.b16 %v850
        %v917 = vunpack.c.l.b16 %v851
        %v918 = vunpack.c.h.b16 %v851
        %v919 = vunpack.c.l.b16 %v852
        %v920 = vunpack.c.h.b16 %v852
        %v921 = vunpack.c.l.b16 %v853
        %v922 = vunpack.c.h.b16 %v853
        %v923 = vunpack.c.l.b16 %v854
        %v924 = vunpack.c.h.b16 %v854
        %v925 = vunpack.c.l.b16 %v855
        %v926 = vunpack.c.h.b16 %v855
        %v927 = vunpack.c.l.b16 %v856
        %v928 = vunpack.c.h.b16 %v856
        %v929 = vunpack.c.l.b16 %v857
        %v930 = vunpack.c.h.b16 %v857
        %v931 = vunpack.c.l.b16 %v858
        %v932 = vunpack.c.h.b16 %v858
        %v933 = vunpack.c.l.b16 %v859
        %v934 = vunpack.c.h.b16 %v859
        %v935 = vunpack.c.l.b16 %v860
        %v936 = vunpack.c.h.b16 %v860
        %v937 = vunpack.c.l.b16 %v861
        %v938 = vunpack.c.h.b16 %v861
        %v939 = vunpack.c.l.b16 %v862
        %v940 = vunpack.c.h.b16 %v862
        %v941 = vunpack.c.l.b16 %v863
        %v942 = vunpack.c.h.b16 %v863
        %v943 = vunpack.c.l.b16 %v864
        %v944 = vunpack.c.h.b16 %v864
        %v945 = vunpack.c.l.b16 %v865
        %v946 = vunpack.c.h.b16 %v865
        %v947 = vunpack.c.l.b16 %v866
        %v948 = vunpack.c.h.b16 %v866
        %v949 = vunpack.c.l.b16 %v867
        %v950 = vunpack.c.h.b16 %v867
        %v951 = vunpack.c.l.b16 %v868
        %v952 = vunpack.c.h.b16 %v868
        %v953 = vunpack.c.l.b16 %v869
        %v954 = vunpack.c.h.b16 %v869
        %v955 = vunpack.c.l.b16 %v870
        %v956 = vunpack.c.h.b16 %v870
        %v957 = vunpack.c.l.b16 %v871
        %v958 = vunpack.c.h.b16 %v871
        %v959 = vunpack.c.l.b16 %v872
        %v960 = vunpack.c.h.b16 %v872
        %v961 = vunpack.c.l.b16 %v873
        %v962 = vunpack.c.h.b16 %v873
        %v963 = vunpack.c.l.b16 %v874
        %v964 = vunpack.c.h.b16 %v874
        %v965 = vunpack.c.l.b16 %v875
        %v966 = vunpack.c.h.b16 %v875
        %v967 = vunpack.c.l.b16 %v876
        %v968 = vunpack.c.h.b16 %v876
        %v969 = vunpack.c.l.b16 %v877
        %v970 = vunpack.c.h.b16 %v877
        %v971 = vunpack.c.l.b16 %v878
        %v972 = vunpack.c.h.b16 %v878
        %v973 = vunpack.c.l.b16 %v879
        %v974 = vunpack.c.h.b16 %v879
        %v975 = vunpack.c.l.b16 %v880
        %v976 = vunpack.c.h.b16 %v880
        %v977 = vpack.c.b16 %v917, %v913
        %v978 = vpack.c.b16 %v918, %v914
        %v979 = vpack.c.b16 %v919, %v915
        %v980 = vpack.c.b16 %v920, %v916
        %v981 = vpack.c.b16 %v925, %v921
        %v982 = vpack.c.b16 %v926, %v922
        %v983 = vpack.c.b16 %v927, %v923
        %v984 = vpack.c.b16 %v928, %v924
        %v985 = vpack.c.b16 %v933, %v929
        %v986 = vpack.c.b16 %v934, %v930
        %v987 = vpack.c.b16 %v935, %v931
        %v988 = vpack.c.b16 %v936, %v932
        %v989 = vpack.c.b16 %v941, %v937
        %v990 = vpack.c.b16 %v942, %v938
        %v991 = vpack.c.b16 %v943, %v939
        %v992 = vpack.c.b16 %v944, %v940
        %v993 = vpack.c.b16 %v949, %v945
        %v994 = vpack.c.b16 %v950, %v946
        %v995 = vpack.c.b16 %v951, %v947
        %v996 = vpack.c.b16 %v952, %v948
        %v997 = vpack.c.b16 %v957, %v953
        %v998 = vpack.c.b16 %v958, %v954
        %v999 = vpack.c.b16 %v959, %v955
        %v1000 = vpack.c.b16 %v960, %v956
        %v1001 = vpack.c.b16 %v965, %v961
        %v1002 = vpack.c.b16 %v966, %v962
        %v1003 = vpack.c.b16 %v967, %v963
        %v1004 = vpack.c.b16 %v968, %v964
        %v1005 = vpack.c.b16 %v973, %v969
        %v1006 = vpack.c.b16 %v974, %v970
        %v1007 = vpack.c.b16 %v975, %v971
        %v1008 = vpack.c.b16 %v976, %v972
        %1041 = vmatpush.bf16.msra.mxu0 %v1005
        %1042 = vmatpush.bf16.msra.mxu0 %v1001
        %1043 = vmatpush.bf16.msra.mxu0 %v997
        %1044 = vmatpush.bf16.msra.mxu0 %v993
        %1045 = vmatpush.bf16.msra.mxu0 %v989
        %1046 = vmatpush.bf16.msra.mxu0 %v985
        %1047 = vmatpush.bf16.msra.mxu0 %v981
        %1048 = vmatpush.bf16.msra.mxu0 %v977
        %1049 = vmatmul.bf16.gmra.mxu0 0
        %v1050 = vpop.f32.mrf.mxu0
        %v1051 = vadd.f32 0.0, %v1050
        %v1052 = vpop.f32.mrf.mxu0
        %1053 = vdwg.mxu0
        %1054 = vmatpush.bf16.msra.mxu0 %v1006
        %1055 = vmatpush.bf16.msra.mxu0 %v1002
        %1056 = vmatpush.bf16.msra.mxu0 %v998
        %1057 = vmatpush.bf16.msra.mxu0 %v994
        %1058 = vmatpush.bf16.msra.mxu0 %v990
        %1059 = vmatpush.bf16.msra.mxu0 %v986
        %1060 = vmatpush.bf16.msra.mxu0 %v982
        %1061 = vmatpush.bf16.msra.mxu0 %v978
        %1062 = vmatmul.bf16.gmra.mxu0 0
        %v1063 = vpop.f32.mrf.mxu0
        %v1064 = vadd.f32 0.0, %v1063
        %v1065 = vpop.f32.mrf.mxu0
        %1066 = vdwg.mxu0
        %1067 = vmatpush.bf16.msra.mxu0 %v1007
        %1068 = vmatpush.bf16.msra.mxu0 %v1003
        %1069 = vmatpush.bf16.msra.mxu0 %v999
        %1070 = vmatpush.bf16.msra.mxu0 %v995
        %1071 = vmatpush.bf16.msra.mxu0 %v991
        %1072 = vmatpush.bf16.msra.mxu0 %v987
        %1073 = vmatpush.bf16.msra.mxu0 %v983
        %1074 = vmatpush.bf16.msra.mxu0 %v979
        %1075 = vmatmul.bf16.gmra.mxu0 0
        %v1076 = vpop.f32.mrf.mxu0
        %v1077 = vadd.f32 0.0, %v1076
        %v1078 = vpop.f32.mrf.mxu0
        %1079 = vdwg.mxu0
        %1080 = vmatpush.bf16.msra.mxu0 %v1008
        %1081 = vmatpush.bf16.msra.mxu0 %v1004
        %1082 = vmatpush.bf16.msra.mxu0 %v1000
        %1083 = vmatpush.bf16.msra.mxu0 %v996
        %1084 = vmatpush.bf16.msra.mxu0 %v992
        %1085 = vmatpush.bf16.msra.mxu0 %v988
        %1086 = vmatpush.bf16.msra.mxu0 %v984
        %1087 = vmatpush.bf16.msra.mxu0 %v980
        %1088 = vmatmul.bf16.gmra.mxu0 0
        %v1089 = vpop.f32.mrf.mxu0
        %v1090 = vadd.f32 0.0, %v1089
        %v1091 = vpop.f32.mrf.mxu0
        %1092 = vdwg.mxu0
        %v1093 = vadd.f32 %v845, %v1051
        %v1094 = vadd.f32 %v846, %v1064
        %v1095 = vadd.f32 %v847, %v1077
        %v1096 = vadd.f32 %v848, %v1090
        %v1097 = vmul.f32 %v1093, 0.5
        %v1098 = vmul.f32 %v1094, 0.5
        %v1099 = vmul.f32 %v1095, 0.5
        %v1100 = vtanh.pop %v1097
        %v1101 = vtanh.pop %v1098
        %v1102 = vtanh.pop %v1099
        %v1103 = vmul.f32 %v1100, 0.5
        %v1104 = vmul.f32 %v1101, 0.5
        %v1105 = vmul.f32 %v1102, 0.5
        %v1106 = vadd.f32 %v1103, 0.5
        %v1107 = vadd.f32 %v1104, 0.5
        %v1108 = vadd.f32 %v1105, 0.5
        %v1109 = vtanh.pop %v1096
        %v1110 = vmul.f32 %v1107, 0.0
        %v1111 = vmul.f32 %v1106, %v1109
        %v1112 = vadd.f32 %v1110, %v1111
        %v1113 = vtanh.pop %v1112
        %v1114 = vmul.f32 %v1108, %v1113
        %v1115 = vpack.c.bf16 %v1114, %v1114
        %1116 = vst [vmem:[#allocation2] sm:$0xf] %v1115
        %v1117 = vld [vmem:[#allocation3 + $0x20] sm:$0xff]
        %v1118 = vld [vmem:[#allocation3 + $0x28] sm:$0xff]
        %v1119 = vld [vmem:[#allocation3 + $0x30] sm:$0xff]
        %v1120 = vld [vmem:[#allocation3 + $0x38] sm:$0xff]
        %v1121 = vld [vmem:[%s383] sm:$0xff]
        %v1122 = vld [vmem:[%s383 + $0x8] sm:$0xff]
        %v1123 = vld [vmem:[%s383 + $0x10] sm:$0xff]
        %v1124 = vld [vmem:[%s383 + $0x18] sm:$0xff]
        %v1125 = vld [vmem:[%s383 + $0x20] sm:$0xff]
        %v1126 = vld [vmem:[%s383 + $0x28] sm:$0xff]
        %v1127 = vld [vmem:[%s383 + $0x30] sm:$0xff]
        %v1128 = vld [vmem:[%s383 + $0x38] sm:$0xff]
        %v1129 = vld [vmem:[%s383 + $0x40] sm:$0xff]
        %v1130 = vld [vmem:[%s383 + $0x48] sm:$0xff]
        %v1131 = vld [vmem:[%s383 + $0x50] sm:$0xff]
        %v1132 = vld [vmem:[%s383 + $0x58] sm:$0xff]
        %v1133 = vld [vmem:[%s383 + $0x60] sm:$0xff]
        %v1134 = vld [vmem:[%s383 + $0x68] sm:$0xff]
        %v1135 = vld [vmem:[%s383 + $0x70] sm:$0xff]
        %v1136 = vld [vmem:[%s383 + $0x78] sm:$0xff]
        %v1137 = vld [vmem:[%s383 + $0x80] sm:$0xff]
        %v1138 = vld [vmem:[%s383 + $0x88] sm:$0xff]
        %v1139 = vld [vmem:[%s383 + $0x90] sm:$0xff]
        %v1140 = vld [vmem:[%s383 + $0x98] sm:$0xff]
        %v1141 = vld [vmem:[%s383 + $0xa0] sm:$0xff]
        %v1142 = vld [vmem:[%s383 + $0xa8] sm:$0xff]
        %v1143 = vld [vmem:[%s383 + $0xb0] sm:$0xff]
        %v1144 = vld [vmem:[%s383 + $0xb8] sm:$0xff]
        %v1145 = vld [vmem:[%s383 + $0xc0] sm:$0xff]
        %v1146 = vld [vmem:[%s383 + $0xc8] sm:$0xff]
        %v1147 = vld [vmem:[%s383 + $0xd0] sm:$0xff]
        %v1148 = vld [vmem:[%s383 + $0xd8] sm:$0xff]
        %v1149 = vld [vmem:[%s383 + $0xe0] sm:$0xff]
        %v1150 = vld [vmem:[%s383 + $0xe8] sm:$0xff]
        %v1151 = vld [vmem:[%s383 + $0xf0] sm:$0xff]
        %v1152 = vld [vmem:[%s383 + $0xf8] sm:$0xff]
        %v1185 = vunpack.c.l.b16 %v1121
        %v1186 = vunpack.c.h.b16 %v1121
        %v1187 = vunpack.c.l.b16 %v1122
        %v1188 = vunpack.c.h.b16 %v1122
        %v1189 = vunpack.c.l.b16 %v1123
        %v1190 = vunpack.c.h.b16 %v1123
        %v1191 = vunpack.c.l.b16 %v1124
        %v1192 = vunpack.c.h.b16 %v1124
        %v1193 = vunpack.c.l.b16 %v1125
        %v1194 = vunpack.c.h.b16 %v1125
        %v1195 = vunpack.c.l.b16 %v1126
        %v1196 = vunpack.c.h.b16 %v1126
        %v1197 = vunpack.c.l.b16 %v1127
        %v1198 = vunpack.c.h.b16 %v1127
        %v1199 = vunpack.c.l.b16 %v1128
        %v1200 = vunpack.c.h.b16 %v1128
        %v1201 = vunpack.c.l.b16 %v1129
        %v1202 = vunpack.c.h.b16 %v1129
        %v1203 = vunpack.c.l.b16 %v1130
        %v1204 = vunpack.c.h.b16 %v1130
        %v1205 = vunpack.c.l.b16 %v1131
        %v1206 = vunpack.c.h.b16 %v1131
        %v1207 = vunpack.c.l.b16 %v1132
        %v1208 = vunpack.c.h.b16 %v1132
        %v1209 = vunpack.c.l.b16 %v1133
        %v1210 = vunpack.c.h.b16 %v1133
        %v1211 = vunpack.c.l.b16 %v1134
        %v1212 = vunpack.c.h.b16 %v1134
        %v1213 = vunpack.c.l.b16 %v1135
        %v1214 = vunpack.c.h.b16 %v1135
        %v1215 = vunpack.c.l.b16 %v1136
        %v1216 = vunpack.c.h.b16 %v1136
        %v1217 = vunpack.c.l.b16 %v1137
        %v1218 = vunpack.c.h.b16 %v1137
        %v1219 = vunpack.c.l.b16 %v1138
        %v1220 = vunpack.c.h.b16 %v1138
        %v1221 = vunpack.c.l.b16 %v1139
        %v1222 = vunpack.c.h.b16 %v1139
        %v1223 = vunpack.c.l.b16 %v1140
        %v1224 = vunpack.c.h.b16 %v1140
        %v1225 = vunpack.c.l.b16 %v1141
        %v1226 = vunpack.c.h.b16 %v1141
        %v1227 = vunpack.c.l.b16 %v1142
        %v1228 = vunpack.c.h.b16 %v1142
        %v1229 = vunpack.c.l.b16 %v1143
        %v1230 = vunpack.c.h.b16 %v1143
        %v1231 = vunpack.c.l.b16 %v1144
        %v1232 = vunpack.c.h.b16 %v1144
        %v1233 = vunpack.c.l.b16 %v1145
        %v1234 = vunpack.c.h.b16 %v1145
        %v1235 = vunpack.c.l.b16 %v1146
        %v1236 = vunpack.c.h.b16 %v1146
        %v1237 = vunpack.c.l.b16 %v1147
        %v1238 = vunpack.c.h.b16 %v1147
        %v1239 = vunpack.c.l.b16 %v1148
        %v1240 = vunpack.c.h.b16 %v1148
        %v1241 = vunpack.c.l.b16 %v1149
        %v1242 = vunpack.c.h.b16 %v1149
        %v1243 = vunpack.c.l.b16 %v1150
        %v1244 = vunpack.c.h.b16 %v1150
        %v1245 = vunpack.c.l.b16 %v1151
        %v1246 = vunpack.c.h.b16 %v1151
        %v1247 = vunpack.c.l.b16 %v1152
        %v1248 = vunpack.c.h.b16 %v1152
        %v1249 = vpack.c.b16 %v1189, %v1185
        %v1250 = vpack.c.b16 %v1190, %v1186
        %v1251 = vpack.c.b16 %v1191, %v1187
        %v1252 = vpack.c.b16 %v1192, %v1188
        %v1253 = vpack.c.b16 %v1197, %v1193
        %v1254 = vpack.c.b16 %v1198, %v1194
        %v1255 = vpack.c.b16 %v1199, %v1195
        %v1256 = vpack.c.b16 %v1200, %v1196
        %v1257 = vpack.c.b16 %v1205, %v1201
        %v1258 = vpack.c.b16 %v1206, %v1202
        %v1259 = vpack.c.b16 %v1207, %v1203
        %v1260 = vpack.c.b16 %v1208, %v1204
        %v1261 = vpack.c.b16 %v1213, %v1209
        %v1262 = vpack.c.b16 %v1214, %v1210
        %v1263 = vpack.c.b16 %v1215, %v1211
        %v1264 = vpack.c.b16 %v1216, %v1212
        %v1265 = vpack.c.b16 %v1221, %v1217
        %v1266 = vpack.c.b16 %v1222, %v1218
        %v1267 = vpack.c.b16 %v1223, %v1219
        %v1268 = vpack.c.b16 %v1224, %v1220
        %v1269 = vpack.c.b16 %v1229, %v1225
        %v1270 = vpack.c.b16 %v1230, %v1226
        %v1271 = vpack.c.b16 %v1231, %v1227
        %v1272 = vpack.c.b16 %v1232, %v1228
        %v1273 = vpack.c.b16 %v1237, %v1233
        %v1274 = vpack.c.b16 %v1238, %v1234
        %v1275 = vpack.c.b16 %v1239, %v1235
        %v1276 = vpack.c.b16 %v1240, %v1236
        %v1277 = vpack.c.b16 %v1245, %v1241
        %v1278 = vpack.c.b16 %v1246, %v1242
        %v1279 = vpack.c.b16 %v1247, %v1243
        %v1280 = vpack.c.b16 %v1248, %v1244
        %1313 = vmatpush.bf16.msra.mxu0 %v1277
        %1314 = vmatpush.bf16.msra.mxu0 %v1273
        %1315 = vmatpush.bf16.msra.mxu0 %v1269
        %1316 = vmatpush.bf16.msra.mxu0 %v1265
        %1317 = vmatpush.bf16.msra.mxu0 %v1261
        %1318 = vmatpush.bf16.msra.mxu0 %v1257
        %1319 = vmatpush.bf16.msra.mxu0 %v1253
        %1320 = vmatpush.bf16.msra.mxu0 %v1249
        %1321 = vmatmul.bf16.gmra.mxu0 %v1115
        %v1322 = vpop.f32.mrf.mxu0
        %v1323 = vadd.f32 0.0, %v1322
        %v1324 = vpop.f32.mrf.mxu0
        %1325 = vdwg.mxu0
        %1326 = vmatpush.bf16.msra.mxu0 %v1278
        %1327 = vmatpush.bf16.msra.mxu0 %v1274
        %1328 = vmatpush.bf16.msra.mxu0 %v1270
        %1329 = vmatpush.bf16.msra.mxu0 %v1266
        %1330 = vmatpush.bf16.msra.mxu0 %v1262
        %1331 = vmatpush.bf16.msra.mxu0 %v1258
        %1332 = vmatpush.bf16.msra.mxu0 %v1254
        %1333 = vmatpush.bf16.msra.mxu0 %v1250
        %1334 = vmatmul.bf16.gmra.mxu0 %v1115
        %v1335 = vpop.f32.mrf.mxu0
        %v1336 = vadd.f32 0.0, %v1335
        %v1337 = vpop.f32.mrf.mxu0
        %1338 = vdwg.mxu0
        %1339 = vmatpush.bf16.msra.mxu0 %v1279
        %1340 = vmatpush.bf16.msra.mxu0 %v1275
        %1341 = vmatpush.bf16.msra.mxu0 %v1271
        %1342 = vmatpush.bf16.msra.mxu0 %v1267
        %1343 = vmatpush.bf16.msra.mxu0 %v1263
        %1344 = vmatpush.bf16.msra.mxu0 %v1259
        %1345 = vmatpush.bf16.msra.mxu0 %v1255
        %1346 = vmatpush.bf16.msra.mxu0 %v1251
        %1347 = vmatmul.bf16.gmra.mxu0 %v1115
        %v1348 = vpop.f32.mrf.mxu0
        %v1349 = vadd.f32 0.0, %v1348
        %v1350 = vpop.f32.mrf.mxu0
        %1351 = vdwg.mxu0
        %1352 = vmatpush.bf16.msra.mxu0 %v1280
        %1353 = vmatpush.bf16.msra.mxu0 %v1276
        %1354 = vmatpush.bf16.msra.mxu0 %v1272
        %1355 = vmatpush.bf16.msra.mxu0 %v1268
        %1356 = vmatpush.bf16.msra.mxu0 %v1264
        %1357 = vmatpush.bf16.msra.mxu0 %v1260
        %1358 = vmatpush.bf16.msra.mxu0 %v1256
        %1359 = vmatpush.bf16.msra.mxu0 %v1252
        %1360 = vmatmul.bf16.gmra.mxu0 %v1115
        %v1361 = vpop.f32.mrf.mxu0
        %v1362 = vadd.f32 0.0, %v1361
        %v1363 = vpop.f32.mrf.mxu0
        %1364 = vdwg.mxu0
        %v1365 = vadd.f32 %v1117, %v1323
        %v1366 = vadd.f32 %v1118, %v1336
        %v1367 = vadd.f32 %v1119, %v1349
        %v1368 = vadd.f32 %v1120, %v1362
        %v1369 = vmul.f32 %v1365, 0.5
        %v1370 = vmul.f32 %v1366, 0.5
        %v1371 = vmul.f32 %v1367, 0.5
        %v1372 = vtanh.pop %v1369
        %v1373 = vtanh.pop %v1370
        %v1374 = vtanh.pop %v1371
        %v1375 = vmul.f32 %v1372, 0.5
        %v1376 = vmul.f32 %v1373, 0.5
        %v1377 = vmul.f32 %v1374, 0.5
        %v1378 = vadd.f32 %v1375, 0.5
        %v1379 = vadd.f32 %v1376, 0.5
        %v1380 = vadd.f32 %v1377, 0.5
        %v1381 = vtanh.pop %v1368
        %v1382 = vmul.f32 %v1379, %v1112
        %v1383 = vmul.f32 %v1378, %v1381
        %v1384 = vadd.f32 %v1382, %v1383
        %v1385 = vtanh.pop %v1384
        %v1386 = vmul.f32 %v1380, %v1385
        %v1387 = vpack.c.bf16 %v1386, %v1386
        %1388 = vst [vmem:[#allocation2 + $0x4] sm:$0xf] %v1387
        %v1389 = vld [vmem:[#allocation3 + $0x40] sm:$0xff]
        %v1390 = vld [vmem:[#allocation3 + $0x48] sm:$0xff]
        %v1391 = vld [vmem:[#allocation3 + $0x50] sm:$0xff]
        %v1392 = vld [vmem:[#allocation3 + $0x58] sm:$0xff]
        %v1393 = vld [vmem:[%s383] sm:$0xff]
        %v1394 = vld [vmem:[%s383 + $0x8] sm:$0xff]
        %v1395 = vld [vmem:[%s383 + $0x10] sm:$0xff]
        %v1396 = vld [vmem:[%s383 + $0x18] sm:$0xff]
        %v1397 = vld [vmem:[%s383 + $0x20] sm:$0xff]
        %v1398 = vld [vmem:[%s383 + $0x28] sm:$0xff]
        %v1399 = vld [vmem:[%s383 + $0x30] sm:$0xff]
        %v1400 = vld [vmem:[%s383 + $0x38] sm:$0xff]
        %v1401 = vld [vmem:[%s383 + $0x40] sm:$0xff]
        %v1402 = vld [vmem:[%s383 + $0x48] sm:$0xff]
        %v1403 = vld [vmem:[%s383 + $0x50] sm:$0xff]
        %v1404 = vld [vmem:[%s383 + $0x58] sm:$0xff]
        %v1405 = vld [vmem:[%s383 + $0x60] sm:$0xff]
        %v1406 = vld [vmem:[%s383 + $0x68] sm:$0xff]
        %v1407 = vld [vmem:[%s383 + $0x70] sm:$0xff]
        %v1408 = vld [vmem:[%s383 + $0x78] sm:$0xff]
        %v1409 = vld [vmem:[%s383 + $0x80] sm:$0xff]
        %v1410 = vld [vmem:[%s383 + $0x88] sm:$0xff]
        %v1411 = vld [vmem:[%s383 + $0x90] sm:$0xff]
        %v1412 = vld [vmem:[%s383 + $0x98] sm:$0xff]
        %v1413 = vld [vmem:[%s383 + $0xa0] sm:$0xff]
        %v1414 = vld [vmem:[%s383 + $0xa8] sm:$0xff]
        %v1415 = vld [vmem:[%s383 + $0xb0] sm:$0xff]
        %v1416 = vld [vmem:[%s383 + $0xb8] sm:$0xff]
        %v1417 = vld [vmem:[%s383 + $0xc0] sm:$0xff]
        %v1418 = vld [vmem:[%s383 + $0xc8] sm:$0xff]
        %v1419 = vld [vmem:[%s383 + $0xd0] sm:$0xff]
        %v1420 = vld [vmem:[%s383 + $0xd8] sm:$0xff]
        %v1421 = vld [vmem:[%s383 + $0xe0] sm:$0xff]
        %v1422 = vld [vmem:[%s383 + $0xe8] sm:$0xff]
        %v1423 = vld [vmem:[%s383 + $0xf0] sm:$0xff]
        %v1424 = vld [vmem:[%s383 + $0xf8] sm:$0xff]
        %v1457 = vunpack.c.l.b16 %v1393
        %v1458 = vunpack.c.h.b16 %v1393
        %v1459 = vunpack.c.l.b16 %v1394
        %v1460 = vunpack.c.h.b16 %v1394
        %v1461 = vunpack.c.l.b16 %v1395
        %v1462 = vunpack.c.h.b16 %v1395
        %v1463 = vunpack.c.l.b16 %v1396
        %v1464 = vunpack.c.h.b16 %v1396
        %v1465 = vunpack.c.l.b16 %v1397
        %v1466 = vunpack.c.h.b16 %v1397
        %v1467 = vunpack.c.l.b16 %v1398
        %v1468 = vunpack.c.h.b16 %v1398
        %v1469 = vunpack.c.l.b16 %v1399
        %v1470 = vunpack.c.h.b16 %v1399
        %v1471 = vunpack.c.l.b16 %v1400
        %v1472 = vunpack.c.h.b16 %v1400
        %v1473 = vunpack.c.l.b16 %v1401
        %v1474 = vunpack.c.h.b16 %v1401
        %v1475 = vunpack.c.l.b16 %v1402
        %v1476 = vunpack.c.h.b16 %v1402
        %v1477 = vunpack.c.l.b16 %v1403
        %v1478 = vunpack.c.h.b16 %v1403
        %v1479 = vunpack.c.l.b16 %v1404
        %v1480 = vunpack.c.h.b16 %v1404
        %v1481 = vunpack.c.l.b16 %v1405
        %v1482 = vunpack.c.h.b16 %v1405
        %v1483 = vunpack.c.l.b16 %v1406
        %v1484 = vunpack.c.h.b16 %v1406
        %v1485 = vunpack.c.l.b16 %v1407
        %v1486 = vunpack.c.h.b16 %v1407
        %v1487 = vunpack.c.l.b16 %v1408
        %v1488 = vunpack.c.h.b16 %v1408
        %v1489 = vunpack.c.l.b16 %v1409
        %v1490 = vunpack.c.h.b16 %v1409
        %v1491 = vunpack.c.l.b16 %v1410
        %v1492 = vunpack.c.h.b16 %v1410
        %v1493 = vunpack.c.l.b16 %v1411
        %v1494 = vunpack.c.h.b16 %v1411
        %v1495 = vunpack.c.l.b16 %v1412
        %v1496 = vunpack.c.h.b16 %v1412
        %v1497 = vunpack.c.l.b16 %v1413
        %v1498 = vunpack.c.h.b16 %v1413
        %v1499 = vunpack.c.l.b16 %v1414
        %v1500 = vunpack.c.h.b16 %v1414
        %v1501 = vunpack.c.l.b16 %v1415
        %v1502 = vunpack.c.h.b16 %v1415
        %v1503 = vunpack.c.l.b16 %v1416
        %v1504 = vunpack.c.h.b16 %v1416
        %v1505 = vunpack.c.l.b16 %v1417
        %v1506 = vunpack.c.h.b16 %v1417
        %v1507 = vunpack.c.l.b16 %v1418
        %v1508 = vunpack.c.h.b16 %v1418
        %v1509 = vunpack.c.l.b16 %v1419
        %v1510 = vunpack.c.h.b16 %v1419
        %v1511 = vunpack.c.l.b16 %v1420
        %v1512 = vunpack.c.h.b16 %v1420
        %v1513 = vunpack.c.l.b16 %v1421
        %v1514 = vunpack.c.h.b16 %v1421
        %v1515 = vunpack.c.l.b16 %v1422
        %v1516 = vunpack.c.h.b16 %v1422
        %v1517 = vunpack.c.l.b16 %v1423
        %v1518 = vunpack.c.h.b16 %v1423
        %v1519 = vunpack.c.l.b16 %v1424
        %v1520 = vunpack.c.h.b16 %v1424
        %v1521 = vpack.c.b16 %v1461, %v1457
        %v1522 = vpack.c.b16 %v1462, %v1458
        %v1523 = vpack.c.b16 %v1463, %v1459
        %v1524 = vpack.c.b16 %v1464, %v1460
        %v1525 = vpack.c.b16 %v1469, %v1465
        %v1526 = vpack.c.b16 %v1470, %v1466
        %v1527 = vpack.c.b16 %v1471, %v1467
        %v1528 = vpack.c.b16 %v1472, %v1468
        %v1529 = vpack.c.b16 %v1477, %v1473
        %v1530 = vpack.c.b16 %v1478, %v1474
        %v1531 = vpack.c.b16 %v1479, %v1475
        %v1532 = vpack.c.b16 %v1480, %v1476
        %v1533 = vpack.c.b16 %v1485, %v1481
        %v1534 = vpack.c.b16 %v1486, %v1482
        %v1535 = vpack.c.b16 %v1487, %v1483
        %v1536 = vpack.c.b16 %v1488, %v1484
        %v1537 = vpack.c.b16 %v1493, %v1489
        %v1538 = vpack.c.b16 %v1494, %v1490
        %v1539 = vpack.c.b16 %v1495, %v1491
        %v1540 = vpack.c.b16 %v1496, %v1492
        %v1541 = vpack.c.b16 %v1501, %v1497
        %v1542 = vpack.c.b16 %v1502, %v1498
        %v1543 = vpack.c.b16 %v1503, %v1499
        %v1544 = vpack.c.b16 %v1504, %v1500
        %v1545 = vpack.c.b16 %v1509, %v1505
        %v1546 = vpack.c.b16 %v1510, %v1506
        %v1547 = vpack.c.b16 %v1511, %v1507
        %v1548 = vpack.c.b16 %v1512, %v1508
        %v1549 = vpack.c.b16 %v1517, %v1513
        %v1550 = vpack.c.b16 %v1518, %v1514
        %v1551 = vpack.c.b16 %v1519, %v1515
        %v1552 = vpack.c.b16 %v1520, %v1516
        %1585 = vmatpush.bf16.msra.mxu0 %v1549
        %1586 = vmatpush.bf16.msra.mxu0 %v1545
        %1587 = vmatpush.bf16.msra.mxu0 %v1541
        %1588 = vmatpush.bf16.msra.mxu0 %v1537
        %1589 = vmatpush.bf16.msra.mxu0 %v1533
        %1590 = vmatpush.bf16.msra.mxu0 %v1529
        %1591 = vmatpush.bf16.msra.mxu0 %v1525
        %1592 = vmatpush.bf16.msra.mxu0 %v1521
        %1593 = vmatmul.bf16.gmra.mxu0 %v1387
        %v1594 = vpop.f32.mrf.mxu0
        %v1595 = vadd.f32 0.0, %v1594
        %v1596 = vpop.f32.mrf.mxu0
        %1597 = vdwg.mxu0
        %1598 = vmatpush.bf16.msra.mxu0 %v1550
        %1599 = vmatpush.bf16.msra.mxu0 %v1546
        %1600 = vmatpush.bf16.msra.mxu0 %v1542
        %1601 = vmatpush.bf16.msra.mxu0 %v1538
        %1602 = vmatpush.bf16.msra.mxu0 %v1534
        %1603 = vmatpush.bf16.msra.mxu0 %v1530
        %1604 = vmatpush.bf16.msra.mxu0 %v1526
        %1605 = vmatpush.bf16.msra.mxu0 %v1522
        %1606 = vmatmul.bf16.gmra.mxu0 %v1387
        %v1607 = vpop.f32.mrf.mxu0
        %v1608 = vadd.f32 0.0, %v1607
        %v1609 = vpop.f32.mrf.mxu0
        %1610 = vdwg.mxu0
        %1611 = vmatpush.bf16.msra.mxu0 %v1551
        %1612 = vmatpush.bf16.msra.mxu0 %v1547
        %1613 = vmatpush.bf16.msra.mxu0 %v1543
        %1614 = vmatpush.bf16.msra.mxu0 %v1539
        %1615 = vmatpush.bf16.msra.mxu0 %v1535
        %1616 = vmatpush.bf16.msra.mxu0 %v1531
        %1617 = vmatpush.bf16.msra.mxu0 %v1527
        %1618 = vmatpush.bf16.msra.mxu0 %v1523
        %1619 = vmatmul.bf16.gmra.mxu0 %v1387
        %v1620 = vpop.f32.mrf.mxu0
        %v1621 = vadd.f32 0.0, %v1620
        %v1622 = vpop.f32.mrf.mxu0
        %1623 = vdwg.mxu0
        %1624 = vmatpush.bf16.msra.mxu0 %v1552
        %1625 = vmatpush.bf16.msra.mxu0 %v1548
        %1626 = vmatpush.bf16.msra.mxu0 %v1544
        %1627 = vmatpush.bf16.msra.mxu0 %v1540
        %1628 = vmatpush.bf16.msra.mxu0 %v1536
        %1629 = vmatpush.bf16.msra.mxu0 %v1532
        %1630 = vmatpush.bf16.msra.mxu0 %v1528
        %1631 = vmatpush.bf16.msra.mxu0 %v1524
        %1632 = vmatmul.bf16.gmra.mxu0 %v1387
        %v1633 = vpop.f32.mrf.mxu0
        %v1634 = vadd.f32 0.0, %v1633
        %v1635 = vpop.f32.mrf.mxu0
        %1636 = vdwg.mxu0
        %v1637 = vadd.f32 %v1389, %v1595
        %v1638 = vadd.f32 %v1390, %v1608
        %v1639 = vadd.f32 %v1391, %v1621
        %v1640 = vadd.f32 %v1392, %v1634
        %v1641 = vmul.f32 %v1637, 0.5
        %v1642 = vmul.f32 %v1638, 0.5
        %v1643 = vmul.f32 %v1639, 0.5
        %v1644 = vtanh.pop %v1641
        %v1645 = vtanh.pop %v1642
        %v1646 = vtanh.pop %v1643
        %v1647 = vmul.f32 %v1644, 0.5
        %v1648 = vmul.f32 %v1645, 0.5
        %v1649 = vmul.f32 %v1646, 0.5
        %v1650 = vadd.f32 %v1647, 0.5
        %v1651 = vadd.f32 %v1648, 0.5
        %v1652 = vadd.f32 %v1649, 0.5
        %v1653 = vtanh.pop %v1640
        %v1654 = vmul.f32 %v1651, %v1384
        %v1655 = vmul.f32 %v1650, %v1653
        %v1656 = vadd.f32 %v1654, %v1655
        %v1657 = vtanh.pop %v1656
        %v1658 = vmul.f32 %v1652, %v1657
        %v1659 = vpack.c.bf16 %v1658, %v1658
        %1660 = vst [vmem:[#allocation2 + $0x8] sm:$0xf] %v1659
        %v1661 = vld [vmem:[#allocation3 + $0x60] sm:$0xff]
        %v1662 = vld [vmem:[#allocation3 + $0x68] sm:$0xff]
        %v1663 = vld [vmem:[#allocation3 + $0x70] sm:$0xff]
        %v1664 = vld [vmem:[#allocation3 + $0x78] sm:$0xff]
        %v1665 = vld [vmem:[%s383] sm:$0xff]
        %v1666 = vld [vmem:[%s383 + $0x8] sm:$0xff]
        %v1667 = vld [vmem:[%s383 + $0x10] sm:$0xff]
        %v1668 = vld [vmem:[%s383 + $0x18] sm:$0xff]
        %v1669 = vld [vmem:[%s383 + $0x20] sm:$0xff]
        %v1670 = vld [vmem:[%s383 + $0x28] sm:$0xff]
        %v1671 = vld [vmem:[%s383 + $0x30] sm:$0xff]
        %v1672 = vld [vmem:[%s383 + $0x38] sm:$0xff]
        %v1673 = vld [vmem:[%s383 + $0x40] sm:$0xff]
        %v1674 = vld [vmem:[%s383 + $0x48] sm:$0xff]
        %v1675 = vld [vmem:[%s383 + $0x50] sm:$0xff]
        %v1676 = vld [vmem:[%s383 + $0x58] sm:$0xff]
        %v1677 = vld [vmem:[%s383 + $0x60] sm:$0xff]
        %v1678 = vld [vmem:[%s383 + $0x68] sm:$0xff]
        %v1679 = vld [vmem:[%s383 + $0x70] sm:$0xff]
        %v1680 = vld [vmem:[%s383 + $0x78] sm:$0xff]
        %v1681 = vld [vmem:[%s383 + $0x80] sm:$0xff]
        %v1682 = vld [vmem:[%s383 + $0x88] sm:$0xff]
        %v1683 = vld [vmem:[%s383 + $0x90] sm:$0xff]
        %v1684 = vld [vmem:[%s383 + $0x98] sm:$0xff]
        %v1685 = vld [vmem:[%s383 + $0xa0] sm:$0xff]
        %v1686 = vld [vmem:[%s383 + $0xa8] sm:$0xff]
        %v1687 = vld [vmem:[%s383 + $0xb0] sm:$0xff]
        %v1688 = vld [vmem:[%s383 + $0xb8] sm:$0xff]
        %v1689 = vld [vmem:[%s383 + $0xc0] sm:$0xff]
        %v1690 = vld [vmem:[%s383 + $0xc8] sm:$0xff]
        %v1691 = vld [vmem:[%s383 + $0xd0] sm:$0xff]
        %v1692 = vld [vmem:[%s383 + $0xd8] sm:$0xff]
        %v1693 = vld [vmem:[%s383 + $0xe0] sm:$0xff]
        %v1694 = vld [vmem:[%s383 + $0xe8] sm:$0xff]
        %v1695 = vld [vmem:[%s383 + $0xf0] sm:$0xff]
        %v1696 = vld [vmem:[%s383 + $0xf8] sm:$0xff]
        %v1729 = vunpack.c.l.b16 %v1665
        %v1730 = vunpack.c.h.b16 %v1665
        %v1731 = vunpack.c.l.b16 %v1666
        %v1732 = vunpack.c.h.b16 %v1666
        %v1733 = vunpack.c.l.b16 %v1667
        %v1734 = vunpack.c.h.b16 %v1667
        %v1735 = vunpack.c.l.b16 %v1668
        %v1736 = vunpack.c.h.b16 %v1668
        %v1737 = vunpack.c.l.b16 %v1669
        %v1738 = vunpack.c.h.b16 %v1669
        %v1739 = vunpack.c.l.b16 %v1670
        %v1740 = vunpack.c.h.b16 %v1670
        %v1741 = vunpack.c.l.b16 %v1671
        %v1742 = vunpack.c.h.b16 %v1671
        %v1743 = vunpack.c.l.b16 %v1672
        %v1744 = vunpack.c.h.b16 %v1672
        %v1745 = vunpack.c.l.b16 %v1673
        %v1746 = vunpack.c.h.b16 %v1673
        %v1747 = vunpack.c.l.b16 %v1674
        %v1748 = vunpack.c.h.b16 %v1674
        %v1749 = vunpack.c.l.b16 %v1675
        %v1750 = vunpack.c.h.b16 %v1675
        %v1751 = vunpack.c.l.b16 %v1676
        %v1752 = vunpack.c.h.b16 %v1676
        %v1753 = vunpack.c.l.b16 %v1677
        %v1754 = vunpack.c.h.b16 %v1677
        %v1755 = vunpack.c.l.b16 %v1678
        %v1756 = vunpack.c.h.b16 %v1678
        %v1757 = vunpack.c.l.b16 %v1679
        %v1758 = vunpack.c.h.b16 %v1679
        %v1759 = vunpack.c.l.b16 %v1680
        %v1760 = vunpack.c.h.b16 %v1680
        %v1761 = vunpack.c.l.b16 %v1681
        %v1762 = vunpack.c.h.b16 %v1681
        %v1763 = vunpack.c.l.b16 %v1682
        %v1764 = vunpack.c.h.b16 %v1682
        %v1765 = vunpack.c.l.b16 %v1683
        %v1766 = vunpack.c.h.b16 %v1683
        %v1767 = vunpack.c.l.b16 %v1684
        %v1768 = vunpack.c.h.b16 %v1684
        %v1769 = vunpack.c.l.b16 %v1685
        %v1770 = vunpack.c.h.b16 %v1685
        %v1771 = vunpack.c.l.b16 %v1686
        %v1772 = vunpack.c.h.b16 %v1686
        %v1773 = vunpack.c.l.b16 %v1687
        %v1774 = vunpack.c.h.b16 %v1687
        %v1775 = vunpack.c.l.b16 %v1688
        %v1776 = vunpack.c.h.b16 %v1688
        %v1777 = vunpack.c.l.b16 %v1689
        %v1778 = vunpack.c.h.b16 %v1689
        %v1779 = vunpack.c.l.b16 %v1690
        %v1780 = vunpack.c.h.b16 %v1690
        %v1781 = vunpack.c.l.b16 %v1691
        %v1782 = vunpack.c.h.b16 %v1691
        %v1783 = vunpack.c.l.b16 %v1692
        %v1784 = vunpack.c.h.b16 %v1692
        %v1785 = vunpack.c.l.b16 %v1693
        %v1786 = vunpack.c.h.b16 %v1693
        %v1787 = vunpack.c.l.b16 %v1694
        %v1788 = vunpack.c.h.b16 %v1694
        %v1789 = vunpack.c.l.b16 %v1695
        %v1790 = vunpack.c.h.b16 %v1695
        %v1791 = vunpack.c.l.b16 %v1696
        %v1792 = vunpack.c.h.b16 %v1696
        %v1793 = vpack.c.b16 %v1733, %v1729
        %v1794 = vpack.c.b16 %v1734, %v1730
        %v1795 = vpack.c.b16 %v1735, %v1731
        %v1796 = vpack.c.b16 %v1736, %v1732
        %v1797 = vpack.c.b16 %v1741, %v1737
        %v1798 = vpack.c.b16 %v1742, %v1738
        %v1799 = vpack.c.b16 %v1743, %v1739
        %v1800 = vpack.c.b16 %v1744, %v1740
        %v1801 = vpack.c.b16 %v1749, %v1745
        %v1802 = vpack.c.b16 %v1750, %v1746
        %v1803 = vpack.c.b16 %v1751, %v1747
        %v1804 = vpack.c.b16 %v1752, %v1748
        %v1805 = vpack.c.b16 %v1757, %v1753
        %v1806 = vpack.c.b16 %v1758, %v1754
        %v1807 = vpack.c.b16 %v1759, %v1755
        %v1808 = vpack.c.b16 %v1760, %v1756
        %v1809 = vpack.c.b16 %v1765, %v1761
        %v1810 = vpack.c.b16 %v1766, %v1762
        %v1811 = vpack.c.b16 %v1767, %v1763
        %v1812 = vpack.c.b16 %v1768, %v1764
        %v1813 = vpack.c.b16 %v1773, %v1769
        %v1814 = vpack.c.b16 %v1774, %v1770
        %v1815 = vpack.c.b16 %v1775, %v1771
        %v1816 = vpack.c.b16 %v1776, %v1772
        %v1817 = vpack.c.b16 %v1781, %v1777
        %v1818 = vpack.c.b16 %v1782, %v1778
        %v1819 = vpack.c.b16 %v1783, %v1779
        %v1820 = vpack.c.b16 %v1784, %v1780
        %v1821 = vpack.c.b16 %v1789, %v1785
        %v1822 = vpack.c.b16 %v1790, %v1786
        %v1823 = vpack.c.b16 %v1791, %v1787
        %v1824 = vpack.c.b16 %v1792, %v1788
        %1857 = vmatpush.bf16.msra.mxu0 %v1821
        %1858 = vmatpush.bf16.msra.mxu0 %v1817
        %1859 = vmatpush.bf16.msra.mxu0 %v1813
        %1860 = vmatpush.bf16.msra.mxu0 %v1809
        %1861 = vmatpush.bf16.msra.mxu0 %v1805
        %1862 = vmatpush.bf16.msra.mxu0 %v1801
        %1863 = vmatpush.bf16.msra.mxu0 %v1797
        %1864 = vmatpush.bf16.msra.mxu0 %v1793
        %1865 = vmatmul.bf16.gmra.mxu0 %v1659
        %v1866 = vpop.f32.mrf.mxu0
        %v1867 = vadd.f32 0.0, %v1866
        %v1868 = vpop.f32.mrf.mxu0
        %1869 = vdwg.mxu0
        %1870 = vmatpush.bf16.msra.mxu0 %v1822
        %1871 = vmatpush.bf16.msra.mxu0 %v1818
        %1872 = vmatpush.bf16.msra.mxu0 %v1814
        %1873 = vmatpush.bf16.msra.mxu0 %v1810
        %1874 = vmatpush.bf16.msra.mxu0 %v1806
        %1875 = vmatpush.bf16.msra.mxu0 %v1802
        %1876 = vmatpush.bf16.msra.mxu0 %v1798
        %1877 = vmatpush.bf16.msra.mxu0 %v1794
        %1878 = vmatmul.bf16.gmra.mxu0 %v1659
        %v1879 = vpop.f32.mrf.mxu0
        %v1880 = vadd.f32 0.0, %v1879
        %v1881 = vpop.f32.mrf.mxu0
        %1882 = vdwg.mxu0
        %1883 = vmatpush.bf16.msra.mxu0 %v1823
        %1884 = vmatpush.bf16.msra.mxu0 %v1819
        %1885 = vmatpush.bf16.msra.mxu0 %v1815
        %1886 = vmatpush.bf16.msra.mxu0 %v1811
        %1887 = vmatpush.bf16.msra.mxu0 %v1807
        %1888 = vmatpush.bf16.msra.mxu0 %v1803
        %1889 = vmatpush.bf16.msra.mxu0 %v1799
        %1890 = vmatpush.bf16.msra.mxu0 %v1795
        %1891 = vmatmul.bf16.gmra.mxu0 %v1659
        %v1892 = vpop.f32.mrf.mxu0
        %v1893 = vadd.f32 0.0, %v1892
        %v1894 = vpop.f32.mrf.mxu0
        %1895 = vdwg.mxu0
        %1896 = vmatpush.bf16.msra.mxu0 %v1824
        %1897 = vmatpush.bf16.msra.mxu0 %v1820
        %1898 = vmatpush.bf16.msra.mxu0 %v1816
        %1899 = vmatpush.bf16.msra.mxu0 %v1812
        %1900 = vmatpush.bf16.msra.mxu0 %v1808
        %1901 = vmatpush.bf16.msra.mxu0 %v1804
        %1902 = vmatpush.bf16.msra.mxu0 %v1800
        %1903 = vmatpush.bf16.msra.mxu0 %v1796
        %1904 = vmatmul.bf16.gmra.mxu0 %v1659
        %v1905 = vpop.f32.mrf.mxu0
        %v1906 = vadd.f32 0.0, %v1905
        %v1907 = vpop.f32.mrf.mxu0
        %1908 = vdwg.mxu0
        %v1909 = vadd.f32 %v1661, %v1867
        %v1910 = vadd.f32 %v1662, %v1880
        %v1911 = vadd.f32 %v1663, %v1893
        %v1912 = vadd.f32 %v1664, %v1906
        %v1913 = vmul.f32 %v1909, 0.5
        %v1914 = vmul.f32 %v1910, 0.5
        %v1915 = vmul.f32 %v1911, 0.5
        %v1916 = vtanh.pop %v1913
        %v1917 = vtanh.pop %v1914
        %v1918 = vtanh.pop %v1915
        %v1919 = vmul.f32 %v1916, 0.5
        %v1920 = vmul.f32 %v1917, 0.5
        %v1921 = vmul.f32 %v1918, 0.5
        %v1922 = vadd.f32 %v1919, 0.5
        %v1923 = vadd.f32 %v1920, 0.5
        %v1924 = vadd.f32 %v1921, 0.5
        %v1925 = vtanh.pop %v1912
        %v1926 = vmul.f32 %v1923, %v1656
        %v1927 = vmul.f32 %v1922, %v1925
        %v1928 = vadd.f32 %v1926, %v1927
        %v1929 = vtanh.pop %v1928
        %v1930 = vmul.f32 %v1924, %v1929
        %v1931 = vpack.c.bf16 %v1930, %v1930
        %1932 = vst [vmem:[#allocation2 + $0xc] sm:$0xf] %v1931
        %v1933 = vld [vmem:[#allocation3 + $0x80] sm:$0xff]
        %v1934 = vld [vmem:[#allocation3 + $0x88] sm:$0xff]
        %v1935 = vld [vmem:[#allocation3 + $0x90] sm:$0xff]
        %v1936 = vld [vmem:[#allocation3 + $0x98] sm:$0xff]
        %v1937 = vld [vmem:[%s383] sm:$0xff]
        %v1938 = vld [vmem:[%s383 + $0x8] sm:$0xff]
        %v1939 = vld [vmem:[%s383 + $0x10] sm:$0xff]
        %v1940 = vld [vmem:[%s383 + $0x18] sm:$0xff]
        %v1941 = vld [vmem:[%s383 + $0x20] sm:$0xff]
        %v1942 = vld [vmem:[%s383 + $0x28] sm:$0xff]
        %v1943 = vld [vmem:[%s383 + $0x30] sm:$0xff]
        %v1944 = vld [vmem:[%s383 + $0x38] sm:$0xff]
        %v1945 = vld [vmem:[%s383 + $0x40] sm:$0xff]
        %v1946 = vld [vmem:[%s383 + $0x48] sm:$0xff]
        %v1947 = vld [vmem:[%s383 + $0x50] sm:$0xff]
        %v1948 = vld [vmem:[%s383 + $0x58] sm:$0xff]
        %v1949 = vld [vmem:[%s383 + $0x60] sm:$0xff]
        %v1950 = vld [vmem:[%s383 + $0x68] sm:$0xff]
        %v1951 = vld [vmem:[%s383 + $0x70] sm:$0xff]
        %v1952 = vld [vmem:[%s383 + $0x78] sm:$0xff]
        %v1953 = vld [vmem:[%s383 + $0x80] sm:$0xff]
        %v1954 = vld [vmem:[%s383 + $0x88] sm:$0xff]
        %v1955 = vld [vmem:[%s383 + $0x90] sm:$0xff]
        %v1956 = vld [vmem:[%s383 + $0x98] sm:$0xff]
        %v1957 = vld [vmem:[%s383 + $0xa0] sm:$0xff]
        %v1958 = vld [vmem:[%s383 + $0xa8] sm:$0xff]
        %v1959 = vld [vmem:[%s383 + $0xb0] sm:$0xff]
        %v1960 = vld [vmem:[%s383 + $0xb8] sm:$0xff]
        %v1961 = vld [vmem:[%s383 + $0xc0] sm:$0xff]
        %v1962 = vld [vmem:[%s383 + $0xc8] sm:$0xff]
        %v1963 = vld [vmem:[%s383 + $0xd0] sm:$0xff]
        %v1964 = vld [vmem:[%s383 + $0xd8] sm:$0xff]
        %v1965 = vld [vmem:[%s383 + $0xe0] sm:$0xff]
        %v1966 = vld [vmem:[%s383 + $0xe8] sm:$0xff]
        %v1967 = vld [vmem:[%s383 + $0xf0] sm:$0xff]
        %v1968 = vld [vmem:[%s383 + $0xf8] sm:$0xff]
        %v2001 = vunpack.c.l.b16 %v1937
        %v2002 = vunpack.c.h.b16 %v1937
        %v2003 = vunpack.c.l.b16 %v1938
        %v2004 = vunpack.c.h.b16 %v1938
        %v2005 = vunpack.c.l.b16 %v1939
        %v2006 = vunpack.c.h.b16 %v1939
        %v2007 = vunpack.c.l.b16 %v1940
        %v2008 = vunpack.c.h.b16 %v1940
        %v2009 = vunpack.c.l.b16 %v1941
        %v2010 = vunpack.c.h.b16 %v1941
        %v2011 = vunpack.c.l.b16 %v1942
        %v2012 = vunpack.c.h.b16 %v1942
        %v2013 = vunpack.c.l.b16 %v1943
        %v2014 = vunpack.c.h.b16 %v1943
        %v2015 = vunpack.c.l.b16 %v1944
        %v2016 = vunpack.c.h.b16 %v1944
        %v2017 = vunpack.c.l.b16 %v1945
        %v2018 = vunpack.c.h.b16 %v1945
        %v2019 = vunpack.c.l.b16 %v1946
        %v2020 = vunpack.c.h.b16 %v1946
        %v2021 = vunpack.c.l.b16 %v1947
        %v2022 = vunpack.c.h.b16 %v1947
        %v2023 = vunpack.c.l.b16 %v1948
        %v2024 = vunpack.c.h.b16 %v1948
        %v2025 = vunpack.c.l.b16 %v1949
        %v2026 = vunpack.c.h.b16 %v1949
        %v2027 = vunpack.c.l.b16 %v1950
        %v2028 = vunpack.c.h.b16 %v1950
        %v2029 = vunpack.c.l.b16 %v1951
        %v2030 = vunpack.c.h.b16 %v1951
        %v2031 = vunpack.c.l.b16 %v1952
        %v2032 = vunpack.c.h.b16 %v1952
        %v2033 = vunpack.c.l.b16 %v1953
        %v2034 = vunpack.c.h.b16 %v1953
        %v2035 = vunpack.c.l.b16 %v1954
        %v2036 = vunpack.c.h.b16 %v1954
        %v2037 = vunpack.c.l.b16 %v1955
        %v2038 = vunpack.c.h.b16 %v1955
        %v2039 = vunpack.c.l.b16 %v1956
        %v2040 = vunpack.c.h.b16 %v1956
        %v2041 = vunpack.c.l.b16 %v1957
        %v2042 = vunpack.c.h.b16 %v1957
        %v2043 = vunpack.c.l.b16 %v1958
        %v2044 = vunpack.c.h.b16 %v1958
        %v2045 = vunpack.c.l.b16 %v1959
        %v2046 = vunpack.c.h.b16 %v1959
        %v2047 = vunpack.c.l.b16 %v1960
        %v2048 = vunpack.c.h.b16 %v1960
        %v2049 = vunpack.c.l.b16 %v1961
        %v2050 = vunpack.c.h.b16 %v1961
        %v2051 = vunpack.c.l.b16 %v1962
        %v2052 = vunpack.c.h.b16 %v1962
        %v2053 = vunpack.c.l.b16 %v1963
        %v2054 = vunpack.c.h.b16 %v1963
        %v2055 = vunpack.c.l.b16 %v1964
        %v2056 = vunpack.c.h.b16 %v1964
        %v2057 = vunpack.c.l.b16 %v1965
        %v2058 = vunpack.c.h.b16 %v1965
        %v2059 = vunpack.c.l.b16 %v1966
        %v2060 = vunpack.c.h.b16 %v1966
        %v2061 = vunpack.c.l.b16 %v1967
        %v2062 = vunpack.c.h.b16 %v1967
        %v2063 = vunpack.c.l.b16 %v1968
        %v2064 = vunpack.c.h.b16 %v1968
        %v2065 = vpack.c.b16 %v2005, %v2001
        %v2066 = vpack.c.b16 %v2006, %v2002
        %v2067 = vpack.c.b16 %v2007, %v2003
        %v2068 = vpack.c.b16 %v2008, %v2004
        %v2069 = vpack.c.b16 %v2013, %v2009
        %v2070 = vpack.c.b16 %v2014, %v2010
        %v2071 = vpack.c.b16 %v2015, %v2011
        %v2072 = vpack.c.b16 %v2016, %v2012
        %v2073 = vpack.c.b16 %v2021, %v2017
        %v2074 = vpack.c.b16 %v2022, %v2018
        %v2075 = vpack.c.b16 %v2023, %v2019
        %v2076 = vpack.c.b16 %v2024, %v2020
        %v2077 = vpack.c.b16 %v2029, %v2025
        %v2078 = vpack.c.b16 %v2030, %v2026
        %v2079 = vpack.c.b16 %v2031, %v2027
        %v2080 = vpack.c.b16 %v2032, %v2028
        %v2081 = vpack.c.b16 %v2037, %v2033
        %v2082 = vpack.c.b16 %v2038, %v2034
        %v2083 = vpack.c.b16 %v2039, %v2035
        %v2084 = vpack.c.b16 %v2040, %v2036
        %v2085 = vpack.c.b16 %v2045, %v2041
        %v2086 = vpack.c.b16 %v2046, %v2042
        %v2087 = vpack.c.b16 %v2047, %v2043
        %v2088 = vpack.c.b16 %v2048, %v2044
        %v2089 = vpack.c.b16 %v2053, %v2049
        %v2090 = vpack.c.b16 %v2054, %v2050
        %v2091 = vpack.c.b16 %v2055, %v2051
        %v2092 = vpack.c.b16 %v2056, %v2052
        %v2093 = vpack.c.b16 %v2061, %v2057
        %v2094 = vpack.c.b16 %v2062, %v2058
        %v2095 = vpack.c.b16 %v2063, %v2059
        %v2096 = vpack.c.b16 %v2064, %v2060
        %2129 = vmatpush.bf16.msra.mxu0 %v2093
        %2130 = vmatpush.bf16.msra.mxu0 %v2089
        %2131 = vmatpush.bf16.msra.mxu0 %v2085
        %2132 = vmatpush.bf16.msra.mxu0 %v2081
        %2133 = vmatpush.bf16.msra.mxu0 %v2077
        %2134 = vmatpush.bf16.msra.mxu0 %v2073
        %2135 = vmatpush.bf16.msra.mxu0 %v2069
        %2136 = vmatpush.bf16.msra.mxu0 %v2065
        %2137 = vmatmul.bf16.gmra.mxu0 %v1931
        %v2138 = vpop.f32.mrf.mxu0
        %v2139 = vadd.f32 0.0, %v2138
        %v2140 = vpop.f32.mrf.mxu0
        %2141 = vdwg.mxu0
        %2142 = vmatpush.bf16.msra.mxu0 %v2094
        %2143 = vmatpush.bf16.msra.mxu0 %v2090
        %2144 = vmatpush.bf16.msra.mxu0 %v2086
        %2145 = vmatpush.bf16.msra.mxu0 %v2082
        %2146 = vmatpush.bf16.msra.mxu0 %v2078
        %2147 = vmatpush.bf16.msra.mxu0 %v2074
        %2148 = vmatpush.bf16.msra.mxu0 %v2070
        %2149 = vmatpush.bf16.msra.mxu0 %v2066
        %2150 = vmatmul.bf16.gmra.mxu0 %v1931
        %v2151 = vpop.f32.mrf.mxu0
        %v2152 = vadd.f32 0.0, %v2151
        %v2153 = vpop.f32.mrf.mxu0
        %2154 = vdwg.mxu0
        %2155 = vmatpush.bf16.msra.mxu0 %v2095
        %2156 = vmatpush.bf16.msra.mxu0 %v2091
        %2157 = vmatpush.bf16.msra.mxu0 %v2087
        %2158 = vmatpush.bf16.msra.mxu0 %v2083
        %2159 = vmatpush.bf16.msra.mxu0 %v2079
        %2160 = vmatpush.bf16.msra.mxu0 %v2075
        %2161 = vmatpush.bf16.msra.mxu0 %v2071
        %2162 = vmatpush.bf16.msra.mxu0 %v2067
        %2163 = vmatmul.bf16.gmra.mxu0 %v1931
        %v2164 = vpop.f32.mrf.mxu0
        %v2165 = vadd.f32 0.0, %v2164
        %v2166 = vpop.f32.mrf.mxu0
        %2167 = vdwg.mxu0
        %2168 = vmatpush.bf16.msra.mxu0 %v2096
        %2169 = vmatpush.bf16.msra.mxu0 %v2092
        %2170 = vmatpush.bf16.msra.mxu0 %v2088
        %2171 = vmatpush.bf16.msra.mxu0 %v2084
        %2172 = vmatpush.bf16.msra.mxu0 %v2080
        %2173 = vmatpush.bf16.msra.mxu0 %v2076
        %2174 = vmatpush.bf16.msra.mxu0 %v2072
        %2175 = vmatpush.bf16.msra.mxu0 %v2068
        %2176 = vmatmul.bf16.gmra.mxu0 %v1931
        %v2177 = vpop.f32.mrf.mxu0
        %v2178 = vadd.f32 0.0, %v2177
        %v2179 = vpop.f32.mrf.mxu0
        %2180 = vdwg.mxu0
        %v2181 = vadd.f32 %v1933, %v2139
        %v2182 = vadd.f32 %v1934, %v2152
        %v2183 = vadd.f32 %v1935, %v2165
        %v2184 = vadd.f32 %v1936, %v2178
        %v2185 = vmul.f32 %v2181, 0.5
        %v2186 = vmul.f32 %v2182, 0.5
        %v2187 = vmul.f32 %v2183, 0.5
        %v2188 = vtanh.pop %v2185
        %v2189 = vtanh.pop %v2186
        %v2190 = vtanh.pop %v2187
        %v2191 = vmul.f32 %v2188, 0.5
        %v2192 = vmul.f32 %v2189, 0.5
        %v2193 = vmul.f32 %v2190, 0.5
        %v2194 = vadd.f32 %v2191, 0.5
        %v2195 = vadd.f32 %v2192, 0.5
        %v2196 = vadd.f32 %v2193, 0.5
        %v2197 = vtanh.pop %v2184
        %v2198 = vmul.f32 %v2195, %v1928
        %v2199 = vmul.f32 %v2194, %v2197
        %v2200 = vadd.f32 %v2198, %v2199
        %v2201 = vtanh.pop %v2200
        %v2202 = vmul.f32 %v2196, %v2201
        %v2203 = vpack.c.bf16 %v2202, %v2202
        %2204 = vst [vmem:[#allocation2 + $0x10] sm:$0xf] %v2203
        %v2205 = vld [vmem:[#allocation3 + $0xa0] sm:$0xff]
        %v2206 = vld [vmem:[#allocation3 + $0xa8] sm:$0xff]
        %v2207 = vld [vmem:[#allocation3 + $0xb0] sm:$0xff]
        %v2208 = vld [vmem:[#allocation3 + $0xb8] sm:$0xff]
        %v2209 = vld [vmem:[%s383] sm:$0xff]
        %v2210 = vld [vmem:[%s383 + $0x8] sm:$0xff]
        %v2211 = vld [vmem:[%s383 + $0x10] sm:$0xff]
        %v2212 = vld [vmem:[%s383 + $0x18] sm:$0xff]
        %v2213 = vld [vmem:[%s383 + $0x20] sm:$0xff]
        %v2214 = vld [vmem:[%s383 + $0x28] sm:$0xff]
        %v2215 = vld [vmem:[%s383 + $0x30] sm:$0xff]
        %v2216 = vld [vmem:[%s383 + $0x38] sm:$0xff]
        %v2217 = vld [vmem:[%s383 + $0x40] sm:$0xff]
        %v2218 = vld [vmem:[%s383 + $0x48] sm:$0xff]
        %v2219 = vld [vmem:[%s383 + $0x50] sm:$0xff]
        %v2220 = vld [vmem:[%s383 + $0x58] sm:$0xff]
        %v2221 = vld [vmem:[%s383 + $0x60] sm:$0xff]
        %v2222 = vld [vmem:[%s383 + $0x68] sm:$0xff]
        %v2223 = vld [vmem:[%s383 + $0x70] sm:$0xff]
        %v2224 = vld [vmem:[%s383 + $0x78] sm:$0xff]
        %v2225 = vld [vmem:[%s383 + $0x80] sm:$0xff]
        %v2226 = vld [vmem:[%s383 + $0x88] sm:$0xff]
        %v2227 = vld [vmem:[%s383 + $0x90] sm:$0xff]
        %v2228 = vld [vmem:[%s383 + $0x98] sm:$0xff]
        %v2229 = vld [vmem:[%s383 + $0xa0] sm:$0xff]
        %v2230 = vld [vmem:[%s383 + $0xa8] sm:$0xff]
        %v2231 = vld [vmem:[%s383 + $0xb0] sm:$0xff]
        %v2232 = vld [vmem:[%s383 + $0xb8] sm:$0xff]
        %v2233 = vld [vmem:[%s383 + $0xc0] sm:$0xff]
        %v2234 = vld [vmem:[%s383 + $0xc8] sm:$0xff]
        %v2235 = vld [vmem:[%s383 + $0xd0] sm:$0xff]
        %v2236 = vld [vmem:[%s383 + $0xd8] sm:$0xff]
        %v2237 = vld [vmem:[%s383 + $0xe0] sm:$0xff]
        %v2238 = vld [vmem:[%s383 + $0xe8] sm:$0xff]
        %v2239 = vld [vmem:[%s383 + $0xf0] sm:$0xff]
        %v2240 = vld [vmem:[%s383 + $0xf8] sm:$0xff]
        %v2273 = vunpack.c.l.b16 %v2209
        %v2274 = vunpack.c.h.b16 %v2209
        %v2275 = vunpack.c.l.b16 %v2210
        %v2276 = vunpack.c.h.b16 %v2210
        %v2277 = vunpack.c.l.b16 %v2211
        %v2278 = vunpack.c.h.b16 %v2211
        %v2279 = vunpack.c.l.b16 %v2212
        %v2280 = vunpack.c.h.b16 %v2212
        %v2281 = vunpack.c.l.b16 %v2213
        %v2282 = vunpack.c.h.b16 %v2213
        %v2283 = vunpack.c.l.b16 %v2214
        %v2284 = vunpack.c.h.b16 %v2214
        %v2285 = vunpack.c.l.b16 %v2215
        %v2286 = vunpack.c.h.b16 %v2215
        %v2287 = vunpack.c.l.b16 %v2216
        %v2288 = vunpack.c.h.b16 %v2216
        %v2289 = vunpack.c.l.b16 %v2217
        %v2290 = vunpack.c.h.b16 %v2217
        %v2291 = vunpack.c.l.b16 %v2218
        %v2292 = vunpack.c.h.b16 %v2218
        %v2293 = vunpack.c.l.b16 %v2219
        %v2294 = vunpack.c.h.b16 %v2219
        %v2295 = vunpack.c.l.b16 %v2220
        %v2296 = vunpack.c.h.b16 %v2220
        %v2297 = vunpack.c.l.b16 %v2221
        %v2298 = vunpack.c.h.b16 %v2221
        %v2299 = vunpack.c.l.b16 %v2222
        %v2300 = vunpack.c.h.b16 %v2222
        %v2301 = vunpack.c.l.b16 %v2223
        %v2302 = vunpack.c.h.b16 %v2223
        %v2303 = vunpack.c.l.b16 %v2224
        %v2304 = vunpack.c.h.b16 %v2224
        %v2305 = vunpack.c.l.b16 %v2225
        %v2306 = vunpack.c.h.b16 %v2225
        %v2307 = vunpack.c.l.b16 %v2226
        %v2308 = vunpack.c.h.b16 %v2226
        %v2309 = vunpack.c.l.b16 %v2227
        %v2310 = vunpack.c.h.b16 %v2227
        %v2311 = vunpack.c.l.b16 %v2228
        %v2312 = vunpack.c.h.b16 %v2228
        %v2313 = vunpack.c.l.b16 %v2229
        %v2314 = vunpack.c.h.b16 %v2229
        %v2315 = vunpack.c.l.b16 %v2230
        %v2316 = vunpack.c.h.b16 %v2230
        %v2317 = vunpack.c.l.b16 %v2231
        %v2318 = vunpack.c.h.b16 %v2231
        %v2319 = vunpack.c.l.b16 %v2232
        %v2320 = vunpack.c.h.b16 %v2232
        %v2321 = vunpack.c.l.b16 %v2233
        %v2322 = vunpack.c.h.b16 %v2233
        %v2323 = vunpack.c.l.b16 %v2234
        %v2324 = vunpack.c.h.b16 %v2234
        %v2325 = vunpack.c.l.b16 %v2235
        %v2326 = vunpack.c.h.b16 %v2235
        %v2327 = vunpack.c.l.b16 %v2236
        %v2328 = vunpack.c.h.b16 %v2236
        %v2329 = vunpack.c.l.b16 %v2237
        %v2330 = vunpack.c.h.b16 %v2237
        %v2331 = vunpack.c.l.b16 %v2238
        %v2332 = vunpack.c.h.b16 %v2238
        %v2333 = vunpack.c.l.b16 %v2239
        %v2334 = vunpack.c.h.b16 %v2239
        %v2335 = vunpack.c.l.b16 %v2240
        %v2336 = vunpack.c.h.b16 %v2240
        %v2337 = vpack.c.b16 %v2277, %v2273
        %v2338 = vpack.c.b16 %v2278, %v2274
        %v2339 = vpack.c.b16 %v2279, %v2275
        %v2340 = vpack.c.b16 %v2280, %v2276
        %v2341 = vpack.c.b16 %v2285, %v2281
        %v2342 = vpack.c.b16 %v2286, %v2282
        %v2343 = vpack.c.b16 %v2287, %v2283
        %v2344 = vpack.c.b16 %v2288, %v2284
        %v2345 = vpack.c.b16 %v2293, %v2289
        %v2346 = vpack.c.b16 %v2294, %v2290
        %v2347 = vpack.c.b16 %v2295, %v2291
        %v2348 = vpack.c.b16 %v2296, %v2292
        %v2349 = vpack.c.b16 %v2301, %v2297
        %v2350 = vpack.c.b16 %v2302, %v2298
        %v2351 = vpack.c.b16 %v2303, %v2299
        %v2352 = vpack.c.b16 %v2304, %v2300
        %v2353 = vpack.c.b16 %v2309, %v2305
        %v2354 = vpack.c.b16 %v2310, %v2306
        %v2355 = vpack.c.b16 %v2311, %v2307
        %v2356 = vpack.c.b16 %v2312, %v2308
        %v2357 = vpack.c.b16 %v2317, %v2313
        %v2358 = vpack.c.b16 %v2318, %v2314
        %v2359 = vpack.c.b16 %v2319, %v2315
        %v2360 = vpack.c.b16 %v2320, %v2316
        %v2361 = vpack.c.b16 %v2325, %v2321
        %v2362 = vpack.c.b16 %v2326, %v2322
        %v2363 = vpack.c.b16 %v2327, %v2323
        %v2364 = vpack.c.b16 %v2328, %v2324
        %v2365 = vpack.c.b16 %v2333, %v2329
        %v2366 = vpack.c.b16 %v2334, %v2330
        %v2367 = vpack.c.b16 %v2335, %v2331
        %v2368 = vpack.c.b16 %v2336, %v2332
        %2401 = vmatpush.bf16.msra.mxu0 %v2365
        %2402 = vmatpush.bf16.msra.mxu0 %v2361
        %2403 = vmatpush.bf16.msra.mxu0 %v2357
        %2404 = vmatpush.bf16.msra.mxu0 %v2353
        %2405 = vmatpush.bf16.msra.mxu0 %v2349
        %2406 = vmatpush.bf16.msra.mxu0 %v2345
        %2407 = vmatpush.bf16.msra.mxu0 %v2341
        %2408 = vmatpush.bf16.msra.mxu0 %v2337
        %2409 = vmatmul.bf16.gmra.mxu0 %v2203
        %v2410 = vpop.f32.mrf.mxu0
        %v2411 = vadd.f32 0.0, %v2410
        %v2412 = vpop.f32.mrf.mxu0
        %2413 = vdwg.mxu0
        %2414 = vmatpush.bf16.msra.mxu0 %v2366
        %2415 = vmatpush.bf16.msra.mxu0 %v2362
        %2416 = vmatpush.bf16.msra.mxu0 %v2358
        %2417 = vmatpush.bf16.msra.mxu0 %v2354
        %2418 = vmatpush.bf16.msra.mxu0 %v2350
        %2419 = vmatpush.bf16.msra.mxu0 %v2346
        %2420 = vmatpush.bf16.msra.mxu0 %v2342
        %2421 = vmatpush.bf16.msra.mxu0 %v2338
        %2422 = vmatmul.bf16.gmra.mxu0 %v2203
        %v2423 = vpop.f32.mrf.mxu0
        %v2424 = vadd.f32 0.0, %v2423
        %v2425 = vpop.f32.mrf.mxu0
        %2426 = vdwg.mxu0
        %2427 = vmatpush.bf16.msra.mxu0 %v2367
        %2428 = vmatpush.bf16.msra.mxu0 %v2363
        %2429 = vmatpush.bf16.msra.mxu0 %v2359
        %2430 = vmatpush.bf16.msra.mxu0 %v2355
        %2431 = vmatpush.bf16.msra.mxu0 %v2351
        %2432 = vmatpush.bf16.msra.mxu0 %v2347
        %2433 = vmatpush.bf16.msra.mxu0 %v2343
        %2434 = vmatpush.bf16.msra.mxu0 %v2339
        %2435 = vmatmul.bf16.gmra.mxu0 %v2203
        %v2436 = vpop.f32.mrf.mxu0
        %v2437 = vadd.f32 0.0, %v2436
        %v2438 = vpop.f32.mrf.mxu0
        %2439 = vdwg.mxu0
        %2440 = vmatpush.bf16.msra.mxu0 %v2368
        %2441 = vmatpush.bf16.msra.mxu0 %v2364
        %2442 = vmatpush.bf16.msra.mxu0 %v2360
        %2443 = vmatpush.bf16.msra.mxu0 %v2356
        %2444 = vmatpush.bf16.msra.mxu0 %v2352
        %2445 = vmatpush.bf16.msra.mxu0 %v2348
        %2446 = vmatpush.bf16.msra.mxu0 %v2344
        %2447 = vmatpush.bf16.msra.mxu0 %v2340
        %2448 = vmatmul.bf16.gmra.mxu0 %v2203
        %v2449 = vpop.f32.mrf.mxu0
        %v2450 = vadd.f32 0.0, %v2449
        %v2451 = vpop.f32.mrf.mxu0
        %2452 = vdwg.mxu0
        %v2453 = vadd.f32 %v2205, %v2411
        %v2454 = vadd.f32 %v2206, %v2424
        %v2455 = vadd.f32 %v2207, %v2437
        %v2456 = vadd.f32 %v2208, %v2450
        %v2457 = vmul.f32 %v2453, 0.5
        %v2458 = vmul.f32 %v2454, 0.5
        %v2459 = vmul.f32 %v2455, 0.5
        %v2460 = vtanh.pop %v2457
        %v2461 = vtanh.pop %v2458
        %v2462 = vtanh.pop %v2459
        %v2463 = vmul.f32 %v2460, 0.5
        %v2464 = vmul.f32 %v2461, 0.5
        %v2465 = vmul.f32 %v2462, 0.5
        %v2466 = vadd.f32 %v2463, 0.5
        %v2467 = vadd.f32 %v2464, 0.5
        %v2468 = vadd.f32 %v2465, 0.5
        %v2469 = vtanh.pop %v2456
        %v2470 = vmul.f32 %v2467, %v2200
        %v2471 = vmul.f32 %v2466, %v2469
        %v2472 = vadd.f32 %v2470, %v2471
        %v2473 = vtanh.pop %v2472
        %v2474 = vmul.f32 %v2468, %v2473
        %v2475 = vpack.c.bf16 %v2474, %v2474
        %2476 = vst [vmem:[#allocation2 + $0x14] sm:$0xf] %v2475
        %v2477 = vld [vmem:[#allocation3 + $0xc0] sm:$0xff]
        %v2478 = vld [vmem:[#allocation3 + $0xc8] sm:$0xff]
        %v2479 = vld [vmem:[#allocation3 + $0xd0] sm:$0xff]
        %v2480 = vld [vmem:[#allocation3 + $0xd8] sm:$0xff]
        %v2481 = vld [vmem:[%s383] sm:$0xff]
        %v2482 = vld [vmem:[%s383 + $0x8] sm:$0xff]
        %v2483 = vld [vmem:[%s383 + $0x10] sm:$0xff]
        %v2484 = vld [vmem:[%s383 + $0x18] sm:$0xff]
        %v2485 = vld [vmem:[%s383 + $0x20] sm:$0xff]
        %v2486 = vld [vmem:[%s383 + $0x28] sm:$0xff]
        %v2487 = vld [vmem:[%s383 + $0x30] sm:$0xff]
        %v2488 = vld [vmem:[%s383 + $0x38] sm:$0xff]
        %v2489 = vld [vmem:[%s383 + $0x40] sm:$0xff]
        %v2490 = vld [vmem:[%s383 + $0x48] sm:$0xff]
        %v2491 = vld [vmem:[%s383 + $0x50] sm:$0xff]
        %v2492 = vld [vmem:[%s383 + $0x58] sm:$0xff]
        %v2493 = vld [vmem:[%s383 + $0x60] sm:$0xff]
        %v2494 = vld [vmem:[%s383 + $0x68] sm:$0xff]
        %v2495 = vld [vmem:[%s383 + $0x70] sm:$0xff]
        %v2496 = vld [vmem:[%s383 + $0x78] sm:$0xff]
        %v2497 = vld [vmem:[%s383 + $0x80] sm:$0xff]
        %v2498 = vld [vmem:[%s383 + $0x88] sm:$0xff]
        %v2499 = vld [vmem:[%s383 + $0x90] sm:$0xff]
        %v2500 = vld [vmem:[%s383 + $0x98] sm:$0xff]
        %v2501 = vld [vmem:[%s383 + $0xa0] sm:$0xff]
        %v2502 = vld [vmem:[%s383 + $0xa8] sm:$0xff]
        %v2503 = vld [vmem:[%s383 + $0xb0] sm:$0xff]
        %v2504 = vld [vmem:[%s383 + $0xb8] sm:$0xff]
        %v2505 = vld [vmem:[%s383 + $0xc0] sm:$0xff]
        %v2506 = vld [vmem:[%s383 + $0xc8] sm:$0xff]
        %v2507 = vld [vmem:[%s383 + $0xd0] sm:$0xff]
        %v2508 = vld [vmem:[%s383 + $0xd8] sm:$0xff]
        %v2509 = vld [vmem:[%s383 + $0xe0] sm:$0xff]
        %v2510 = vld [vmem:[%s383 + $0xe8] sm:$0xff]
        %v2511 = vld [vmem:[%s383 + $0xf0] sm:$0xff]
        %v2512 = vld [vmem:[%s383 + $0xf8] sm:$0xff]
        %v2545 = vunpack.c.l.b16 %v2481
        %v2546 = vunpack.c.h.b16 %v2481
        %v2547 = vunpack.c.l.b16 %v2482
        %v2548 = vunpack.c.h.b16 %v2482
        %v2549 = vunpack.c.l.b16 %v2483
        %v2550 = vunpack.c.h.b16 %v2483
        %v2551 = vunpack.c.l.b16 %v2484
        %v2552 = vunpack.c.h.b16 %v2484
        %v2553 = vunpack.c.l.b16 %v2485
        %v2554 = vunpack.c.h.b16 %v2485
        %v2555 = vunpack.c.l.b16 %v2486
        %v2556 = vunpack.c.h.b16 %v2486
        %v2557 = vunpack.c.l.b16 %v2487
        %v2558 = vunpack.c.h.b16 %v2487
        %v2559 = vunpack.c.l.b16 %v2488
        %v2560 = vunpack.c.h.b16 %v2488
        %v2561 = vunpack.c.l.b16 %v2489
        %v2562 = vunpack.c.h.b16 %v2489
        %v2563 = vunpack.c.l.b16 %v2490
        %v2564 = vunpack.c.h.b16 %v2490
        %v2565 = vunpack.c.l.b16 %v2491
        %v2566 = vunpack.c.h.b16 %v2491
        %v2567 = vunpack.c.l.b16 %v2492
        %v2568 = vunpack.c.h.b16 %v2492
        %v2569 = vunpack.c.l.b16 %v2493
        %v2570 = vunpack.c.h.b16 %v2493
        %v2571 = vunpack.c.l.b16 %v2494
        %v2572 = vunpack.c.h.b16 %v2494
        %v2573 = vunpack.c.l.b16 %v2495
        %v2574 = vunpack.c.h.b16 %v2495
        %v2575 = vunpack.c.l.b16 %v2496
        %v2576 = vunpack.c.h.b16 %v2496
        %v2577 = vunpack.c.l.b16 %v2497
        %v2578 = vunpack.c.h.b16 %v2497
        %v2579 = vunpack.c.l.b16 %v2498
        %v2580 = vunpack.c.h.b16 %v2498
        %v2581 = vunpack.c.l.b16 %v2499
        %v2582 = vunpack.c.h.b16 %v2499
        %v2583 = vunpack.c.l.b16 %v2500
        %v2584 = vunpack.c.h.b16 %v2500
        %v2585 = vunpack.c.l.b16 %v2501
        %v2586 = vunpack.c.h.b16 %v2501
        %v2587 = vunpack.c.l.b16 %v2502
        %v2588 = vunpack.c.h.b16 %v2502
        %v2589 = vunpack.c.l.b16 %v2503
        %v2590 = vunpack.c.h.b16 %v2503
        %v2591 = vunpack.c.l.b16 %v2504
        %v2592 = vunpack.c.h.b16 %v2504
        %v2593 = vunpack.c.l.b16 %v2505
        %v2594 = vunpack.c.h.b16 %v2505
        %v2595 = vunpack.c.l.b16 %v2506
        %v2596 = vunpack.c.h.b16 %v2506
        %v2597 = vunpack.c.l.b16 %v2507
        %v2598 = vunpack.c.h.b16 %v2507
        %v2599 = vunpack.c.l.b16 %v2508
        %v2600 = vunpack.c.h.b16 %v2508
        %v2601 = vunpack.c.l.b16 %v2509
        %v2602 = vunpack.c.h.b16 %v2509
        %v2603 = vunpack.c.l.b16 %v2510
        %v2604 = vunpack.c.h.b16 %v2510
        %v2605 = vunpack.c.l.b16 %v2511
        %v2606 = vunpack.c.h.b16 %v2511
        %v2607 = vunpack.c.l.b16 %v2512
        %v2608 = vunpack.c.h.b16 %v2512
        %v2609 = vpack.c.b16 %v2549, %v2545
        %v2610 = vpack.c.b16 %v2550, %v2546
        %v2611 = vpack.c.b16 %v2551, %v2547
        %v2612 = vpack.c.b16 %v2552, %v2548
        %v2613 = vpack.c.b16 %v2557, %v2553
        %v2614 = vpack.c.b16 %v2558, %v2554
        %v2615 = vpack.c.b16 %v2559, %v2555
        %v2616 = vpack.c.b16 %v2560, %v2556
        %v2617 = vpack.c.b16 %v2565, %v2561
        %v2618 = vpack.c.b16 %v2566, %v2562
        %v2619 = vpack.c.b16 %v2567, %v2563
        %v2620 = vpack.c.b16 %v2568, %v2564
        %v2621 = vpack.c.b16 %v2573, %v2569
        %v2622 = vpack.c.b16 %v2574, %v2570
        %v2623 = vpack.c.b16 %v2575, %v2571
        %v2624 = vpack.c.b16 %v2576, %v2572
        %v2625 = vpack.c.b16 %v2581, %v2577
        %v2626 = vpack.c.b16 %v2582, %v2578
        %v2627 = vpack.c.b16 %v2583, %v2579
        %v2628 = vpack.c.b16 %v2584, %v2580
        %v2629 = vpack.c.b16 %v2589, %v2585
        %v2630 = vpack.c.b16 %v2590, %v2586
        %v2631 = vpack.c.b16 %v2591, %v2587
        %v2632 = vpack.c.b16 %v2592, %v2588
        %v2633 = vpack.c.b16 %v2597, %v2593
        %v2634 = vpack.c.b16 %v2598, %v2594
        %v2635 = vpack.c.b16 %v2599, %v2595
        %v2636 = vpack.c.b16 %v2600, %v2596
        %v2637 = vpack.c.b16 %v2605, %v2601
        %v2638 = vpack.c.b16 %v2606, %v2602
        %v2639 = vpack.c.b16 %v2607, %v2603
        %v2640 = vpack.c.b16 %v2608, %v2604
        %2673 = vmatpush.bf16.msra.mxu0 %v2637
        %2674 = vmatpush.bf16.msra.mxu0 %v2633
        %2675 = vmatpush.bf16.msra.mxu0 %v2629
        %2676 = vmatpush.bf16.msra.mxu0 %v2625
        %2677 = vmatpush.bf16.msra.mxu0 %v2621
        %2678 = vmatpush.bf16.msra.mxu0 %v2617
        %2679 = vmatpush.bf16.msra.mxu0 %v2613
        %2680 = vmatpush.bf16.msra.mxu0 %v2609
        %2681 = vmatmul.bf16.gmra.mxu0 %v2475
        %v2682 = vpop.f32.mrf.mxu0
        %v2683 = vadd.f32 0.0, %v2682
        %v2684 = vpop.f32.mrf.mxu0
        %2685 = vdwg.mxu0
        %2686 = vmatpush.bf16.msra.mxu0 %v2638
        %2687 = vmatpush.bf16.msra.mxu0 %v2634
        %2688 = vmatpush.bf16.msra.mxu0 %v2630
        %2689 = vmatpush.bf16.msra.mxu0 %v2626
        %2690 = vmatpush.bf16.msra.mxu0 %v2622
        %2691 = vmatpush.bf16.msra.mxu0 %v2618
        %2692 = vmatpush.bf16.msra.mxu0 %v2614
        %2693 = vmatpush.bf16.msra.mxu0 %v2610
        %2694 = vmatmul.bf16.gmra.mxu0 %v2475
        %v2695 = vpop.f32.mrf.mxu0
        %v2696 = vadd.f32 0.0, %v2695
        %v2697 = vpop.f32.mrf.mxu0
        %2698 = vdwg.mxu0
        %2699 = vmatpush.bf16.msra.mxu0 %v2639
        %2700 = vmatpush.bf16.msra.mxu0 %v2635
        %2701 = vmatpush.bf16.msra.mxu0 %v2631
        %2702 = vmatpush.bf16.msra.mxu0 %v2627
        %2703 = vmatpush.bf16.msra.mxu0 %v2623
        %2704 = vmatpush.bf16.msra.mxu0 %v2619
        %2705 = vmatpush.bf16.msra.mxu0 %v2615
        %2706 = vmatpush.bf16.msra.mxu0 %v2611
        %2707 = vmatmul.bf16.gmra.mxu0 %v2475
        %v2708 = vpop.f32.mrf.mxu0
        %v2709 = vadd.f32 0.0, %v2708
        %v2710 = vpop.f32.mrf.mxu0
        %2711 = vdwg.mxu0
        %2712 = vmatpush.bf16.msra.mxu0 %v2640
        %2713 = vmatpush.bf16.msra.mxu0 %v2636
        %2714 = vmatpush.bf16.msra.mxu0 %v2632
        %2715 = vmatpush.bf16.msra.mxu0 %v2628
        %2716 = vmatpush.bf16.msra.mxu0 %v2624
        %2717 = vmatpush.bf16.msra.mxu0 %v2620
        %2718 = vmatpush.bf16.msra.mxu0 %v2616
        %2719 = vmatpush.bf16.msra.mxu0 %v2612
        %2720 = vmatmul.bf16.gmra.mxu0 %v2475
        %v2721 = vpop.f32.mrf.mxu0
        %v2722 = vadd.f32 0.0, %v2721
        %v2723 = vpop.f32.mrf.mxu0
        %2724 = vdwg.mxu0
        %v2725 = vadd.f32 %v2477, %v2683
        %v2726 = vadd.f32 %v2478, %v2696
        %v2727 = vadd.f32 %v2479, %v2709
        %v2728 = vadd.f32 %v2480, %v2722
        %v2729 = vmul.f32 %v2725, 0.5
        %v2730 = vmul.f32 %v2726, 0.5
        %v2731 = vmul.f32 %v2727, 0.5
        %v2732 = vtanh.pop %v2729
        %v2733 = vtanh.pop %v2730
        %v2734 = vtanh.pop %v2731
        %v2735 = vmul.f32 %v2732, 0.5
        %v2736 = vmul.f32 %v2733, 0.5
        %v2737 = vmul.f32 %v2734, 0.5
        %v2738 = vadd.f32 %v2735, 0.5
        %v2739 = vadd.f32 %v2736, 0.5
        %v2740 = vadd.f32 %v2737, 0.5
        %v2741 = vtanh.pop %v2728
        %v2742 = vmul.f32 %v2739, %v2472
        %v2743 = vmul.f32 %v2738, %v2741
        %v2744 = vadd.f32 %v2742, %v2743
        %v2745 = vtanh.pop %v2744
        %v2746 = vmul.f32 %v2740, %v2745
        %v2747 = vpack.c.bf16 %v2746, %v2746
        %2748 = vst [vmem:[#allocation2 + $0x18] sm:$0xf] %v2747
        %v2749 = vld [vmem:[#allocation3 + $0xe0] sm:$0xff]
        %v2750 = vld [vmem:[#allocation3 + $0xe8] sm:$0xff]
        %v2751 = vld [vmem:[#allocation3 + $0xf0] sm:$0xff]
        %v2752 = vld [vmem:[#allocation3 + $0xf8] sm:$0xff]
        %v2753 = vld [vmem:[%s383] sm:$0xff]
        %v2754 = vld [vmem:[%s383 + $0x8] sm:$0xff]
        %v2755 = vld [vmem:[%s383 + $0x10] sm:$0xff]
        %v2756 = vld [vmem:[%s383 + $0x18] sm:$0xff]
        %v2757 = vld [vmem:[%s383 + $0x20] sm:$0xff]
        %v2758 = vld [vmem:[%s383 + $0x28] sm:$0xff]
        %v2759 = vld [vmem:[%s383 + $0x30] sm:$0xff]
        %v2760 = vld [vmem:[%s383 + $0x38] sm:$0xff]
        %v2761 = vld [vmem:[%s383 + $0x40] sm:$0xff]
        %v2762 = vld [vmem:[%s383 + $0x48] sm:$0xff]
        %v2763 = vld [vmem:[%s383 + $0x50] sm:$0xff]
        %v2764 = vld [vmem:[%s383 + $0x58] sm:$0xff]
        %v2765 = vld [vmem:[%s383 + $0x60] sm:$0xff]
        %v2766 = vld [vmem:[%s383 + $0x68] sm:$0xff]
        %v2767 = vld [vmem:[%s383 + $0x70] sm:$0xff]
        %v2768 = vld [vmem:[%s383 + $0x78] sm:$0xff]
        %v2769 = vld [vmem:[%s383 + $0x80] sm:$0xff]
        %v2770 = vld [vmem:[%s383 + $0x88] sm:$0xff]
        %v2771 = vld [vmem:[%s383 + $0x90] sm:$0xff]
        %v2772 = vld [vmem:[%s383 + $0x98] sm:$0xff]
        %v2773 = vld [vmem:[%s383 + $0xa0] sm:$0xff]
        %v2774 = vld [vmem:[%s383 + $0xa8] sm:$0xff]
        %v2775 = vld [vmem:[%s383 + $0xb0] sm:$0xff]
        %v2776 = vld [vmem:[%s383 + $0xb8] sm:$0xff]
        %v2777 = vld [vmem:[%s383 + $0xc0] sm:$0xff]
        %v2778 = vld [vmem:[%s383 + $0xc8] sm:$0xff]
        %v2779 = vld [vmem:[%s383 + $0xd0] sm:$0xff]
        %v2780 = vld [vmem:[%s383 + $0xd8] sm:$0xff]
        %v2781 = vld [vmem:[%s383 + $0xe0] sm:$0xff]
        %v2782 = vld [vmem:[%s383 + $0xe8] sm:$0xff]
        %v2783 = vld [vmem:[%s383 + $0xf0] sm:$0xff]
        %v2784 = vld [vmem:[%s383 + $0xf8] sm:$0xff]
        %v2817 = vunpack.c.l.b16 %v2753
        %v2818 = vunpack.c.h.b16 %v2753
        %v2819 = vunpack.c.l.b16 %v2754
        %v2820 = vunpack.c.h.b16 %v2754
        %v2821 = vunpack.c.l.b16 %v2755
        %v2822 = vunpack.c.h.b16 %v2755
        %v2823 = vunpack.c.l.b16 %v2756
        %v2824 = vunpack.c.h.b16 %v2756
        %v2825 = vunpack.c.l.b16 %v2757
        %v2826 = vunpack.c.h.b16 %v2757
        %v2827 = vunpack.c.l.b16 %v2758
        %v2828 = vunpack.c.h.b16 %v2758
        %v2829 = vunpack.c.l.b16 %v2759
        %v2830 = vunpack.c.h.b16 %v2759
        %v2831 = vunpack.c.l.b16 %v2760
        %v2832 = vunpack.c.h.b16 %v2760
        %v2833 = vunpack.c.l.b16 %v2761
        %v2834 = vunpack.c.h.b16 %v2761
        %v2835 = vunpack.c.l.b16 %v2762
        %v2836 = vunpack.c.h.b16 %v2762
        %v2837 = vunpack.c.l.b16 %v2763
        %v2838 = vunpack.c.h.b16 %v2763
        %v2839 = vunpack.c.l.b16 %v2764
        %v2840 = vunpack.c.h.b16 %v2764
        %v2841 = vunpack.c.l.b16 %v2765
        %v2842 = vunpack.c.h.b16 %v2765
        %v2843 = vunpack.c.l.b16 %v2766
        %v2844 = vunpack.c.h.b16 %v2766
        %v2845 = vunpack.c.l.b16 %v2767
        %v2846 = vunpack.c.h.b16 %v2767
        %v2847 = vunpack.c.l.b16 %v2768
        %v2848 = vunpack.c.h.b16 %v2768
        %v2849 = vunpack.c.l.b16 %v2769
        %v2850 = vunpack.c.h.b16 %v2769
        %v2851 = vunpack.c.l.b16 %v2770
        %v2852 = vunpack.c.h.b16 %v2770
        %v2853 = vunpack.c.l.b16 %v2771
        %v2854 = vunpack.c.h.b16 %v2771
        %v2855 = vunpack.c.l.b16 %v2772
        %v2856 = vunpack.c.h.b16 %v2772
        %v2857 = vunpack.c.l.b16 %v2773
        %v2858 = vunpack.c.h.b16 %v2773
        %v2859 = vunpack.c.l.b16 %v2774
        %v2860 = vunpack.c.h.b16 %v2774
        %v2861 = vunpack.c.l.b16 %v2775
        %v2862 = vunpack.c.h.b16 %v2775
        %v2863 = vunpack.c.l.b16 %v2776
        %v2864 = vunpack.c.h.b16 %v2776
        %v2865 = vunpack.c.l.b16 %v2777
        %v2866 = vunpack.c.h.b16 %v2777
        %v2867 = vunpack.c.l.b16 %v2778
        %v2868 = vunpack.c.h.b16 %v2778
        %v2869 = vunpack.c.l.b16 %v2779
        %v2870 = vunpack.c.h.b16 %v2779
        %v2871 = vunpack.c.l.b16 %v2780
        %v2872 = vunpack.c.h.b16 %v2780
        %v2873 = vunpack.c.l.b16 %v2781
        %v2874 = vunpack.c.h.b16 %v2781
        %v2875 = vunpack.c.l.b16 %v2782
        %v2876 = vunpack.c.h.b16 %v2782
        %v2877 = vunpack.c.l.b16 %v2783
        %v2878 = vunpack.c.h.b16 %v2783
        %v2879 = vunpack.c.l.b16 %v2784
        %v2880 = vunpack.c.h.b16 %v2784
        %v2881 = vpack.c.b16 %v2821, %v2817
        %v2882 = vpack.c.b16 %v2822, %v2818
        %v2883 = vpack.c.b16 %v2823, %v2819
        %v2884 = vpack.c.b16 %v2824, %v2820
        %v2885 = vpack.c.b16 %v2829, %v2825
        %v2886 = vpack.c.b16 %v2830, %v2826
        %v2887 = vpack.c.b16 %v2831, %v2827
        %v2888 = vpack.c.b16 %v2832, %v2828
        %v2889 = vpack.c.b16 %v2837, %v2833
        %v2890 = vpack.c.b16 %v2838, %v2834
        %v2891 = vpack.c.b16 %v2839, %v2835
        %v2892 = vpack.c.b16 %v2840, %v2836
        %v2893 = vpack.c.b16 %v2845, %v2841
        %v2894 = vpack.c.b16 %v2846, %v2842
        %v2895 = vpack.c.b16 %v2847, %v2843
        %v2896 = vpack.c.b16 %v2848, %v2844
        %v2897 = vpack.c.b16 %v2853, %v2849
        %v2898 = vpack.c.b16 %v2854, %v2850
        %v2899 = vpack.c.b16 %v2855, %v2851
        %v2900 = vpack.c.b16 %v2856, %v2852
        %v2901 = vpack.c.b16 %v2861, %v2857
        %v2902 = vpack.c.b16 %v2862, %v2858
        %v2903 = vpack.c.b16 %v2863, %v2859
        %v2904 = vpack.c.b16 %v2864, %v2860
        %v2905 = vpack.c.b16 %v2869, %v2865
        %v2906 = vpack.c.b16 %v2870, %v2866
        %v2907 = vpack.c.b16 %v2871, %v2867
        %v2908 = vpack.c.b16 %v2872, %v2868
        %v2909 = vpack.c.b16 %v2877, %v2873
        %v2910 = vpack.c.b16 %v2878, %v2874
        %v2911 = vpack.c.b16 %v2879, %v2875
        %v2912 = vpack.c.b16 %v2880, %v2876
        %2945 = vmatpush.bf16.msra.mxu0 %v2909
        %2946 = vmatpush.bf16.msra.mxu0 %v2905
        %2947 = vmatpush.bf16.msra.mxu0 %v2901
        %2948 = vmatpush.bf16.msra.mxu0 %v2897
        %2949 = vmatpush.bf16.msra.mxu0 %v2893
        %2950 = vmatpush.bf16.msra.mxu0 %v2889
        %2951 = vmatpush.bf16.msra.mxu0 %v2885
        %2952 = vmatpush.bf16.msra.mxu0 %v2881
        %2953 = vmatmul.bf16.gmra.mxu0 %v2747
        %v2954 = vpop.f32.mrf.mxu0
        %v2955 = vadd.f32 0.0, %v2954
        %v2956 = vpop.f32.mrf.mxu0
        %2957 = vdwg.mxu0
        %2958 = vmatpush.bf16.msra.mxu0 %v2910
        %2959 = vmatpush.bf16.msra.mxu0 %v2906
        %2960 = vmatpush.bf16.msra.mxu0 %v2902
        %2961 = vmatpush.bf16.msra.mxu0 %v2898
        %2962 = vmatpush.bf16.msra.mxu0 %v2894
        %2963 = vmatpush.bf16.msra.mxu0 %v2890
        %2964 = vmatpush.bf16.msra.mxu0 %v2886
        %2965 = vmatpush.bf16.msra.mxu0 %v2882
        %2966 = vmatmul.bf16.gmra.mxu0 %v2747
        %v2967 = vpop.f32.mrf.mxu0
        %v2968 = vadd.f32 0.0, %v2967
        %v2969 = vpop.f32.mrf.mxu0
        %2970 = vdwg.mxu0
        %2971 = vmatpush.bf16.msra.mxu0 %v2911
        %2972 = vmatpush.bf16.msra.mxu0 %v2907
        %2973 = vmatpush.bf16.msra.mxu0 %v2903
        %2974 = vmatpush.bf16.msra.mxu0 %v2899
        %2975 = vmatpush.bf16.msra.mxu0 %v2895
        %2976 = vmatpush.bf16.msra.mxu0 %v2891
        %2977 = vmatpush.bf16.msra.mxu0 %v2887
        %2978 = vmatpush.bf16.msra.mxu0 %v2883
        %2979 = vmatmul.bf16.gmra.mxu0 %v2747
        %v2980 = vpop.f32.mrf.mxu0
        %v2981 = vadd.f32 0.0, %v2980
        %v2982 = vpop.f32.mrf.mxu0
        %2983 = vdwg.mxu0
        %2984 = vmatpush.bf16.msra.mxu0 %v2912
        %2985 = vmatpush.bf16.msra.mxu0 %v2908
        %2986 = vmatpush.bf16.msra.mxu0 %v2904
        %2987 = vmatpush.bf16.msra.mxu0 %v2900
        %2988 = vmatpush.bf16.msra.mxu0 %v2896
        %2989 = vmatpush.bf16.msra.mxu0 %v2892
        %2990 = vmatpush.bf16.msra.mxu0 %v2888
        %2991 = vmatpush.bf16.msra.mxu0 %v2884
        %2992 = vmatmul.bf16.gmra.mxu0 %v2747
        %v2993 = vpop.f32.mrf.mxu0
        %v2994 = vadd.f32 0.0, %v2993
        %v2995 = vpop.f32.mrf.mxu0
        %2996 = vdwg.mxu0
        %v2997 = vadd.f32 %v2749, %v2955
        %v2998 = vadd.f32 %v2750, %v2968
        %v2999 = vadd.f32 %v2751, %v2981
        %v3000 = vadd.f32 %v2752, %v2994
        %v3001 = vmul.f32 %v2997, 0.5
        %v3002 = vmul.f32 %v2998, 0.5
        %v3003 = vmul.f32 %v2999, 0.5
        %v3004 = vtanh.pop %v3001
        %v3005 = vtanh.pop %v3002
        %v3006 = vtanh.pop %v3003
        %v3007 = vmul.f32 %v3004, 0.5
        %v3008 = vmul.f32 %v3005, 0.5
        %v3009 = vmul.f32 %v3006, 0.5
        %v3010 = vadd.f32 %v3007, 0.5
        %v3011 = vadd.f32 %v3008, 0.5
        %v3012 = vadd.f32 %v3009, 0.5
        %v3013 = vtanh.pop %v3000
        %v3014 = vmul.f32 %v3011, %v2744
        %v3015 = vmul.f32 %v3010, %v3013
        %v3016 = vadd.f32 %v3014, %v3015
        %v3017 = vtanh.pop %v3016
        %v3018 = vmul.f32 %v3012, %v3017
        %v3019 = vpack.c.bf16 %v3018, %v3018
        %3020 = vst [vmem:[#allocation2 + $0x1c] sm:$0xf] %v3019
        %p3021 = scmp.eq.s32.totalorder %s28, 2
        // Predicated region
        $region81: #{tpu_custom_call.1} parent=51 // pred_check
          %p3022 = pneg %p3021
        $region82: #{tpu_custom_call.1} parent=51 // pred_check_branch
          %3024 = sbr.rel (%p3022) target = $region84
        $region83: #{tpu_custom_call.1} parent=51 // pred_region
          %v3025 = vld [vmem:[#allocation12] sm:$0xf]
          %v3026 = vld [vmem:[#allocation12 + $0x4] sm:$0xf]
          %v3027 = vld [vmem:[#allocation12 + $0x8] sm:$0xf]
          %v3028 = vld [vmem:[#allocation12 + $0xc] sm:$0xf]
          %v3029 = vld [vmem:[#allocation12 + $0x10] sm:$0xf]
          %v3030 = vld [vmem:[#allocation12 + $0x14] sm:$0xf]
          %v3031 = vld [vmem:[#allocation12 + $0x18] sm:$0xf]
          %v3032 = vld [vmem:[#allocation12 + $0x1c] sm:$0xf]
          %v3033 = vld [vmem:[#allocation12 + $0x20] sm:$0xf]
          %v3034 = vld [vmem:[#allocation12 + $0x24] sm:$0xf]
          %v3035 = vld [vmem:[#allocation12 + $0x28] sm:$0xf]
          %v3036 = vld [vmem:[#allocation12 + $0x2c] sm:$0xf]
          %v3037 = vld [vmem:[#allocation12 + $0x30] sm:$0xf]
          %v3038 = vld [vmem:[#allocation12 + $0x34] sm:$0xf]
          %v3039 = vld [vmem:[#allocation12 + $0x38] sm:$0xf]
          %v3040 = vld [vmem:[#allocation12 + $0x3c] sm:$0xf]
          %v3041 = vld [vmem:[%s5] sm:$0x1]
          %v3043 = vperm.slane %v3041, 0
          %v3061 = vunpack.c.l.b16 %v3025
          %v3062 = vunpack.c.l.b16 %v3026
          %v3063 = vunpack.c.l.b16 %v3027
          %v3064 = vunpack.c.l.b16 %v3028
          %v3065 = vunpack.c.l.b16 %v3029
          %v3066 = vunpack.c.l.b16 %v3030
          %v3067 = vunpack.c.l.b16 %v3031
          %v3068 = vunpack.c.l.b16 %v3032
          %v3069 = vunpack.c.l.b16 %v3033
          %v3070 = vunpack.c.l.b16 %v3034
          %v3071 = vunpack.c.l.b16 %v3035
          %v3072 = vunpack.c.l.b16 %v3036
          %v3073 = vunpack.c.l.b16 %v3037
          %v3074 = vunpack.c.l.b16 %v3038
          %v3075 = vunpack.c.l.b16 %v3039
          %v3076 = vunpack.c.l.b16 %v3040
          %v3077 = vpack.c.b16 %v3062, %v3061
          %v3078 = vpack.c.b16 %v3064, %v3063
          %v3079 = vpack.c.b16 %v3066, %v3065
          %v3080 = vpack.c.b16 %v3068, %v3067
          %v3081 = vpack.c.b16 %v3070, %v3069
          %v3082 = vpack.c.b16 %v3072, %v3071
          %v3083 = vpack.c.b16 %v3074, %v3073
          %v3084 = vpack.c.b16 %v3076, %v3075
          %3093 = vmatpush.bf16.msra.mxu0 %v3084
          %3094 = vmatpush.bf16.msra.mxu0 %v3083
          %3095 = vmatpush.bf16.msra.mxu0 %v3082
          %3096 = vmatpush.bf16.msra.mxu0 %v3081
          %3097 = vmatpush.bf16.msra.mxu0 %v3080
          %3098 = vmatpush.bf16.msra.mxu0 %v3079
          %3099 = vmatpush.bf16.msra.mxu0 %v3078
          %3100 = vmatpush.bf16.msra.mxu0 %v3077
          %3101 = vmatmul.bf16.gmra.mxu0 %v3019
          %v3102 = vpop.f32.mrf.mxu0
          %v3103 = vadd.f32 %v3043, %v3102
          %v3104 = vpop.f32.mrf.mxu0
          %3105 = vdwg.mxu0
          %v3106 = vmax.f32 %v3103, 0.0
          %v3107 = vpack.c.bf16 %v3106, %v3106
          %v3108 = vld [vmem:[#allocation13] sm:$0xf]
          %v3109 = vld [vmem:[#allocation13 + $0x4] sm:$0xf]
          %v3110 = vld [vmem:[#allocation13 + $0x8] sm:$0xf]
          %v3111 = vld [vmem:[#allocation13 + $0xc] sm:$0xf]
          %v3112 = vld [vmem:[#allocation13 + $0x10] sm:$0xf]
          %v3113 = vld [vmem:[#allocation13 + $0x14] sm:$0xf]
          %v3114 = vld [vmem:[#allocation13 + $0x18] sm:$0xf]
          %v3115 = vld [vmem:[#allocation13 + $0x1c] sm:$0xf]
          %v3116 = vld [vmem:[#allocation13 + $0x20] sm:$0xf]
          %v3117 = vld [vmem:[#allocation13 + $0x24] sm:$0xf]
          %v3118 = vld [vmem:[#allocation13 + $0x28] sm:$0xf]
          %v3119 = vld [vmem:[#allocation13 + $0x2c] sm:$0xf]
          %v3120 = vld [vmem:[#allocation13 + $0x30] sm:$0xf]
          %v3121 = vld [vmem:[#allocation13 + $0x34] sm:$0xf]
          %v3122 = vld [vmem:[#allocation13 + $0x38] sm:$0xf]
          %v3123 = vld [vmem:[#allocation13 + $0x3c] sm:$0xf]
          %v3124 = vld [vmem:[%s7] sm:$0x1]
          %v3126 = vperm.slane %v3124, 0
          %v3144 = vunpack.c.l.b16 %v3108
          %v3145 = vunpack.c.l.b16 %v3109
          %v3146 = vunpack.c.l.b16 %v3110
          %v3147 = vunpack.c.l.b16 %v3111
          %v3148 = vunpack.c.l.b16 %v3112
          %v3149 = vunpack.c.l.b16 %v3113
          %v3150 = vunpack.c.l.b16 %v3114
          %v3151 = vunpack.c.l.b16 %v3115
          %v3152 = vunpack.c.l.b16 %v3116
          %v3153 = vunpack.c.l.b16 %v3117
          %v3154 = vunpack.c.l.b16 %v3118
          %v3155 = vunpack.c.l.b16 %v3119
          %v3156 = vunpack.c.l.b16 %v3120
          %v3157 = vunpack.c.l.b16 %v3121
          %v3158 = vunpack.c.l.b16 %v3122
          %v3159 = vunpack.c.l.b16 %v3123
          %v3160 = vpack.c.b16 %v3145, %v3144
          %v3161 = vpack.c.b16 %v3147, %v3146
          %v3162 = vpack.c.b16 %v3149, %v3148
          %v3163 = vpack.c.b16 %v3151, %v3150
          %v3164 = vpack.c.b16 %v3153, %v3152
          %v3165 = vpack.c.b16 %v3155, %v3154
          %v3166 = vpack.c.b16 %v3157, %v3156
          %v3167 = vpack.c.b16 %v3159, %v3158
          %3176 = vmatpush.bf16.msra.mxu0 %v3167
          %3177 = vmatpush.bf16.msra.mxu0 %v3166
          %3178 = vmatpush.bf16.msra.mxu0 %v3165
          %3179 = vmatpush.bf16.msra.mxu0 %v3164
          %3180 = vmatpush.bf16.msra.mxu0 %v3163
          %3181 = vmatpush.bf16.msra.mxu0 %v3162
          %3182 = vmatpush.bf16.msra.mxu0 %v3161
          %3183 = vmatpush.bf16.msra.mxu0 %v3160
          %3184 = vmatmul.bf16.gmra.mxu0 %v3107
          %v3185 = vpop.f32.mrf.mxu0
          %v3186 = vadd.f32 %v3126, %v3185
          %v3187 = vpop.f32.mrf.mxu0
          %3188 = vdwg.mxu0
          %3189 = vst [vmem:[#allocation15] sm:$0xff] %v3186
        $region84: #{tpu_custom_call.1} parent=51 // pred_fallthru
          _
        // Predicated region
        $region85: #{tpu_custom_call.1} parent=51 // pred_check
          %p3190 = pneg %p224
        $region86: #{tpu_custom_call.1} parent=51 // pred_check_branch
          %3192 = sbr.rel (%p3190) target = $region88
        $region87: #{tpu_custom_call.1} parent=51 // pred_region
          %3194 = vsyncadd [#allocation6], 0
          %s3196 = sshll.u32 [#allocation15], 4
          %s3197 = int_to_ptr.vmem [resolvable:$true] %s3196
          %s3198 = sshll.u32 %s8, 4
          %s3199 = int_to_ptr.hbm [resolvable:$true] %s3198
          %3201 = dma.vmem_to_hbm [thread:$0]  %s3197, 128, %s3199, [#allocation6]
        $region88: #{tpu_custom_call.1} parent=51 // pred_fallthru
          _
        // Predicated region
        $region89: #{tpu_custom_call.1} parent=51 // pred_check
          %p3202 = pneg %p224
        $region90: #{tpu_custom_call.1} parent=51 // pred_check_branch
          %3204 = sbr.rel (%p3202) target = $region92
        $region91: #{tpu_custom_call.1} parent=51 // pred_region
          %3206 = dma.done [#allocation6], 128
        $region92: #{tpu_custom_call.1} parent=51 // pred_fallthru
          _
      $region52: #{tpu_custom_call.1} parent=5 // pred_fallthru
        _
      %p3207 = scmp.le.s32.totalorder 2, %s23
      // Predicated region
      $region93: #{tpu_custom_call.1} parent=5 // pred_check
        %p3208 = pneg %p3207
      $region94: #{tpu_custom_call.1} parent=5 // pred_check_branch
        %3210 = sbr.rel (%p3208) target = $region96
      $region95: #{tpu_custom_call.1} parent=5 // pred_region
        %s3211 = ssub.s32 %s23, 2
      $region96: #{tpu_custom_call.1} parent=5 // pred_fallthru
        _
    $region6: #{tpu_custom_call.1} parent=1 // loop_footer
      %s27 = sadd.s32 1, %s23
    $region7: #{tpu_custom_call.1} parent=1 // loop_footer_branch
      %22 = sbr.rel target = $region3
    $region8: #{tpu_custom_call.1} parent=1 // loop_exit
      _
    %3212 = vsyncpa [#allocation5], 1
    %s3213 = scalar_lea.sflag [#allocation5], 1
    %3214 = vsyncpa %s3213, 1
    %3215 = vsyncpa [#allocation8], 1
    %s3216 = scalar_lea.sflag [#allocation8], 1
    %3217 = vsyncpa %s3216, 1
    %3218 = vsyncpa [#allocation11], 1
    %s3219 = scalar_lea.sflag [#allocation11], 1
    %3220 = vsyncpa %s3219, 1
    %3221 = vsyncpa [#allocation14], 1
    %3222 = vsyncpa [#allocation6], 1
    %s3223 = scalar_lea.sflag [#allocation6], 1
    %3224 = vsyncpa %s3223, 1

</llo_original>
